<compile_context>
chip_gen: v6e
topology: v6e:2x2x1
jax: 0.10.0
libtpu: 0.0.40
codegen_flags: <defaults>
</compile_context>

<pallas_src>
import functools

import numpy as np
import jax
import jax.numpy as jnp
from jax import lax
from jax.experimental import pallas as pl
from jax.experimental.pallas import tpu as pltpu


# ----------------------------- in-kernel helpers -----------------------------

def _leaky(v):
    # nn.LeakyReLU(0.05)
    return jnp.where(v > 0, v, 0.05 * v)


def _group_norm(h, gamma, beta, gavg, selT, eps):
    """Per-sample GroupNorm on a (C, L = Bt*HW) layout.

    selT: (Bt, L) one-hot sample selector (lane p belongs to sample p // HW).
    gavg: (C, C) group-averaging matrix, already folding in 1/(group_size*HW).
    Reduce and broadcast both go through tiny MXU matmuls; variance uses
    E[(x-mean)^2] (no cancellation).  All math in f32.
    """
    f32 = jnp.float32
    # per-channel, per-sample sums: (C, L) . (Bt, L)^T -> (C, Bt)
    colsum = lax.dot_general(h, selT, (((1,), (1,)), ((), ())),
                             preferred_element_type=f32)
    mean = jnp.dot(jnp.dot(gavg, colsum, preferred_element_type=f32),
                   selT, preferred_element_type=f32)                  # (C, L)
    centered = h - mean
    sqsum = lax.dot_general(centered * centered, selT, (((1,), (1,)), ((), ())),
                            preferred_element_type=f32)
    var = jnp.dot(jnp.dot(gavg, sqsum, preferred_element_type=f32),
                  selT, preferred_element_type=f32)                   # (C, L)
    return centered * lax.rsqrt(var + eps) * gamma + beta


# --------------------------------- the kernel --------------------------------

def resx_kernel(x_ref, w1_ref, w2_ref, w3_ref, vec_ref, mask_ref, gavg_ref,
                selT_ref, out_ref, tap_ref, h2_ref, *,
                card, mid, Cs, Cout, offs, eps, L):
    x = x_ref[...]                                         # (Cin, L) bf16
    vecs = vec_ref[...]                                    # (Cmax, 8) f32 packed
    b1, g1, be1 = vecs[:Cs, 0:1], vecs[:Cs, 1:2], vecs[:Cs, 2:3]
    b2, g2, be2 = vecs[:Cs, 3:4], vecs[:Cs, 4:5], vecs[:Cs, 5:6]
    b3 = vecs[:Cout, 6:7]
    gavg = gavg_ref[...]                                   # (Cs, Cs) f32
    selT = selT_ref[...]                                   # (Bt, L) f32

    # --- 1x1 conv (filters_in -> mid), all branches stacked; bf16 MXU, f32 acc
    h = jnp.dot(w1_ref[...], x, preferred_element_type=jnp.float32) + b1
    h = _leaky(_group_norm(h, g1, be1, gavg, selT, eps))   # (Cs, L) f32

    # --- dilated 3x3 conv taps: lane roll + precomputed zero-padding mask,
    #     streamed straight into VMEM scratch (branch-major layout); the mask
    #     also covers every roll that would wrap across a sample boundary.
    for k, s in enumerate(offs):
        if s == 0:
            tap = h                                        # center tap: no mask
        else:
            tap = pltpu.roll(h, shift=(-s) % L, axis=1) * mask_ref[pl.ds(k, 1), :]
        for j in range(card):
            tap_ref[pl.ds(j * 9 * mid + k * mid, mid), :] = tap[j * mid:(j + 1) * mid, :]

    # --- per-branch wide-K matmul (K = 9*mid): no block-diagonal zero padding
    for j in range(card):
        h2_ref[pl.ds(j * mid, mid), :] = jnp.dot(
            w2_ref[j], tap_ref[pl.ds(j * 9 * mid, 9 * mid), :],
            preferred_element_type=jnp.float32)

    h2 = _leaky(_group_norm(h2_ref[...] + b2, g2, be2, gavg, selT, eps))

    # --- 1x1 conv (mid -> filters_out) + ResX branch sum, one bf16 matmul ---
    out_ref[...] = jnp.dot(w3_ref[...], h2.astype(jnp.bfloat16),
                           preferred_element_type=jnp.float32) + b3


# ------------------------------ wrapper / glue --------------------------------

def _pick_bt(B, HW, lane_target):
    """Samples folded per grid step: widest lane block <= lane_target that
    divides B, preferring >= 2 grid steps (v7x has 2 TensorCores)."""
    divisors = [d for d in range(1, B + 1) if B % d == 0]
    fits = [d for d in divisors if d * HW <= max(lane_target, HW)]
    two_step = [d for d in fits if B // d >= 2]
    return max(two_step) if two_step else max(fits)


def resx_block_pallas(x, params, dilate_val, n_groups, eps=1e-5, lane_target=2048):
    B, Cin, H, W = x.shape
    HW = H * W
    card, mid, _ = params['w1'].shape
    Cout = params['w3'].shape[1]
    Cs = card * mid
    d = int(dilate_val)
    assert mid % n_groups == 0, "GroupNorm group size must divide mid channels"
    gs = mid // n_groups
    f32, bf16 = jnp.float32, jnp.bfloat16

    Bt = _pick_bt(B, HW, lane_target)
    L = Bt * HW
    nsteps = B // Bt

    # (B, Cin, H, W) -> (Cin, B*HW): channels on sublanes, batch folded into lanes
    x_flat = jnp.transpose(x, (1, 0, 2, 3)).reshape(Cin, B * HW).astype(bf16)

    # --- weights: fold cardinality into the channel axis (no scatter loops) ---
    w1s = params['w1'].reshape(Cs, Cin).astype(bf16)                    # (Cs, Cin)
    # per-branch (o, i, ky, kx) -> (o, k=ky*3+kx, i) -> (o, 9*mid)
    w2b = jnp.transpose(params['w2'], (0, 1, 3, 4, 2)).reshape(
        card, mid, 9 * mid).astype(f32)                                 # (card, mid, 9*mid)
    # (card, Cout, mid) -> (Cout, card*mid); output = sum_j W3_j @ h2_j
    w3cat = jnp.transpose(params['w3'], (1, 0, 2)).reshape(Cout, Cs).astype(bf16)
    b3sum = jnp.sum(params['b3'].astype(f32), axis=0)                   # (Cout,)

    # --- pack the seven per-channel vectors into one (Cmax, 8) block ---
    Cmax = max(Cs, Cout)

    def col(v):
        v = v.reshape(-1).astype(f32)
        return jnp.pad(v, (0, Cmax - v.shape[0]))

    vecs = jnp.stack(
        [col(params['b1']), col(params['g1']), col(params['be1']),
         col(params['b2']), col(params['g2']), col(params['be2']),
         col(b3sum), jnp.zeros((Cmax,), f32)], axis=1)                  # (Cmax, 8)

    # --- host-side static constants: tap shifts / masks, group-avg, selector ---
    yy, xx = np.meshgrid(np.arange(H), np.arange(W), indexing='ij')
    offs = []
    mask_np = np.zeros((9, HW), np.float32)
    k = 0
    for ky in range(3):
        for kx in range(3):
            dy, dx = (ky - 1) * d, (kx - 1) * d
            offs.append(dy * W + dx)
            valid = ((yy + dy >= 0) & (yy + dy < H) &
                     (xx + dx >= 0) & (xx + dx < W))
            mask_np[k] = valid.reshape(-1).astype(np.float32)
            k += 1
    masks = jnp.asarray(np.tile(mask_np, (1, Bt)))                      # (9, L)

    rch = np.arange(Cs)
    gavg_np = ((rch[:, None] // gs) == (rch[None, :] // gs)).astype(np.float32)
    gavg = jnp.asarray(gavg_np / float(gs * HW))                        # (Cs, Cs)
    selT = jnp.asarray(np.repeat(np.eye(Bt, dtype=np.float32), HW, axis=1))  # (Bt, L)

    kern = functools.partial(resx_kernel, card=card, mid=mid, Cs=Cs, Cout=Cout,
                             offs=tuple(offs), eps=eps, L=L)

    out = pl.pallas_call(
        kern,
        out_shape=jax.ShapeDtypeStruct((Cout, B * HW), jnp.float32),
        grid_spec=pltpu.PrefetchScalarGridSpec(
            num_scalar_prefetch=0,
            grid=(nsteps,),
            in_specs=[
                pl.BlockSpec((Cin, L), lambda b: (0, b)),               # x (Bt samples)
                pl.BlockSpec((Cs, Cin), lambda b: (0, 0)),              # stacked conv1 W
                pl.BlockSpec((card, mid, 9 * mid), lambda b: (0, 0, 0)),  # per-branch conv2 W
                pl.BlockSpec((Cout, Cs), lambda b: (0, 0)),             # concat conv3 W
                pl.BlockSpec((Cmax, 8), lambda b: (0, 0)),              # packed vectors
                pl.BlockSpec((9, L), lambda b: (0, 0)),                 # tap masks
                pl.BlockSpec((Cs, Cs), lambda b: (0, 0)),               # group-avg matrix
                pl.BlockSpec((Bt, L), lambda b: (0, 0)),                # sample selector
            ],
            out_specs=pl.BlockSpec((Cout, L), lambda b: (0, b)),
            scratch_shapes=[
                pltpu.VMEM((card * 9 * mid, L), jnp.float32),           # streamed taps
                pltpu.VMEM((Cs, L), jnp.float32),                       # conv2 output
            ],
        ),
        compiler_params=pltpu.CompilerParams(
            dimension_semantics=("parallel",),
            vmem_limit_bytes=32 * 1024 * 1024),
    )(x_flat, w1s, w2b, w3cat, vecs, masks, gavg, selT)

    return out.reshape(Cout, B, H, W).transpose(1, 0, 2, 3)


# ----------------------------- pure-JAX reference ------------------------------

def _leaky_ref(x):
    return jnp.where(x > 0, x, 0.05 * x)


def _group_norm_ref(x, gamma, beta, n_groups, eps=1e-5):
    B, C, H, W = x.shape
    xg = x.reshape(B, n_groups, C // n_groups, H, W)
    m = xg.mean(axis=(2, 3, 4), keepdims=True)
    v = ((xg - m) ** 2).mean(axis=(2, 3, 4), keepdims=True)
    xn = ((xg - m) / jnp.sqrt(v + eps)).reshape(B, C, H, W)
    return xn * gamma[None, :, None, None] + beta[None, :, None, None]


def _conv_ref(x, w, pad=0, dil=1):
    return lax.conv_general_dilated(
        x, w, window_strides=(1, 1), padding=((pad, pad), (pad, pad)),
        rhs_dilation=(dil, dil), dimension_numbers=('NCHW', 'OIHW', 'NCHW'),
        precision=lax.Precision.HIGHEST)


def res_block_ref(x, j, p, d, n_groups):
    h = _conv_ref(x, p['w1'][j][:, :, None, None]) + p['b1'][j][None, :, None, None]
    h = _leaky_ref(_group_norm_ref(h, p['g1'][j], p['be1'][j], n_groups))
    h = _conv_ref(h, p['w2'][j], pad=d, dil=d) + p['b2'][j][None, :, None, None]
    h = _leaky_ref(_group_norm_ref(h, p['g2'][j], p['be2'][j], n_groups))
    h = _conv_ref(h, p['w3'][j][:, :, None, None]) + p['b3'][j][None, :, None, None]
    return h


def resx_block_ref(x, p, d, n_groups):
    card = p['w1'].shape[0]
    out = res_block_ref(x, 0, p, d, n_groups)
    for j in range(1, card):
        out = out + res_block_ref(x, j, p, d, n_groups)
    return out


# ------------------------------------ main -------------------------------------

if __name__ == "__main__":
    # Small shapes consistent with ResXBlock: filters_in must be a multiple of 8.
    B, Cin, H, W = 4, 16, 16, 16
    Cout = 16
    dilate_val = 2

    group_reduce = Cin // 8                                  # reduce factor = 2
    cardinality = int(np.clip(Cin // 8, None, 32))           # 2 branches
    mid = Cin // group_reduce                                # 8 mid channels
    n_groups = mid // 4                                      # GroupNorm(2, 8)

    key = jax.random.PRNGKey(0)
    ks = jax.random.split(key, 11)
    x = jax.random.normal(ks[0], (B, Cin, H, W), jnp.float32)

    params = {
        'w1': jax.random.normal(ks[1], (cardinality, mid, Cin)) * (Cin ** -0.5),
        'b1': 0.05 * jax.random.normal(ks[2], (cardinality, mid)),
        'g1': 1.0 + 0.1 * jax.random.normal(ks[3], (cardinality, mid)),
        'be1': 0.1 * jax.random.normal(ks[4], (cardinality, mid)),
        'w2': jax.random.normal(ks[5], (cardinality, mid, mid, 3, 3)) * ((mid * 9) ** -0.5),
        'b2': 0.05 * jax.random.normal(ks[6], (cardinality, mid)),
        'g2': 1.0 + 0.1 * jax.random.normal(ks[7], (cardinality, mid)),
        'be2': 0.1 * jax.random.normal(ks[8], (cardinality, mid)),
        'w3': jax.random.normal(ks[9], (cardinality, Cout, mid)) * (mid ** -0.5),
        'b3': 0.05 * jax.random.normal(ks[10], (cardinality, Cout)),
    }
    params = jax.tree_util.tree_map(lambda a: a.astype(jnp.float32), params)

    out = resx_block_pallas(x, params, dilate_val, n_groups)
    out = jax.block_until_ready(out)

    ref = resx_block_ref(x, params, dilate_val, n_groups)
    ref = jax.block_until_ready(ref)

    assert out.shape == (B, Cout, H, W), out.shape
    out_np, ref_np = np.asarray(out), np.asarray(ref)
    assert np.isfinite(out_np).all()
    rel = np.linalg.norm(out_np - ref_np) / (np.linalg.norm(ref_np) + 1e-12)
    assert rel < 2e-2, f"relative error too large: {rel}"

    print("KERNEL_OK")
</pallas_src>

<mosaic_0001>
module attributes {stable_mosaic.version = 11 : i64} {
  func.func @resx_kernel(%arg0: i32, %arg1: memref<16x512xbf16, #tpu.memory_space<vmem>>, %arg2: memref<16x16xbf16, #tpu.memory_space<vmem>>, %arg3: memref<2x8x72xf32, #tpu.memory_space<vmem>>, %arg4: memref<16x16xbf16, #tpu.memory_space<vmem>>, %arg5: memref<16x8xf32, #tpu.memory_space<vmem>>, %arg6: memref<9x512xf32, #tpu.memory_space<vmem>>, %arg7: memref<16x16xf32, #tpu.memory_space<vmem>>, %arg8: memref<2x512xf32, #tpu.memory_space<vmem>>, %arg9: memref<16x512xf32, #tpu.memory_space<vmem>>, %arg10: memref<144x512xf32, #tpu.memory_space<vmem>>, %arg11: memref<16x512xf32, #tpu.memory_space<vmem>>) attributes {dimension_semantics = [#tpu.dimension_semantics<parallel>], iteration_bounds = array<i64: 2>, scalar_prefetch = 0 : i64, scratch_operands = 2 : i64, tpu.core_type = #tpu.core_type<tc>, window_params = [{transform_indices = @transform_0, window_bounds = array<i64: 16, 512>}, {pipeline_mode = #tpu.pipeline_mode<synchronous>, transform_indices = @transform_1, window_bounds = array<i64: 16, 16>}, {pipeline_mode = #tpu.pipeline_mode<synchronous>, transform_indices = @transform_2, window_bounds = array<i64: 2, 8, 72>}, {pipeline_mode = #tpu.pipeline_mode<synchronous>, transform_indices = @transform_3, window_bounds = array<i64: 16, 16>}, {pipeline_mode = #tpu.pipeline_mode<synchronous>, transform_indices = @transform_4, window_bounds = array<i64: 16, 8>}, {pipeline_mode = #tpu.pipeline_mode<synchronous>, transform_indices = @transform_5, window_bounds = array<i64: 9, 512>}, {pipeline_mode = #tpu.pipeline_mode<synchronous>, transform_indices = @transform_6, window_bounds = array<i64: 16, 16>}, {pipeline_mode = #tpu.pipeline_mode<synchronous>, transform_indices = @transform_7, window_bounds = array<i64: 2, 512>}, {transform_indices = @transform_8, window_bounds = array<i64: 16, 512>}]} {
    %c0 = arith.constant 0 : index
    %c0_0 = arith.constant 0 : index
    %0 = vector.load %arg1[%c0, %c0_0] : memref<16x512xbf16, #tpu.memory_space<vmem>>, vector<16x512xbf16>
    %c0_1 = arith.constant 0 : index
    %c0_2 = arith.constant 0 : index
    %1 = vector.load %arg5[%c0_1, %c0_2] : memref<16x8xf32, #tpu.memory_space<vmem>>, vector<16x8xf32>
    %2 = vector.extract_strided_slice %1 {offsets = [0, 0], sizes = [16, 1], strides = [1, 1]} : vector<16x8xf32> to vector<16x1xf32>
    %3 = vector.extract_strided_slice %1 {offsets = [0, 1], sizes = [16, 1], strides = [1, 1]} : vector<16x8xf32> to vector<16x1xf32>
    %4 = vector.extract_strided_slice %1 {offsets = [0, 2], sizes = [16, 1], strides = [1, 1]} : vector<16x8xf32> to vector<16x1xf32>
    %5 = vector.extract_strided_slice %1 {offsets = [0, 3], sizes = [16, 1], strides = [1, 1]} : vector<16x8xf32> to vector<16x1xf32>
    %6 = vector.extract_strided_slice %1 {offsets = [0, 4], sizes = [16, 1], strides = [1, 1]} : vector<16x8xf32> to vector<16x1xf32>
    %7 = vector.extract_strided_slice %1 {offsets = [0, 5], sizes = [16, 1], strides = [1, 1]} : vector<16x8xf32> to vector<16x1xf32>
    %8 = vector.extract_strided_slice %1 {offsets = [0, 6], sizes = [16, 1], strides = [1, 1]} : vector<16x8xf32> to vector<16x1xf32>
    %c0_3 = arith.constant 0 : index
    %c0_4 = arith.constant 0 : index
    %9 = vector.load %arg7[%c0_3, %c0_4] : memref<16x16xf32, #tpu.memory_space<vmem>>, vector<16x16xf32>
    %c0_5 = arith.constant 0 : index
    %c0_6 = arith.constant 0 : index
    %10 = vector.load %arg8[%c0_5, %c0_6] : memref<2x512xf32, #tpu.memory_space<vmem>>, vector<2x512xf32>
    %c0_7 = arith.constant 0 : index
    %c0_8 = arith.constant 0 : index
    %11 = vector.load %arg2[%c0_7, %c0_8] : memref<16x16xbf16, #tpu.memory_space<vmem>>, vector<16x16xbf16>
    %cst = arith.constant dense<0.000000e+00> : vector<16x512xf32>
    %12 = tpu.matmul %11, %0, %cst {dimension_numbers = #tpu.dot_dimension_numbers<[1], [0], [0], [1], [0, 0, 1, 1], [], []>} : vector<16x16xbf16>, vector<16x512xbf16>, vector<16x512xf32> -> vector<16x512xf32>
    %13 = vector.broadcast %2 : vector<16x1xf32> to vector<16x512xf32>
    %14 = arith.addf %12, %13 : vector<16x512xf32>
    %cst_9 = arith.constant dense<0.000000e+00> : vector<16x2xf32>
    %15 = tpu.matmul %14, %10, %cst_9 {dimension_numbers = #tpu.dot_dimension_numbers<[1], [1], [0], [0], [0, 0, 1, 0], [], []>} : vector<16x512xf32>, vector<2x512xf32>, vector<16x2xf32> -> vector<16x2xf32>
    %cst_10 = arith.constant dense<0.000000e+00> : vector<16x2xf32>
    %16 = tpu.matmul %9, %15, %cst_10 {dimension_numbers = #tpu.dot_dimension_numbers<[1], [0], [0], [1], [0, 0, 1, 1], [], []>} : vector<16x16xf32>, vector<16x2xf32>, vector<16x2xf32> -> vector<16x2xf32>
    %cst_11 = arith.constant dense<0.000000e+00> : vector<16x512xf32>
    %17 = tpu.matmul %16, %10, %cst_11 {dimension_numbers = #tpu.dot_dimension_numbers<[1], [0], [0], [1], [0, 0, 1, 1], [], []>} : vector<16x2xf32>, vector<2x512xf32>, vector<16x512xf32> -> vector<16x512xf32>
    %18 = arith.subf %14, %17 : vector<16x512xf32>
    %19 = arith.mulf %18, %18 : vector<16x512xf32>
    %cst_12 = arith.constant dense<0.000000e+00> : vector<16x2xf32>
    %20 = tpu.matmul %19, %10, %cst_12 {dimension_numbers = #tpu.dot_dimension_numbers<[1], [1], [0], [0], [0, 0, 1, 0], [], []>} : vector<16x512xf32>, vector<2x512xf32>, vector<16x2xf32> -> vector<16x2xf32>
    %cst_13 = arith.constant dense<0.000000e+00> : vector<16x2xf32>
    %21 = tpu.matmul %9, %20, %cst_13 {dimension_numbers = #tpu.dot_dimension_numbers<[1], [0], [0], [1], [0, 0, 1, 1], [], []>} : vector<16x16xf32>, vector<16x2xf32>, vector<16x2xf32> -> vector<16x2xf32>
    %cst_14 = arith.constant dense<0.000000e+00> : vector<16x512xf32>
    %22 = tpu.matmul %21, %10, %cst_14 {dimension_numbers = #tpu.dot_dimension_numbers<[1], [0], [0], [1], [0, 0, 1, 1], [], []>} : vector<16x2xf32>, vector<2x512xf32>, vector<16x512xf32> -> vector<16x512xf32>
    %cst_15 = arith.constant 9.99999974E-6 : f32
    %23 = vector.broadcast %cst_15 : f32 to vector<16x512xf32>
    %24 = arith.addf %22, %23 : vector<16x512xf32>
    %25 = math.rsqrt %24 : vector<16x512xf32>
    %26 = arith.mulf %18, %25 : vector<16x512xf32>
    %27 = vector.broadcast %3 : vector<16x1xf32> to vector<16x512xf32>
    %28 = arith.mulf %26, %27 : vector<16x512xf32>
    %29 = vector.broadcast %4 : vector<16x1xf32> to vector<16x512xf32>
    %30 = arith.addf %28, %29 : vector<16x512xf32>
    %cst_16 = arith.constant 0.000000e+00 : f32
    %31 = vector.broadcast %cst_16 : f32 to vector<16x512xf32>
    %32 = arith.cmpf ogt, %30, %31 : vector<16x512xf32>
    %cst_17 = arith.constant 5.000000e-02 : f32
    %33 = vector.broadcast %cst_17 : f32 to vector<16x512xf32>
    %34 = arith.mulf %33, %30 : vector<16x512xf32>
    %35 = arith.select %32, %30, %34 : vector<16x512xi1>, vector<16x512xf32>
    %c34_i32 = arith.constant 34 : i32
    %36 = tpu.dynamic_rotate %35 by %c34_i32 dim 1 : vector<16x512xf32>, i32 -> vector<16x512xf32>
    %c0_18 = arith.constant 0 : index
    %c0_19 = arith.constant 0 : index
    %37 = vector.load %arg6[%c0_18, %c0_19] : memref<9x512xf32, #tpu.memory_space<vmem>>, vector<1x512xf32>
    %38 = vector.broadcast %37 : vector<1x512xf32> to vector<16x512xf32>
    %39 = arith.mulf %36, %38 : vector<16x512xf32>
    %40 = vector.extract_strided_slice %39 {offsets = [0, 0], sizes = [8, 512], strides = [1, 1]} : vector<16x512xf32> to vector<8x512xf32>
    %c0_20 = arith.constant 0 : index
    %c0_21 = arith.constant 0 : index
    %41 = vector.load %arg10[%c0_20, %c0_21] : memref<144x512xf32, #tpu.memory_space<vmem>>, vector<8x512xf32>
    tpu.vector_store %arg10[%c0_20, %c0_21], %40 {strides = array<i32>} : memref<144x512xf32, #tpu.memory_space<vmem>>, vector<8x512xf32>,
    %42 = vector.extract_strided_slice %39 {offsets = [8, 0], sizes = [8, 512], strides = [1, 1]} : vector<16x512xf32> to vector<8x512xf32>
    %c72 = arith.constant 72 : index
    %c0_22 = arith.constant 0 : index
    %43 = vector.load %arg10[%c72, %c0_22] : memref<144x512xf32, #tpu.memory_space<vmem>>, vector<8x512xf32>
    tpu.vector_store %arg10[%c72, %c0_22], %42 {strides = array<i32>} : memref<144x512xf32, #tpu.memory_space<vmem>>, vector<8x512xf32>,
    %c32_i32 = arith.constant 32 : i32
    %44 = tpu.dynamic_rotate %35 by %c32_i32 dim 1 : vector<16x512xf32>, i32 -> vector<16x512xf32>
    %c1 = arith.constant 1 : index
    %c0_23 = arith.constant 0 : index
    %45 = vector.load %arg6[%c1, %c0_23] : memref<9x512xf32, #tpu.memory_space<vmem>>, vector<1x512xf32>
    %46 = vector.broadcast %45 : vector<1x512xf32> to vector<16x512xf32>
    %47 = arith.mulf %44, %46 : vector<16x512xf32>
    %48 = vector.extract_strided_slice %47 {offsets = [0, 0], sizes = [8, 512], strides = [1, 1]} : vector<16x512xf32> to vector<8x512xf32>
    %c8 = arith.constant 8 : index
    %c0_24 = arith.constant 0 : index
    %49 = vector.load %arg10[%c8, %c0_24] : memref<144x512xf32, #tpu.memory_space<vmem>>, vector<8x512xf32>
    tpu.vector_store %arg10[%c8, %c0_24], %48 {strides = array<i32>} : memref<144x512xf32, #tpu.memory_space<vmem>>, vector<8x512xf32>,
    %50 = vector.extract_strided_slice %47 {offsets = [8, 0], sizes = [8, 512], strides = [1, 1]} : vector<16x512xf32> to vector<8x512xf32>
    %c80 = arith.constant 80 : index
    %c0_25 = arith.constant 0 : index
    %51 = vector.load %arg10[%c80, %c0_25] : memref<144x512xf32, #tpu.memory_space<vmem>>, vector<8x512xf32>
    tpu.vector_store %arg10[%c80, %c0_25], %50 {strides = array<i32>} : memref<144x512xf32, #tpu.memory_space<vmem>>, vector<8x512xf32>,
    %c30_i32 = arith.constant 30 : i32
    %52 = tpu.dynamic_rotate %35 by %c30_i32 dim 1 : vector<16x512xf32>, i32 -> vector<16x512xf32>
    %c2 = arith.constant 2 : index
    %c0_26 = arith.constant 0 : index
    %53 = vector.load %arg6[%c2, %c0_26] : memref<9x512xf32, #tpu.memory_space<vmem>>, vector<1x512xf32>
    %54 = vector.broadcast %53 : vector<1x512xf32> to vector<16x512xf32>
    %55 = arith.mulf %52, %54 : vector<16x512xf32>
    %56 = vector.extract_strided_slice %55 {offsets = [0, 0], sizes = [8, 512], strides = [1, 1]} : vector<16x512xf32> to vector<8x512xf32>
    %c16 = arith.constant 16 : index
    %c0_27 = arith.constant 0 : index
    %57 = vector.load %arg10[%c16, %c0_27] : memref<144x512xf32, #tpu.memory_space<vmem>>, vector<8x512xf32>
    tpu.vector_store %arg10[%c16, %c0_27], %56 {strides = array<i32>} : memref<144x512xf32, #tpu.memory_space<vmem>>, vector<8x512xf32>,
    %58 = vector.extract_strided_slice %55 {offsets = [8, 0], sizes = [8, 512], strides = [1, 1]} : vector<16x512xf32> to vector<8x512xf32>
    %c88 = arith.constant 88 : index
    %c0_28 = arith.constant 0 : index
    %59 = vector.load %arg10[%c88, %c0_28] : memref<144x512xf32, #tpu.memory_space<vmem>>, vector<8x512xf32>
    tpu.vector_store %arg10[%c88, %c0_28], %58 {strides = array<i32>} : memref<144x512xf32, #tpu.memory_space<vmem>>, vector<8x512xf32>,
    %c2_i32 = arith.constant 2 : i32
    %60 = tpu.dynamic_rotate %35 by %c2_i32 dim 1 : vector<16x512xf32>, i32 -> vector<16x512xf32>
    %c3 = arith.constant 3 : index
    %c0_29 = arith.constant 0 : index
    %61 = vector.load %arg6[%c3, %c0_29] : memref<9x512xf32, #tpu.memory_space<vmem>>, vector<1x512xf32>
    %62 = vector.broadcast %61 : vector<1x512xf32> to vector<16x512xf32>
    %63 = arith.mulf %60, %62 : vector<16x512xf32>
    %64 = vector.extract_strided_slice %63 {offsets = [0, 0], sizes = [8, 512], strides = [1, 1]} : vector<16x512xf32> to vector<8x512xf32>
    %c24 = arith.constant 24 : index
    %c0_30 = arith.constant 0 : index
    %65 = vector.load %arg10[%c24, %c0_30] : memref<144x512xf32, #tpu.memory_space<vmem>>, vector<8x512xf32>
    tpu.vector_store %arg10[%c24, %c0_30], %64 {strides = array<i32>} : memref<144x512xf32, #tpu.memory_space<vmem>>, vector<8x512xf32>,
    %66 = vector.extract_strided_slice %63 {offsets = [8, 0], sizes = [8, 512], strides = [1, 1]} : vector<16x512xf32> to vector<8x512xf32>
    %c96 = arith.constant 96 : index
    %c0_31 = arith.constant 0 : index
    %67 = vector.load %arg10[%c96, %c0_31] : memref<144x512xf32, #tpu.memory_space<vmem>>, vector<8x512xf32>
    tpu.vector_store %arg10[%c96, %c0_31], %66 {strides = array<i32>} : memref<144x512xf32, #tpu.memory_space<vmem>>, vector<8x512xf32>,
    %68 = vector.extract_strided_slice %35 {offsets = [0, 0], sizes = [8, 512], strides = [1, 1]} : vector<16x512xf32> to vector<8x512xf32>
    %c32 = arith.constant 32 : index
    %c0_32 = arith.constant 0 : index
    %69 = vector.load %arg10[%c32, %c0_32] : memref<144x512xf32, #tpu.memory_space<vmem>>, vector<8x512xf32>
    tpu.vector_store %arg10[%c32, %c0_32], %68 {strides = array<i32>} : memref<144x512xf32, #tpu.memory_space<vmem>>, vector<8x512xf32>,
    %70 = vector.extract_strided_slice %35 {offsets = [8, 0], sizes = [8, 512], strides = [1, 1]} : vector<16x512xf32> to vector<8x512xf32>
    %c104 = arith.constant 104 : index
    %c0_33 = arith.constant 0 : index
    %71 = vector.load %arg10[%c104, %c0_33] : memref<144x512xf32, #tpu.memory_space<vmem>>, vector<8x512xf32>
    tpu.vector_store %arg10[%c104, %c0_33], %70 {strides = array<i32>} : memref<144x512xf32, #tpu.memory_space<vmem>>, vector<8x512xf32>,
    %c510_i32 = arith.constant 510 : i32
    %72 = tpu.dynamic_rotate %35 by %c510_i32 dim 1 : vector<16x512xf32>, i32 -> vector<16x512xf32>
    %c5 = arith.constant 5 : index
    %c0_34 = arith.constant 0 : index
    %73 = vector.load %arg6[%c5, %c0_34] : memref<9x512xf32, #tpu.memory_space<vmem>>, vector<1x512xf32>
    %74 = vector.broadcast %73 : vector<1x512xf32> to vector<16x512xf32>
    %75 = arith.mulf %72, %74 : vector<16x512xf32>
    %76 = vector.extract_strided_slice %75 {offsets = [0, 0], sizes = [8, 512], strides = [1, 1]} : vector<16x512xf32> to vector<8x512xf32>
    %c40 = arith.constant 40 : index
    %c0_35 = arith.constant 0 : index
    %77 = vector.load %arg10[%c40, %c0_35] : memref<144x512xf32, #tpu.memory_space<vmem>>, vector<8x512xf32>
    tpu.vector_store %arg10[%c40, %c0_35], %76 {strides = array<i32>} : memref<144x512xf32, #tpu.memory_space<vmem>>, vector<8x512xf32>,
    %78 = vector.extract_strided_slice %75 {offsets = [8, 0], sizes = [8, 512], strides = [1, 1]} : vector<16x512xf32> to vector<8x512xf32>
    %c112 = arith.constant 112 : index
    %c0_36 = arith.constant 0 : index
    %79 = vector.load %arg10[%c112, %c0_36] : memref<144x512xf32, #tpu.memory_space<vmem>>, vector<8x512xf32>
    tpu.vector_store %arg10[%c112, %c0_36], %78 {strides = array<i32>} : memref<144x512xf32, #tpu.memory_space<vmem>>, vector<8x512xf32>,
    %c482_i32 = arith.constant 482 : i32
    %80 = tpu.dynamic_rotate %35 by %c482_i32 dim 1 : vector<16x512xf32>, i32 -> vector<16x512xf32>
    %c6 = arith.constant 6 : index
    %c0_37 = arith.constant 0 : index
    %81 = vector.load %arg6[%c6, %c0_37] : memref<9x512xf32, #tpu.memory_space<vmem>>, vector<1x512xf32>
    %82 = vector.broadcast %81 : vector<1x512xf32> to vector<16x512xf32>
    %83 = arith.mulf %80, %82 : vector<16x512xf32>
    %84 = vector.extract_strided_slice %83 {offsets = [0, 0], sizes = [8, 512], strides = [1, 1]} : vector<16x512xf32> to vector<8x512xf32>
    %c48 = arith.constant 48 : index
    %c0_38 = arith.constant 0 : index
    %85 = vector.load %arg10[%c48, %c0_38] : memref<144x512xf32, #tpu.memory_space<vmem>>, vector<8x512xf32>
    tpu.vector_store %arg10[%c48, %c0_38], %84 {strides = array<i32>} : memref<144x512xf32, #tpu.memory_space<vmem>>, vector<8x512xf32>,
    %86 = vector.extract_strided_slice %83 {offsets = [8, 0], sizes = [8, 512], strides = [1, 1]} : vector<16x512xf32> to vector<8x512xf32>
    %c120 = arith.constant 120 : index
    %c0_39 = arith.constant 0 : index
    %87 = vector.load %arg10[%c120, %c0_39] : memref<144x512xf32, #tpu.memory_space<vmem>>, vector<8x512xf32>
    tpu.vector_store %arg10[%c120, %c0_39], %86 {strides = array<i32>} : memref<144x512xf32, #tpu.memory_space<vmem>>, vector<8x512xf32>,
    %c480_i32 = arith.constant 480 : i32
    %88 = tpu.dynamic_rotate %35 by %c480_i32 dim 1 : vector<16x512xf32>, i32 -> vector<16x512xf32>
    %c7 = arith.constant 7 : index
    %c0_40 = arith.constant 0 : index
    %89 = vector.load %arg6[%c7, %c0_40] : memref<9x512xf32, #tpu.memory_space<vmem>>, vector<1x512xf32>
    %90 = vector.broadcast %89 : vector<1x512xf32> to vector<16x512xf32>
    %91 = arith.mulf %88, %90 : vector<16x512xf32>
    %92 = vector.extract_strided_slice %91 {offsets = [0, 0], sizes = [8, 512], strides = [1, 1]} : vector<16x512xf32> to vector<8x512xf32>
    %c56 = arith.constant 56 : index
    %c0_41 = arith.constant 0 : index
    %93 = vector.load %arg10[%c56, %c0_41] : memref<144x512xf32, #tpu.memory_space<vmem>>, vector<8x512xf32>
    tpu.vector_store %arg10[%c56, %c0_41], %92 {strides = array<i32>} : memref<144x512xf32, #tpu.memory_space<vmem>>, vector<8x512xf32>,
    %94 = vector.extract_strided_slice %91 {offsets = [8, 0], sizes = [8, 512], strides = [1, 1]} : vector<16x512xf32> to vector<8x512xf32>
    %c128 = arith.constant 128 : index
    %c0_42 = arith.constant 0 : index
    %95 = vector.load %arg10[%c128, %c0_42] : memref<144x512xf32, #tpu.memory_space<vmem>>, vector<8x512xf32>
    tpu.vector_store %arg10[%c128, %c0_42], %94 {strides = array<i32>} : memref<144x512xf32, #tpu.memory_space<vmem>>, vector<8x512xf32>,
    %c478_i32 = arith.constant 478 : i32
    %96 = tpu.dynamic_rotate %35 by %c478_i32 dim 1 : vector<16x512xf32>, i32 -> vector<16x512xf32>
    %c8_43 = arith.constant 8 : index
    %c0_44 = arith.constant 0 : index
    %97 = vector.load %arg6[%c8_43, %c0_44] : memref<9x512xf32, #tpu.memory_space<vmem>>, vector<1x512xf32>
    %98 = vector.broadcast %97 : vector<1x512xf32> to vector<16x512xf32>
    %99 = arith.mulf %96, %98 : vector<16x512xf32>
    %100 = vector.extract_strided_slice %99 {offsets = [0, 0], sizes = [8, 512], strides = [1, 1]} : vector<16x512xf32> to vector<8x512xf32>
    %c64 = arith.constant 64 : index
    %c0_45 = arith.constant 0 : index
    %101 = vector.load %arg10[%c64, %c0_45] : memref<144x512xf32, #tpu.memory_space<vmem>>, vector<8x512xf32>
    tpu.vector_store %arg10[%c64, %c0_45], %100 {strides = array<i32>} : memref<144x512xf32, #tpu.memory_space<vmem>>, vector<8x512xf32>,
    %102 = vector.extract_strided_slice %99 {offsets = [8, 0], sizes = [8, 512], strides = [1, 1]} : vector<16x512xf32> to vector<8x512xf32>
    %c136 = arith.constant 136 : index
    %c0_46 = arith.constant 0 : index
    %103 = vector.load %arg10[%c136, %c0_46] : memref<144x512xf32, #tpu.memory_space<vmem>>, vector<8x512xf32>
    tpu.vector_store %arg10[%c136, %c0_46], %102 {strides = array<i32>} : memref<144x512xf32, #tpu.memory_space<vmem>>, vector<8x512xf32>,
    %c0_47 = arith.constant 0 : index
    %c0_48 = arith.constant 0 : index
    %c0_49 = arith.constant 0 : index
    %104 = vector.load %arg3[%c0_47, %c0_48, %c0_49] : memref<2x8x72xf32, #tpu.memory_space<vmem>>, vector<1x8x72xf32>
    %105 = vector.shape_cast %104 : vector<1x8x72xf32> to vector<8x72xf32>
    %c0_50 = arith.constant 0 : index
    %c0_51 = arith.constant 0 : index
    %106 = vector.load %arg10[%c0_50, %c0_51] : memref<144x512xf32, #tpu.memory_space<vmem>>, vector<72x512xf32>
    %cst_52 = arith.constant dense<0.000000e+00> : vector<8x512xf32>
    %107 = tpu.matmul %105, %106, %cst_52 {dimension_numbers = #tpu.dot_dimension_numbers<[1], [0], [0], [1], [0, 0, 1, 1], [], []>} : vector<8x72xf32>, vector<72x512xf32>, vector<8x512xf32> -> vector<8x512xf32>
    %c0_53 = arith.constant 0 : index
    %c0_54 = arith.constant 0 : index
    %108 = vector.load %arg11[%c0_53, %c0_54] : memref<16x512xf32, #tpu.memory_space<vmem>>, vector<8x512xf32>
    tpu.vector_store %arg11[%c0_53, %c0_54], %107 {strides = array<i32>} : memref<16x512xf32, #tpu.memory_space<vmem>>, vector<8x512xf32>,
    %c1_55 = arith.constant 1 : index
    %c0_56 = arith.constant 0 : index
    %c0_57 = arith.constant 0 : index
    %109 = vector.load %arg3[%c1_55, %c0_56, %c0_57] : memref<2x8x72xf32, #tpu.memory_space<vmem>>, vector<1x8x72xf32>
    %110 = vector.shape_cast %109 : vector<1x8x72xf32> to vector<8x72xf32>
    %c72_58 = arith.constant 72 : index
    %c0_59 = arith.constant 0 : index
    %111 = vector.load %arg10[%c72_58, %c0_59] : memref<144x512xf32, #tpu.memory_space<vmem>>, vector<72x512xf32>
    %cst_60 = arith.constant dense<0.000000e+00> : vector<8x512xf32>
    %112 = tpu.matmul %110, %111, %cst_60 {dimension_numbers = #tpu.dot_dimension_numbers<[1], [0], [0], [1], [0, 0, 1, 1], [], []>} : vector<8x72xf32>, vector<72x512xf32>, vector<8x512xf32> -> vector<8x512xf32>
    %c8_61 = arith.constant 8 : index
    %c0_62 = arith.constant 0 : index
    %113 = vector.load %arg11[%c8_61, %c0_62] : memref<16x512xf32, #tpu.memory_space<vmem>>, vector<8x512xf32>
    tpu.vector_store %arg11[%c8_61, %c0_62], %112 {strides = array<i32>} : memref<16x512xf32, #tpu.memory_space<vmem>>, vector<8x512xf32>,
    %c0_63 = arith.constant 0 : index
    %c0_64 = arith.constant 0 : index
    %114 = vector.load %arg11[%c0_63, %c0_64] : memref<16x512xf32, #tpu.memory_space<vmem>>, vector<16x512xf32>
    %115 = vector.broadcast %5 : vector<16x1xf32> to vector<16x512xf32>
    %116 = arith.addf %114, %115 : vector<16x512xf32>
    %cst_65 = arith.constant dense<0.000000e+00> : vector<16x2xf32>
    %117 = tpu.matmul %116, %10, %cst_65 {dimension_numbers = #tpu.dot_dimension_numbers<[1], [1], [0], [0], [0, 0, 1, 0], [], []>} : vector<16x512xf32>, vector<2x512xf32>, vector<16x2xf32> -> vector<16x2xf32>
    %cst_66 = arith.constant dense<0.000000e+00> : vector<16x2xf32>
    %118 = tpu.matmul %9, %117, %cst_66 {dimension_numbers = #tpu.dot_dimension_numbers<[1], [0], [0], [1], [0, 0, 1, 1], [], []>} : vector<16x16xf32>, vector<16x2xf32>, vector<16x2xf32> -> vector<16x2xf32>
    %cst_67 = arith.constant dense<0.000000e+00> : vector<16x512xf32>
    %119 = tpu.matmul %118, %10, %cst_67 {dimension_numbers = #tpu.dot_dimension_numbers<[1], [0], [0], [1], [0, 0, 1, 1], [], []>} : vector<16x2xf32>, vector<2x512xf32>, vector<16x512xf32> -> vector<16x512xf32>
    %120 = arith.subf %116, %119 : vector<16x512xf32>
    %121 = arith.mulf %120, %120 : vector<16x512xf32>
    %cst_68 = arith.constant dense<0.000000e+00> : vector<16x2xf32>
    %122 = tpu.matmul %121, %10, %cst_68 {dimension_numbers = #tpu.dot_dimension_numbers<[1], [1], [0], [0], [0, 0, 1, 0], [], []>} : vector<16x512xf32>, vector<2x512xf32>, vector<16x2xf32> -> vector<16x2xf32>
    %cst_69 = arith.constant dense<0.000000e+00> : vector<16x2xf32>
    %123 = tpu.matmul %9, %122, %cst_69 {dimension_numbers = #tpu.dot_dimension_numbers<[1], [0], [0], [1], [0, 0, 1, 1], [], []>} : vector<16x16xf32>, vector<16x2xf32>, vector<16x2xf32> -> vector<16x2xf32>
    %cst_70 = arith.constant dense<0.000000e+00> : vector<16x512xf32>
    %124 = tpu.matmul %123, %10, %cst_70 {dimension_numbers = #tpu.dot_dimension_numbers<[1], [0], [0], [1], [0, 0, 1, 1], [], []>} : vector<16x2xf32>, vector<2x512xf32>, vector<16x512xf32> -> vector<16x512xf32>
    %cst_71 = arith.constant 9.99999974E-6 : f32
    %125 = vector.broadcast %cst_71 : f32 to vector<16x512xf32>
    %126 = arith.addf %124, %125 : vector<16x512xf32>
    %127 = math.rsqrt %126 : vector<16x512xf32>
    %128 = arith.mulf %120, %127 : vector<16x512xf32>
    %129 = vector.broadcast %6 : vector<16x1xf32> to vector<16x512xf32>
    %130 = arith.mulf %128, %129 : vector<16x512xf32>
    %131 = vector.broadcast %7 : vector<16x1xf32> to vector<16x512xf32>
    %132 = arith.addf %130, %131 : vector<16x512xf32>
    %cst_72 = arith.constant 0.000000e+00 : f32
    %133 = vector.broadcast %cst_72 : f32 to vector<16x512xf32>
    %134 = arith.cmpf ogt, %132, %133 : vector<16x512xf32>
    %cst_73 = arith.constant 5.000000e-02 : f32
    %135 = vector.broadcast %cst_73 : f32 to vector<16x512xf32>
    %136 = arith.mulf %135, %132 : vector<16x512xf32>
    %137 = arith.select %134, %132, %136 : vector<16x512xi1>, vector<16x512xf32>
    %c0_74 = arith.constant 0 : index
    %c0_75 = arith.constant 0 : index
    %138 = vector.load %arg4[%c0_74, %c0_75] : memref<16x16xbf16, #tpu.memory_space<vmem>>, vector<16x16xbf16>
    %139 = arith.truncf %137 : vector<16x512xf32> to vector<16x512xbf16>
    %cst_76 = arith.constant dense<0.000000e+00> : vector<16x512xf32>
    %140 = tpu.matmul %138, %139, %cst_76 {dimension_numbers = #tpu.dot_dimension_numbers<[1], [0], [0], [1], [0, 0, 1, 1], [], []>} : vector<16x16xbf16>, vector<16x512xbf16>, vector<16x512xf32> -> vector<16x512xf32>
    %141 = vector.broadcast %8 : vector<16x1xf32> to vector<16x512xf32>
    %142 = arith.addf %140, %141 : vector<16x512xf32>
    %c0_77 = arith.constant 0 : index
    %c0_78 = arith.constant 0 : index
    %143 = vector.load %arg9[%c0_77, %c0_78] : memref<16x512xf32, #tpu.memory_space<vmem>>, vector<16x512xf32>
    tpu.vector_store %arg9[%c0_77, %c0_78], %142 {strides = array<i32>} : memref<16x512xf32, #tpu.memory_space<vmem>>, vector<16x512xf32>,
    return
  }
  func.func @transform_0(%arg0: i32) -> (i32, i32) {
    %c0_i32 = arith.constant 0 : i32
    %c0_i32_0 = arith.constant 0 : i32
    return %c0_i32, %arg0 : i32, i32
  }
  func.func @transform_1(%arg0: i32) -> (i32, i32) {
    %c0_i32 = arith.constant 0 : i32
    %c0_i32_0 = arith.constant 0 : i32
    %c0_i32_1 = arith.constant 0 : i32
    return %c0_i32, %c0_i32_0 : i32, i32
  }
  func.func @transform_2(%arg0: i32) -> (i32, i32, i32) {
    %c0_i32 = arith.constant 0 : i32
    %c0_i32_0 = arith.constant 0 : i32
    %c0_i32_1 = arith.constant 0 : i32
    %c0_i32_2 = arith.constant 0 : i32
    return %c0_i32, %c0_i32_0, %c0_i32_1 : i32, i32, i32
  }
  func.func @transform_3(%arg0: i32) -> (i32, i32) {
    %c0_i32 = arith.constant 0 : i32
    %c0_i32_0 = arith.constant 0 : i32
    %c0_i32_1 = arith.constant 0 : i32
    return %c0_i32, %c0_i32_0 : i32, i32
  }
  func.func @transform_4(%arg0: i32) -> (i32, i32) {
    %c0_i32 = arith.constant 0 : i32
    %c0_i32_0 = arith.constant 0 : i32
    %c0_i32_1 = arith.constant 0 : i32
    return %c0_i32, %c0_i32_0 : i32, i32
  }
  func.func @transform_5(%arg0: i32) -> (i32, i32) {
    %c0_i32 = arith.constant 0 : i32
    %c0_i32_0 = arith.constant 0 : i32
    %c0_i32_1 = arith.constant 0 : i32
    return %c0_i32, %c0_i32_0 : i32, i32
  }
  func.func @transform_6(%arg0: i32) -> (i32, i32) {
    %c0_i32 = arith.constant 0 : i32
    %c0_i32_0 = arith.constant 0 : i32
    %c0_i32_1 = arith.constant 0 : i32
    return %c0_i32, %c0_i32_0 : i32, i32
  }
  func.func @transform_7(%arg0: i32) -> (i32, i32) {
    %c0_i32 = arith.constant 0 : i32
    %c0_i32_0 = arith.constant 0 : i32
    %c0_i32_1 = arith.constant 0 : i32
    return %c0_i32, %c0_i32_0 : i32, i32
  }
  func.func @transform_8(%arg0: i32) -> (i32, i32) {
    %c0_i32 = arith.constant 0 : i32
    %c0_i32_0 = arith.constant 0 : i32
    return %c0_i32, %arg0 : i32, i32
  }
}

</mosaic_0001>

<llo_original>
// kernel: tpu_custom_call.1
$region0: #{tpu_custom_call.1}
  #allocation0 [shape = 'u32[]', space=smem, size = 0x4, offset = 0x4, fixed_abs, tag = 'smem constant byte address 0x4 - core index']
  #allocation1 [shape = 'u32[144,128]{1,0:T(1,128)}', space=vmem, size = 0x12000, scoped, tag = 'internal scratch']
  #allocation2 [shape = 'f32[144,512]{1,0:T(8,128)}', space=vmem, size = 0x48000, scoped, tag = 'scratch operand']
  #allocation3 [shape = 'f32[16,512]{1,0:T(8,128)}', space=vmem, size = 0x8000, scoped, tag = 'scratch operand']
  %s0 = inlined_call_operand.hbm [shape: bf16[16,1024], index: 0, kind: input, shape index: {}]
  %s1 = inlined_call_operand.hbm [shape: bf16[16,16], index: 1, kind: input, shape index: {}]
  %s2 = inlined_call_operand.vmem [shape: f32[2,8,72], index: 2, kind: input, shape index: {}]
  %s3 = inlined_call_operand.hbm [shape: bf16[16,16], index: 3, kind: input, shape index: {}]
  %s4 = inlined_call_operand.vmem [shape: f32[16,8], index: 4, kind: input, shape index: {}]
  %s5 = inlined_call_operand.hbm [shape: f32[9,512], index: 5, kind: input, shape index: {}]
  %s6 = inlined_call_operand.vmem [shape: f32[16,16], index: 6, kind: input, shape index: {}]
  %s7 = inlined_call_operand.hbm [shape: f32[2,512], index: 7, kind: input, shape index: {}]
  %s8 = inlined_call_operand.hbm [shape: f32[16,1024], index: 8, kind: output, shape index: {}]
  %s9 = sld [smem:[#allocation0]]
  $region85: #{tpu_custom_call.1} parent=0
    _
  %s11 = ssub.s32 1, %s9
  %s12 = scalar_select 0, %s11, %s9
  $region1: #{tpu_custom_call.1} parent=0
    #allocation4 [shape = 'u8[32768]{0}', space=vmem, size = 0x8000, scoped, tag = 'input window, operand 0']
    #allocation5 [shape = 's32[2]{0}', space=sflag, size = 0x8, scoped, tag = 'scoped memory for tpu_custom_call.1']
    #allocation6 [shape = 's32[2]{0}', space=sflag, size = 0x8, scoped, tag = 'scoped memory for tpu_custom_call.1']
    #allocation7 [shape = 'u8[4096]{0}', space=vmem, size = 0x1000, scoped, tag = 'input window, operand 1, single buffered']
    #allocation8 [shape = 's32[1]{0}', space=sflag, size = 0x4, scoped, tag = 'scoped memory for tpu_custom_call.1']
    #allocation9 [shape = 'u8[4096]{0}', space=vmem, size = 0x1000, scoped, tag = 'input window, operand 3, single buffered']
    #allocation10 [shape = 'u8[32768]{0}', space=vmem, size = 0x8000, scoped, tag = 'input window, operand 5, single buffered']
    #allocation11 [shape = 's32[1]{0}', space=sflag, size = 0x4, scoped, tag = 'scoped memory for tpu_custom_call.1']
    #allocation12 [shape = 'u8[4096]{0}', space=vmem, size = 0x1000, scoped, tag = 'input window, operand 7, single buffered']
    #allocation13 [shape = 'u8[65536]{0}', space=vmem, size = 0x10000, scoped, tag = 'output window, operand 0']
    %13 = vsyncpa [#allocation5], 0
    %s14 = scalar_lea.sflag [#allocation5], 1
    %15 = vsyncpa %s14, 0
    %16 = vsyncpa [#allocation8], 0
    %17 = vsyncpa [#allocation11], 0
    %18 = vsyncpa [#allocation6], 0
    %s19 = scalar_lea.sflag [#allocation6], 1
    %20 = vsyncpa %s19, 0
    loop: start=0, step=1, limit=4
    $region2: #{tpu_custom_call.1} parent=1 // loop_pre_header
      _
    $region3: #{tpu_custom_call.1} parent=1 // loop_header
      %s22 = sphi 0, %s26
      %p23 = scmp.ge.s32.totalorder %s22, 4
      %s32 = sphi 0, %s34
      %s35 = sphi 0, %s32
      %s36 = sphi 0, %s35
      %s52 = sphi 0, %s36
      %s56 = sphi 0, %s56
      %s58 = sphi 0, %s56
      %s59 = sphi 0, %s58
      %s73 = sphi 0, %s59
      %s77 = sphi 0, %s77
      %s79 = sphi 0, %s77
      %s80 = sphi 0, %s79
      %s94 = sphi 0, %s80
      %s98 = sphi 0, %s98
      %s100 = sphi 0, %s98
      %s101 = sphi 0, %s100
      %s115 = sphi 0, %s101
      %s119 = sphi 0, %s119
      %s121 = sphi 0, %s119
      %s122 = sphi 0, %s121
      %s136 = sphi 0, %s122
      %s140 = sphi 0, %s140
      %s142 = sphi 0, %s140
      %s143 = sphi 0, %s142
      %s157 = sphi 0, %s143
      %s161 = sphi 0, %s161
      %s163 = sphi 0, %s161
      %s164 = sphi 0, %s163
      %s178 = sphi 0, %s164
      %s182 = sphi 0, %s182
      %s184 = sphi 0, %s182
      %s185 = sphi 0, %s184
      %s199 = sphi 0, %s185
      %s205 = sphi 0, %s207
      %s208 = sphi 0, %s205
      %s209 = sphi 0, %s208
      %s225 = sphi 0, %s209
    $region4: #{tpu_custom_call.1} parent=1 // loop_header_branch
      %25 = sbr.rel (%p23) target = $region8
    $region5: #{tpu_custom_call.1} parent=1 // loop_body
      %s27 = ssub.s32 %s22, 1
      %s28 = ssub.s32 %s22, 2
      %s29 = sadd.s32 %s22, 1
      %s30 = ssub.s32 %s22, %s29
      %p31 = scmp.eq.s32.totalorder %s30, 0
      %s33 = sadd.s32 %s32, 1
      %s34 = scalar_select %p31, %s32, %s33
      %p37 = pneg %p31
      %p38 = scmp.eq.s32.totalorder %s22, 1
      %p39 = por %p37, %p38
      %p40 = scmp.ne.s32.totalorder %s32, %s35
      %p41 = scmp.eq.s32.totalorder %s22, 0
      %p42 = por %p40, %p41
      %p43 = scmp.ne.s32.totalorder %s32, %s35
      %p44 = scmp.eq.s32.totalorder %s27, 1
      %p45 = por %p43, %p44
      %p46 = scmp.ne.s32.totalorder %s35, %s36
      %p47 = scmp.eq.s32.totalorder %s27, 0
      %p48 = por %p46, %p47
      %p49 = scmp.ne.s32.totalorder %s35, %s36
      %p50 = scmp.eq.s32.totalorder %s28, 1
      %p51 = por %p49, %p50
      %p53 = scmp.ne.s32.totalorder %s36, %s52
      %p54 = scmp.eq.s32.totalorder %s28, 0
      %p55 = por %p53, %p54
      %s57 = sadd.s32 %s56, 1
      %p60 = scmp.eq.s32.totalorder %s22, 1
      %p61 = scmp.ne.s32.totalorder %s56, %s58
      %p62 = scmp.eq.s32.totalorder %s22, 0
      %p63 = por %p61, %p62
      %p64 = scmp.ne.s32.totalorder %s56, %s58
      %p65 = scmp.eq.s32.totalorder %s27, 1
      %p66 = por %p64, %p65
      %p67 = scmp.ne.s32.totalorder %s58, %s59
      %p68 = scmp.eq.s32.totalorder %s27, 0
      %p69 = por %p67, %p68
      %p70 = scmp.ne.s32.totalorder %s58, %s59
      %p71 = scmp.eq.s32.totalorder %s28, 1
      %p72 = por %p70, %p71
      %p74 = scmp.ne.s32.totalorder %s59, %s73
      %p75 = scmp.eq.s32.totalorder %s28, 0
      %p76 = por %p74, %p75
      %s78 = sadd.s32 %s77, 1
      %p81 = scmp.eq.s32.totalorder %s22, 1
      %p82 = scmp.ne.s32.totalorder %s77, %s79
      %p83 = scmp.eq.s32.totalorder %s22, 0
      %p84 = por %p82, %p83
      %p85 = scmp.ne.s32.totalorder %s77, %s79
      %p86 = scmp.eq.s32.totalorder %s27, 1
      %p87 = por %p85, %p86
      %p88 = scmp.ne.s32.totalorder %s79, %s80
      %p89 = scmp.eq.s32.totalorder %s27, 0
      %p90 = por %p88, %p89
      %p91 = scmp.ne.s32.totalorder %s79, %s80
      %p92 = scmp.eq.s32.totalorder %s28, 1
      %p93 = por %p91, %p92
      %p95 = scmp.ne.s32.totalorder %s80, %s94
      %p96 = scmp.eq.s32.totalorder %s28, 0
      %p97 = por %p95, %p96
      %s99 = sadd.s32 %s98, 1
      %p102 = scmp.eq.s32.totalorder %s22, 1
      %p103 = scmp.ne.s32.totalorder %s98, %s100
      %p104 = scmp.eq.s32.totalorder %s22, 0
      %p105 = por %p103, %p104
      %p106 = scmp.ne.s32.totalorder %s98, %s100
      %p107 = scmp.eq.s32.totalorder %s27, 1
      %p108 = por %p106, %p107
      %p109 = scmp.ne.s32.totalorder %s100, %s101
      %p110 = scmp.eq.s32.totalorder %s27, 0
      %p111 = por %p109, %p110
      %p112 = scmp.ne.s32.totalorder %s100, %s101
      %p113 = scmp.eq.s32.totalorder %s28, 1
      %p114 = por %p112, %p113
      %p116 = scmp.ne.s32.totalorder %s101, %s115
      %p117 = scmp.eq.s32.totalorder %s28, 0
      %p118 = por %p116, %p117
      %s120 = sadd.s32 %s119, 1
      %p123 = scmp.eq.s32.totalorder %s22, 1
      %p124 = scmp.ne.s32.totalorder %s119, %s121
      %p125 = scmp.eq.s32.totalorder %s22, 0
      %p126 = por %p124, %p125
      %p127 = scmp.ne.s32.totalorder %s119, %s121
      %p128 = scmp.eq.s32.totalorder %s27, 1
      %p129 = por %p127, %p128
      %p130 = scmp.ne.s32.totalorder %s121, %s122
      %p131 = scmp.eq.s32.totalorder %s27, 0
      %p132 = por %p130, %p131
      %p133 = scmp.ne.s32.totalorder %s121, %s122
      %p134 = scmp.eq.s32.totalorder %s28, 1
      %p135 = por %p133, %p134
      %p137 = scmp.ne.s32.totalorder %s122, %s136
      %p138 = scmp.eq.s32.totalorder %s28, 0
      %p139 = por %p137, %p138
      %s141 = sadd.s32 %s140, 1
      %p144 = scmp.eq.s32.totalorder %s22, 1
      %p145 = scmp.ne.s32.totalorder %s140, %s142
      %p146 = scmp.eq.s32.totalorder %s22, 0
      %p147 = por %p145, %p146
      %p148 = scmp.ne.s32.totalorder %s140, %s142
      %p149 = scmp.eq.s32.totalorder %s27, 1
      %p150 = por %p148, %p149
      %p151 = scmp.ne.s32.totalorder %s142, %s143
      %p152 = scmp.eq.s32.totalorder %s27, 0
      %p153 = por %p151, %p152
      %p154 = scmp.ne.s32.totalorder %s142, %s143
      %p155 = scmp.eq.s32.totalorder %s28, 1
      %p156 = por %p154, %p155
      %p158 = scmp.ne.s32.totalorder %s143, %s157
      %p159 = scmp.eq.s32.totalorder %s28, 0
      %p160 = por %p158, %p159
      %s162 = sadd.s32 %s161, 1
      %p165 = scmp.eq.s32.totalorder %s22, 1
      %p166 = scmp.ne.s32.totalorder %s161, %s163
      %p167 = scmp.eq.s32.totalorder %s22, 0
      %p168 = por %p166, %p167
      %p169 = scmp.ne.s32.totalorder %s161, %s163
      %p170 = scmp.eq.s32.totalorder %s27, 1
      %p171 = por %p169, %p170
      %p172 = scmp.ne.s32.totalorder %s163, %s164
      %p173 = scmp.eq.s32.totalorder %s27, 0
      %p174 = por %p172, %p173
      %p175 = scmp.ne.s32.totalorder %s163, %s164
      %p176 = scmp.eq.s32.totalorder %s28, 1
      %p177 = por %p175, %p176
      %p179 = scmp.ne.s32.totalorder %s164, %s178
      %p180 = scmp.eq.s32.totalorder %s28, 0
      %p181 = por %p179, %p180
      %s183 = sadd.s32 %s182, 1
      %p186 = scmp.eq.s32.totalorder %s22, 1
      %p187 = scmp.ne.s32.totalorder %s182, %s184
      %p188 = scmp.eq.s32.totalorder %s22, 0
      %p189 = por %p187, %p188
      %p190 = scmp.ne.s32.totalorder %s182, %s184
      %p191 = scmp.eq.s32.totalorder %s27, 1
      %p192 = por %p190, %p191
      %p193 = scmp.ne.s32.totalorder %s184, %s185
      %p194 = scmp.eq.s32.totalorder %s27, 0
      %p195 = por %p193, %p194
      %p196 = scmp.ne.s32.totalorder %s184, %s185
      %p197 = scmp.eq.s32.totalorder %s28, 1
      %p198 = por %p196, %p197
      %p200 = scmp.ne.s32.totalorder %s185, %s199
      %p201 = scmp.eq.s32.totalorder %s28, 0
      %p202 = por %p200, %p201
      %s203 = ssub.s32 %s22, %s29
      %p204 = scmp.eq.s32.totalorder %s203, 0
      %s206 = sadd.s32 %s205, 1
      %s207 = scalar_select %p204, %s205, %s206
      %p210 = pneg %p204
      %p211 = scmp.eq.s32.totalorder %s22, 1
      %p212 = por %p210, %p211
      %p213 = scmp.ne.s32.totalorder %s205, %s208
      %p214 = scmp.eq.s32.totalorder %s22, 0
      %p215 = por %p213, %p214
      %p216 = scmp.ne.s32.totalorder %s205, %s208
      %p217 = scmp.eq.s32.totalorder %s27, 1
      %p218 = por %p216, %p217
      %p219 = scmp.ne.s32.totalorder %s208, %s209
      %p220 = scmp.eq.s32.totalorder %s27, 0
      %p221 = por %p219, %p220
      %p222 = scmp.ne.s32.totalorder %s208, %s209
      %p223 = scmp.eq.s32.totalorder %s28, 1
      %p224 = por %p222, %p223
      %p226 = scmp.ne.s32.totalorder %s209, %s225
      %p227 = scmp.eq.s32.totalorder %s28, 0
      %p228 = por %p226, %p227
      %p229 = scmp.le.s32.totalorder 1, %s22
      %p230 = scmp.lt.s32.totalorder %s22, 3
      %p231 = pnand %p229, %p230
      %p232 = pneg %p231
      // Predicated region
      $region9: #{tpu_custom_call.1} parent=5 // pred_check
        _
      $region10: #{tpu_custom_call.1} parent=5 // pred_check_branch
        %234 = sbr.rel (%p231) target = $region12
      $region11: #{tpu_custom_call.1} parent=5 // pred_region
        %s235 = ssub.s32 %s22, 1
        // Predicated region
        $region13: #{tpu_custom_call.1} parent=11 // pred_check
          %p236 = pneg %p69
        $region14: #{tpu_custom_call.1} parent=11 // pred_check_branch
          %238 = sbr.rel (%p236) target = $region16
        $region15: #{tpu_custom_call.1} parent=11 // pred_region
          %s240 = ssub.s32 128, 128
          %241 = vsyncadd [#allocation8], %s240
          %s242 = sshll.u32 [#allocation7], 4
          %s243 = int_to_ptr.vmem [resolvable:$true] %s242
          %248 = dma.hbm_to_vmem [thread:$0]  %s1, 128, %s243, [#allocation8], 64, 64, 4
        $region16: #{tpu_custom_call.1} parent=11 // pred_fallthru
          _
        // Predicated region
        $region17: #{tpu_custom_call.1} parent=11 // pred_check
          %p249 = pneg %p90
        $region18: #{tpu_custom_call.1} parent=11 // pred_check_branch
          %251 = sbr.rel (%p249) target = $region20
        $region19: #{tpu_custom_call.1} parent=11 // pred_region
          _
        $region20: #{tpu_custom_call.1} parent=11 // pred_fallthru
          _
        // Predicated region
        $region21: #{tpu_custom_call.1} parent=11 // pred_check
          %p252 = pneg %p111
        $region22: #{tpu_custom_call.1} parent=11 // pred_check_branch
          %254 = sbr.rel (%p252) target = $region24
        $region23: #{tpu_custom_call.1} parent=11 // pred_region
          %s256 = ssub.s32 128, 128
          %257 = vsyncadd [#allocation8], %s256
          %s258 = sshll.u32 [#allocation9], 4
          %s259 = int_to_ptr.vmem [resolvable:$true] %s258
          %264 = dma.hbm_to_vmem [thread:$0]  %s3, 128, %s259, [#allocation8], 64, 64, 4
        $region24: #{tpu_custom_call.1} parent=11 // pred_fallthru
          _
        // Predicated region
        $region25: #{tpu_custom_call.1} parent=11 // pred_check
          %p265 = pneg %p132
        $region26: #{tpu_custom_call.1} parent=11 // pred_check_branch
          %267 = sbr.rel (%p265) target = $region28
        $region27: #{tpu_custom_call.1} parent=11 // pred_region
          _
        $region28: #{tpu_custom_call.1} parent=11 // pred_fallthru
          _
        // Predicated region
        $region29: #{tpu_custom_call.1} parent=11 // pred_check
          %p268 = pneg %p153
        $region30: #{tpu_custom_call.1} parent=11 // pred_check_branch
          %270 = sbr.rel (%p268) target = $region32
        $region31: #{tpu_custom_call.1} parent=11 // pred_region
          %s272 = ssub.s32 1024, 1024
          %273 = vsyncadd [#allocation11], %s272
          %s274 = sshll.u32 [#allocation10], 4
          %s275 = int_to_ptr.vmem [resolvable:$true] %s274
          %280 = dma.hbm_to_vmem [thread:$0]  %s5, 1024, %s275, [#allocation11], 512, 512, 32
        $region32: #{tpu_custom_call.1} parent=11 // pred_fallthru
          _
        // Predicated region
        $region33: #{tpu_custom_call.1} parent=11 // pred_check
          %p281 = pneg %p174
        $region34: #{tpu_custom_call.1} parent=11 // pred_check_branch
          %283 = sbr.rel (%p281) target = $region36
        $region35: #{tpu_custom_call.1} parent=11 // pred_region
          _
        $region36: #{tpu_custom_call.1} parent=11 // pred_fallthru
          _
        // Predicated region
        $region37: #{tpu_custom_call.1} parent=11 // pred_check
          %p284 = pneg %p195
        $region38: #{tpu_custom_call.1} parent=11 // pred_check_branch
          %286 = sbr.rel (%p284) target = $region40
        $region39: #{tpu_custom_call.1} parent=11 // pred_region
          %s288 = ssub.s32 128, 128
          %289 = vsyncadd [#allocation11], %s288
          %s291 = sshll.u32 [#allocation12], 4
          %s292 = int_to_ptr.vmem [resolvable:$true] %s291
          %294 = dma.hbm_to_vmem [thread:$0]  %s7, 128, %s292, [#allocation11]
        $region40: #{tpu_custom_call.1} parent=11 // pred_fallthru
          _
      $region12: #{tpu_custom_call.1} parent=5 // pred_fallthru
        _
      %p295 = scmp.lt.s32.totalorder %s22, 2
      // Predicated region
      $region41: #{tpu_custom_call.1} parent=5 // pred_check
        %p296 = pneg %p295
      $region42: #{tpu_custom_call.1} parent=5 // pred_check_branch
        %298 = sbr.rel (%p296) target = $region44
      $region43: #{tpu_custom_call.1} parent=5 // pred_region
        // Predicated region
        $region45: #{tpu_custom_call.1} parent=43 // pred_check
          %p299 = pneg %p42
        $region46: #{tpu_custom_call.1} parent=43 // pred_check_branch
          %301 = sbr.rel (%p299) target = $region48
        $region47: #{tpu_custom_call.1} parent=43 // pred_region
          %s302 = sand.u32 %s32, 1
          %s303 = scalar_lea.sflag [#allocation5], %s302
          %s304 = sand.u32 %s32, 1
          %s305 = smul.addr %s304, 32
          %s306 = scalar_lea.vmem [#allocation4], %s305
          %s307 = smul.u32 4, %s22
          %s309 = ssub.s32 512, 512
          %310 = vsyncadd %s303, %s309
          %s311 = smul.addr %s307, 64
          %s312 = scalar_lea.hbm %s0, %s311
          %s313 = sshll.u32 %s306, 4
          %s314 = int_to_ptr.vmem [resolvable:$true] %s313
          %319 = dma.hbm_to_vmem [thread:$0]  %s312, 512, %s314, %s303, 512, 256, 16
        $region48: #{tpu_custom_call.1} parent=43 // pred_fallthru
          _
      $region44: #{tpu_custom_call.1} parent=5 // pred_fallthru
        _
      %p320 = scmp.le.s32.totalorder 1, %s22
      %p321 = scmp.lt.s32.totalorder %s22, 3
      %p322 = pnand %p320, %p321
      %p323 = pneg %p322
      // Predicated region
      $region49: #{tpu_custom_call.1} parent=5 // pred_check
        _
      $region50: #{tpu_custom_call.1} parent=5 // pred_check_branch
        %325 = sbr.rel (%p322) target = $region52
      $region51: #{tpu_custom_call.1} parent=5 // pred_region
        %s326 = ssub.s32 %s22, 1
        %s327 = sand.u32 %s35, 1
        %s328 = scalar_lea.sflag [#allocation5], %s327
        %s329 = sand.u32 %s35, 1
        %s330 = smul.addr %s329, 32
        %s331 = scalar_lea.vmem [#allocation4], %s330
        // Predicated region
        $region53: #{tpu_custom_call.1} parent=51 // pred_check
          %p332 = pneg %p48
        $region54: #{tpu_custom_call.1} parent=51 // pred_check_branch
          %334 = sbr.rel (%p332) target = $region56
        $region55: #{tpu_custom_call.1} parent=51 // pred_region
          %335 = dma.done %s328, 512
        $region56: #{tpu_custom_call.1} parent=51 // pred_fallthru
          _
        // Predicated region
        $region57: #{tpu_custom_call.1} parent=51 // pred_check
          %p336 = pneg %p69
        $region58: #{tpu_custom_call.1} parent=51 // pred_check_branch
          %338 = sbr.rel (%p336) target = $region60
        $region59: #{tpu_custom_call.1} parent=51 // pred_region
          %339 = dma.done [#allocation8], 128
        $region60: #{tpu_custom_call.1} parent=51 // pred_fallthru
          _
        // Predicated region
        $region61: #{tpu_custom_call.1} parent=51 // pred_check
          %p340 = pneg %p111
        $region62: #{tpu_custom_call.1} parent=51 // pred_check_branch
          %342 = sbr.rel (%p340) target = $region64
        $region63: #{tpu_custom_call.1} parent=51 // pred_region
          %343 = dma.done [#allocation8], 128
        $region64: #{tpu_custom_call.1} parent=51 // pred_fallthru
          _
        // Predicated region
        $region65: #{tpu_custom_call.1} parent=51 // pred_check
          %p344 = pneg %p153
        $region66: #{tpu_custom_call.1} parent=51 // pred_check_branch
          %346 = sbr.rel (%p344) target = $region68
        $region67: #{tpu_custom_call.1} parent=51 // pred_region
          %347 = dma.done [#allocation11], 1024
        $region68: #{tpu_custom_call.1} parent=51 // pred_fallthru
          _
        // Predicated region
        $region69: #{tpu_custom_call.1} parent=51 // pred_check
          %p348 = pneg %p195
        $region70: #{tpu_custom_call.1} parent=51 // pred_check_branch
          %350 = sbr.rel (%p348) target = $region72
        $region71: #{tpu_custom_call.1} parent=51 // pred_region
          %351 = dma.done [#allocation11], 128
        $region72: #{tpu_custom_call.1} parent=51 // pred_fallthru
          _
        %s352 = sand.u32 %s35, 1
        %s353 = scalar_lea.sflag [#allocation5], %s352
        %s354 = sand.u32 %s35, 1
        %s355 = smul.addr %s354, 32
        %s356 = scalar_lea.vmem [#allocation4], %s355
        %p357 = pneg %p48
        %p358 = pneg %p45
        %p359 = pneg %p69
        %p360 = pneg %p66
        %p361 = pneg %p90
        %p362 = pneg %p87
        %p363 = pneg %p111
        %p364 = pneg %p108
        %p365 = pneg %p132
        %p366 = pneg %p129
        %p367 = pneg %p153
        %p368 = pneg %p150
        %p369 = pneg %p174
        %p370 = pneg %p171
        %p371 = pneg %p195
        %p372 = pneg %p192
        %p373 = pneg %p221
        %p374 = pneg %p218
        %s375 = sand.u32 %s208, 1
        %s376 = scalar_lea.sflag [#allocation6], %s375
        %s377 = sand.u32 %s208, 1
        %s378 = smul.addr %s377, 64
        %s379 = scalar_lea.vmem [#allocation13], %s378
        %s380 = smul.u32 4, %s27
        %s381 = smul.u32 4, %s27
        %v383 = vld [vmem:[%s331] sm:$0xff]
        %v384 = vld [vmem:[%s331 + $0x8] sm:$0xff]
        %v385 = vld [vmem:[%s331 + $0x10] sm:$0xff]
        %v386 = vld [vmem:[%s331 + $0x18] sm:$0xff]
        %v387 = vld [vmem:[%s4] sm:$0xff]
        %v388 = vld [vmem:[%s4 + $0x8] sm:$0xff]
        %v389 = vld [vmem:[%s6] sm:$0xff]
        %v390 = vld [vmem:[%s6 + $0x8] sm:$0xff]
        %v391 = vld [vmem:[#allocation12] sm:$0xff]
        %v392 = vld [vmem:[#allocation7] sm:$0xf]
        %v393 = vld [vmem:[#allocation7 + $0x4] sm:$0xf]
        %395 = vset.pattern.permute.xlu0 0
        %396 = vperm.xlu0 %395, %v387
        %v397 = vpop.permute.xlu0 %396
        %400 = vset.pattern.permute.xlu0 0
        %401 = vperm.xlu0 %400, %v388
        %v402 = vpop.permute.xlu0 %401
        %v406 = vunpack.c.l.b16 %v392
        %v407 = vunpack.c.l.b16 %v393
        %v408 = vpack.c.b16 %v407, %v406
        %v413 = vunpack.c.l.b16 %v383
        %v414 = vunpack.c.h.b16 %v383
        %v415 = vunpack.c.l.b16 %v384
        %v416 = vunpack.c.h.b16 %v384
        %v417 = vunpack.c.l.b16 %v385
        %v418 = vunpack.c.h.b16 %v385
        %v419 = vunpack.c.l.b16 %v386
        %v420 = vunpack.c.h.b16 %v386
        %v421 = vpack.c.b16 %v417, %v413
        %v422 = vpack.c.b16 %v418, %v414
        %v423 = vpack.c.b16 %v419, %v415
        %v424 = vpack.c.b16 %v420, %v416
        %vm429 = vcmask 130048
        %v431 = vsel %vm429, %v408, 0
        %433 = vmatprep.subr.bf16.mxu0 0
        %434 = vmatpush1.bf16.msra.mxu0 0
        %435 = vmatprep.subr.bf16.mxu0 0
        %436 = vmatpush1.bf16.msra.mxu0 0
        %437 = vmatprep.subr.bf16.mxu0 0
        %438 = vmatpush1.bf16.msra.mxu0 0
        %439 = vmatprep.subr.bf16.mxu0 0
        %440 = vmatpush1.bf16.msra.mxu0 0
        %441 = vmatprep.subr.bf16.mxu0 0
        %442 = vmatpush1.bf16.msra.mxu0 0
        %443 = vmatprep.subr.bf16.mxu0 0
        %444 = vmatpush1.bf16.msra.mxu0 0
        %445 = vmatprep.subr.bf16.mxu0 0
        %446 = vmatpush1.bf16.msra.mxu0 0
        %447 = vmatprep.subr.bf16.mxu0 %v422
        %448 = vmatpush1.bf16.msra.mxu0 %v421
        %449 = vmatprep.subr.bf16.mxu0 0
        %450 = vmatpush2.bf16.msra.mxu0 0
        %451 = vmatprep.subr.bf16.mxu0 0
        %452 = vmatpush2.bf16.msra.mxu0 0
        %453 = vmatprep.subr.bf16.mxu0 0
        %454 = vmatpush2.bf16.msra.mxu0 0
        %455 = vmatprep.subr.bf16.mxu0 0
        %456 = vmatpush2.bf16.msra.mxu0 0
        %457 = vmatprep.subr.bf16.mxu0 0
        %458 = vmatpush2.bf16.msra.mxu0 0
        %459 = vmatprep.subr.bf16.mxu0 0
        %460 = vmatpush2.bf16.msra.mxu0 0
        %461 = vmatprep.subr.bf16.mxu0 0
        %462 = vmatpush2.bf16.msra.mxu0 0
        %463 = vmatprep.subr.bf16.mxu0 0
        %464 = vmatpush2.bf16.msra.mxu0 0
        %465 = vmatprep.mubr.bf16.mxu0 0
        %466 = vmatmul.mubr.bf16.gmra.mxu0 %v431
        %v467 = vpop.f32.mrf.mxu0
        %v468 = vadd.f32 %v397, %v467
        %v469 = vpop.f32.mrf.mxu0
        %v470 = vadd.f32 %v397, %v469
        %v471 = vpop.f32.mrf.mxu0
        %v472 = vadd.f32 %v402, %v471
        %v473 = vpop.f32.mrf.mxu0
        %v474 = vadd.f32 %v402, %v473
        %475 = vdwg.mxu0
        %476 = vmatprep.subr.bf16.mxu0 0
        %477 = vmatpush1.bf16.msra.mxu0 0
        %478 = vmatprep.subr.bf16.mxu0 0
        %479 = vmatpush1.bf16.msra.mxu0 0
        %480 = vmatprep.subr.bf16.mxu0 0
        %481 = vmatpush1.bf16.msra.mxu0 0
        %482 = vmatprep.subr.bf16.mxu0 0
        %483 = vmatpush1.bf16.msra.mxu0 0
        %484 = vmatprep.subr.bf16.mxu0 0
        %485 = vmatpush1.bf16.msra.mxu0 0
        %486 = vmatprep.subr.bf16.mxu0 0
        %487 = vmatpush1.bf16.msra.mxu0 0
        %488 = vmatprep.subr.bf16.mxu0 0
        %489 = vmatpush1.bf16.msra.mxu0 0
        %490 = vmatprep.subr.bf16.mxu0 %v424
        %491 = vmatpush1.bf16.msra.mxu0 %v423
        %492 = vmatprep.subr.bf16.mxu0 0
        %493 = vmatpush2.bf16.msra.mxu0 0
        %494 = vmatprep.subr.bf16.mxu0 0
        %495 = vmatpush2.bf16.msra.mxu0 0
        %496 = vmatprep.subr.bf16.mxu0 0
        %497 = vmatpush2.bf16.msra.mxu0 0
        %498 = vmatprep.subr.bf16.mxu0 0
        %499 = vmatpush2.bf16.msra.mxu0 0
        %500 = vmatprep.subr.bf16.mxu0 0
        %501 = vmatpush2.bf16.msra.mxu0 0
        %502 = vmatprep.subr.bf16.mxu0 0
        %503 = vmatpush2.bf16.msra.mxu0 0
        %504 = vmatprep.subr.bf16.mxu0 0
        %505 = vmatpush2.bf16.msra.mxu0 0
        %506 = vmatprep.subr.bf16.mxu0 0
        %507 = vmatpush2.bf16.msra.mxu0 0
        %508 = vmatprep.mubr.bf16.mxu0 0
        %509 = vmatmul.mubr.bf16.gmra.mxu0 %v431
        %v510 = vpop.f32.mrf.mxu0
        %v511 = vadd.f32 %v397, %v510
        %v512 = vpop.f32.mrf.mxu0
        %v513 = vadd.f32 %v397, %v512
        %v514 = vpop.f32.mrf.mxu0
        %v515 = vadd.f32 %v402, %v514
        %v516 = vpop.f32.mrf.mxu0
        %v517 = vadd.f32 %v402, %v516
        %518 = vdwg.mxu0
        %v520 = vcombine.high %v391, %v391
        %v522 = vunpack.c.l.s4 1983009808
        %v523 = vunpack.c.0.s8 %v522
        %v524 = vlaneseq
        %v525 = vshrl.u32 %v524, 7
        %v526 = vsub.s32 %v523, %v525
        %v527 = vrot.slane %v391, %v526
        %v529 = vunpack.c.l.s4 1983009808
        %v530 = vunpack.c.0.s8 %v529
        %v531 = vlaneseq
        %v532 = vshrl.u32 %v531, 7
        %v533 = vsub.s32 %v530, %v532
        %v534 = vrot.slane %v520, %v533
        %v535 = vcombine.high %v527, %v527
        %v536 = vcombine.high %v534, %v534
        %541 = vmatprep.subr.mxu0 0.0
        %542 = vmatpush1.xpose.msra.mxu0 0.0
        %543 = vmatprep.subr.mxu0 0.0
        %544 = vmatpush1.xpose.msra.mxu0 0.0
        %545 = vmatprep.subr.mxu0 0.0
        %546 = vmatpush1.xpose.msra.mxu0 0.0
        %547 = vmatprep.subr.mxu0 0.0
        %548 = vmatpush1.xpose.msra.mxu0 0.0
        %549 = vmatprep.subr.mxu0 0.0
        %550 = vmatpush1.xpose.msra.mxu0 0.0
        %551 = vmatprep.subr.mxu0 0.0
        %552 = vmatpush1.xpose.msra.mxu0 0.0
        %553 = vmatprep.subr.mxu0 0.0
        %554 = vmatpush1.xpose.msra.mxu0 0.0
        %555 = vmatprep.subr.mxu0 0.0
        %556 = vmatpush1.xpose.msra.mxu0 0.0
        %557 = vmatprep.subr.mxu0 0.0
        %558 = vmatpush1.xpose.msra.mxu0 0.0
        %559 = vmatprep.subr.mxu0 0.0
        %560 = vmatpush1.xpose.msra.mxu0 0.0
        %561 = vmatprep.subr.mxu0 0.0
        %562 = vmatpush1.xpose.msra.mxu0 0.0
        %563 = vmatprep.subr.mxu0 0.0
        %564 = vmatpush1.xpose.msra.mxu0 0.0
        %565 = vmatprep.subr.mxu0 0.0
        %566 = vmatpush1.xpose.msra.mxu0 0.0
        %567 = vmatprep.subr.mxu0 0.0
        %568 = vmatpush1.xpose.msra.mxu0 0.0
        %569 = vmatprep.subr.mxu0 0.0
        %570 = vmatpush1.xpose.msra.mxu0 0.0
        %571 = vmatprep.subr.mxu0 %v535
        %572 = vmatpush1.xpose.msra.mxu0 %v527
        %573 = vmatprep.subr.mxu0 0.0
        %574 = vmatpush2.xpose.msra.mxu0 0.0
        %575 = vmatprep.subr.mxu0 0.0
        %576 = vmatpush2.xpose.msra.mxu0 0.0
        %577 = vmatprep.subr.mxu0 0.0
        %578 = vmatpush2.xpose.msra.mxu0 0.0
        %579 = vmatprep.subr.mxu0 0.0
        %580 = vmatpush2.xpose.msra.mxu0 0.0
        %581 = vmatprep.subr.mxu0 0.0
        %582 = vmatpush2.xpose.msra.mxu0 0.0
        %583 = vmatprep.subr.mxu0 0.0
        %584 = vmatpush2.xpose.msra.mxu0 0.0
        %585 = vmatprep.subr.mxu0 0.0
        %586 = vmatpush2.xpose.msra.mxu0 0.0
        %587 = vmatprep.subr.mxu0 0.0
        %588 = vmatpush2.xpose.msra.mxu0 0.0
        %589 = vmatprep.subr.mxu0 0.0
        %590 = vmatpush2.xpose.msra.mxu0 0.0
        %591 = vmatprep.subr.mxu0 0.0
        %592 = vmatpush2.xpose.msra.mxu0 0.0
        %593 = vmatprep.subr.mxu0 0.0
        %594 = vmatpush2.xpose.msra.mxu0 0.0
        %595 = vmatprep.subr.mxu0 0.0
        %596 = vmatpush2.xpose.msra.mxu0 0.0
        %597 = vmatprep.subr.mxu0 0.0
        %598 = vmatpush2.xpose.msra.mxu0 0.0
        %599 = vmatprep.subr.mxu0 0.0
        %600 = vmatpush2.xpose.msra.mxu0 0.0
        %601 = vmatprep.subr.mxu0 0.0
        %602 = vmatpush2.xpose.msra.mxu0 0.0
        %603 = vmatprep.subr.mxu0 0.0
        %604 = vmatpush2.xpose.msra.mxu0 0.0
        %605 = vmatprep.mubr.f32.mxu0 %v470
        %606 = vmatmul.mubr.f32.gmra.mxu0 %v468
        %v607 = vpop.f32.mrf.mxu0
        %v608 = vadd.f32 0.0, %v607
        %v609 = vpop.f32.mrf.mxu0
        %610 = vmatprep.mubr.f32.mxu0 %v474
        %611 = vmatmul.mubr.f32.gmra.mxu0 %v472
        %v612 = vpop.f32.mrf.mxu0
        %v613 = vadd.f32 0.0, %v612
        %v614 = vpop.f32.mrf.mxu0
        %615 = vdwg.mxu0
        %616 = vmatprep.subr.mxu0 0.0
        %617 = vmatpush1.xpose.msra.mxu0 0.0
        %618 = vmatprep.subr.mxu0 0.0
        %619 = vmatpush1.xpose.msra.mxu0 0.0
        %620 = vmatprep.subr.mxu0 0.0
        %621 = vmatpush1.xpose.msra.mxu0 0.0
        %622 = vmatprep.subr.mxu0 0.0
        %623 = vmatpush1.xpose.msra.mxu0 0.0
        %624 = vmatprep.subr.mxu0 0.0
        %625 = vmatpush1.xpose.msra.mxu0 0.0
        %626 = vmatprep.subr.mxu0 0.0
        %627 = vmatpush1.xpose.msra.mxu0 0.0
        %628 = vmatprep.subr.mxu0 0.0
        %629 = vmatpush1.xpose.msra.mxu0 0.0
        %630 = vmatprep.subr.mxu0 0.0
        %631 = vmatpush1.xpose.msra.mxu0 0.0
        %632 = vmatprep.subr.mxu0 0.0
        %633 = vmatpush1.xpose.msra.mxu0 0.0
        %634 = vmatprep.subr.mxu0 0.0
        %635 = vmatpush1.xpose.msra.mxu0 0.0
        %636 = vmatprep.subr.mxu0 0.0
        %637 = vmatpush1.xpose.msra.mxu0 0.0
        %638 = vmatprep.subr.mxu0 0.0
        %639 = vmatpush1.xpose.msra.mxu0 0.0
        %640 = vmatprep.subr.mxu0 0.0
        %641 = vmatpush1.xpose.msra.mxu0 0.0
        %642 = vmatprep.subr.mxu0 0.0
        %643 = vmatpush1.xpose.msra.mxu0 0.0
        %644 = vmatprep.subr.mxu0 0.0
        %645 = vmatpush1.xpose.msra.mxu0 0.0
        %646 = vmatprep.subr.mxu0 %v536
        %647 = vmatpush1.xpose.msra.mxu0 %v534
        %648 = vmatprep.subr.mxu0 0.0
        %649 = vmatpush2.xpose.msra.mxu0 0.0
        %650 = vmatprep.subr.mxu0 0.0
        %651 = vmatpush2.xpose.msra.mxu0 0.0
        %652 = vmatprep.subr.mxu0 0.0
        %653 = vmatpush2.xpose.msra.mxu0 0.0
        %654 = vmatprep.subr.mxu0 0.0
        %655 = vmatpush2.xpose.msra.mxu0 0.0
        %656 = vmatprep.subr.mxu0 0.0
        %657 = vmatpush2.xpose.msra.mxu0 0.0
        %658 = vmatprep.subr.mxu0 0.0
        %659 = vmatpush2.xpose.msra.mxu0 0.0
        %660 = vmatprep.subr.mxu0 0.0
        %661 = vmatpush2.xpose.msra.mxu0 0.0
        %662 = vmatprep.subr.mxu0 0.0
        %663 = vmatpush2.xpose.msra.mxu0 0.0
        %664 = vmatprep.subr.mxu0 0.0
        %665 = vmatpush2.xpose.msra.mxu0 0.0
        %666 = vmatprep.subr.mxu0 0.0
        %667 = vmatpush2.xpose.msra.mxu0 0.0
        %668 = vmatprep.subr.mxu0 0.0
        %669 = vmatpush2.xpose.msra.mxu0 0.0
        %670 = vmatprep.subr.mxu0 0.0
        %671 = vmatpush2.xpose.msra.mxu0 0.0
        %672 = vmatprep.subr.mxu0 0.0
        %673 = vmatpush2.xpose.msra.mxu0 0.0
        %674 = vmatprep.subr.mxu0 0.0
        %675 = vmatpush2.xpose.msra.mxu0 0.0
        %676 = vmatprep.subr.mxu0 0.0
        %677 = vmatpush2.xpose.msra.mxu0 0.0
        %678 = vmatprep.subr.mxu0 0.0
        %679 = vmatpush2.xpose.msra.mxu0 0.0
        %680 = vmatprep.mubr.f32.mxu0 %v513
        %681 = vmatmul.mubr.f32.gmra.mxu0 %v511
        %v682 = vpop.f32.mrf.mxu0
        %v683 = vadd.f32 %v608, %v682
        %v684 = vpop.f32.mrf.mxu0
        %685 = vmatprep.mubr.f32.mxu0 %v517
        %686 = vmatmul.mubr.f32.gmra.mxu0 %v515
        %v687 = vpop.f32.mrf.mxu0
        %v688 = vadd.f32 %v613, %v687
        %v689 = vpop.f32.mrf.mxu0
        %690 = vdwg.mxu0
        %v692 = vsel %vm429, %v389, 0
        %v695 = vsel %vm429, %v390, 0
        %697 = vmatprep.subr.mxu0 0.0
        %698 = vmatpush1.msra.mxu0 0.0
        %699 = vmatprep.subr.mxu0 0.0
        %700 = vmatpush1.msra.mxu0 0.0
        %701 = vmatprep.subr.mxu0 0.0
        %702 = vmatpush1.msra.mxu0 0.0
        %703 = vmatprep.subr.mxu0 0.0
        %704 = vmatpush1.msra.mxu0 0.0
        %705 = vmatprep.subr.mxu0 0.0
        %706 = vmatpush1.msra.mxu0 0.0
        %707 = vmatprep.subr.mxu0 0.0
        %708 = vmatpush1.msra.mxu0 0.0
        %709 = vmatprep.subr.mxu0 0.0
        %710 = vmatpush1.msra.mxu0 0.0
        %711 = vmatprep.subr.mxu0 0.0
        %712 = vmatpush1.msra.mxu0 0.0
        %713 = vmatprep.subr.mxu0 0.0
        %714 = vmatpush1.msra.mxu0 0.0
        %715 = vmatprep.subr.mxu0 0.0
        %716 = vmatpush1.msra.mxu0 0.0
        %717 = vmatprep.subr.mxu0 0.0
        %718 = vmatpush1.msra.mxu0 0.0
        %719 = vmatprep.subr.mxu0 0.0
        %720 = vmatpush1.msra.mxu0 0.0
        %721 = vmatprep.subr.mxu0 0.0
        %722 = vmatpush1.msra.mxu0 0.0
        %723 = vmatprep.subr.mxu0 0.0
        %724 = vmatpush1.msra.mxu0 0.0
        %725 = vmatprep.subr.mxu0 0.0
        %726 = vmatpush1.msra.mxu0 %v688
        %727 = vmatprep.subr.mxu0 0.0
        %728 = vmatpush1.msra.mxu0 %v683
        %729 = vmatprep.subr.mxu0 0.0
        %730 = vmatpush2.msra.mxu0 0.0
        %731 = vmatprep.subr.mxu0 0.0
        %732 = vmatpush2.msra.mxu0 0.0
        %733 = vmatprep.subr.mxu0 0.0
        %734 = vmatpush2.msra.mxu0 0.0
        %735 = vmatprep.subr.mxu0 0.0
        %736 = vmatpush2.msra.mxu0 0.0
        %737 = vmatprep.subr.mxu0 0.0
        %738 = vmatpush2.msra.mxu0 0.0
        %739 = vmatprep.subr.mxu0 0.0
        %740 = vmatpush2.msra.mxu0 0.0
        %741 = vmatprep.subr.mxu0 0.0
        %742 = vmatpush2.msra.mxu0 0.0
        %743 = vmatprep.subr.mxu0 0.0
        %744 = vmatpush2.msra.mxu0 0.0
        %745 = vmatprep.subr.mxu0 0.0
        %746 = vmatpush2.msra.mxu0 0.0
        %747 = vmatprep.subr.mxu0 0.0
        %748 = vmatpush2.msra.mxu0 0.0
        %749 = vmatprep.subr.mxu0 0.0
        %750 = vmatpush2.msra.mxu0 0.0
        %751 = vmatprep.subr.mxu0 0.0
        %752 = vmatpush2.msra.mxu0 0.0
        %753 = vmatprep.subr.mxu0 0.0
        %754 = vmatpush2.msra.mxu0 0.0
        %755 = vmatprep.subr.mxu0 0.0
        %756 = vmatpush2.msra.mxu0 0.0
        %757 = vmatprep.subr.mxu0 0.0
        %758 = vmatpush2.msra.mxu0 0.0
        %759 = vmatprep.subr.mxu0 0.0
        %760 = vmatpush2.msra.mxu0 0.0
        %761 = vmatprep.mubr.f32.mxu0 0.0
        %762 = vmatmul.mubr.f32.gmra.mxu0 %v692
        %v763 = vpop.f32.mrf.mxu0
        %v764 = vadd.f32 0.0, %v763
        %v765 = vpop.f32.mrf.mxu0
        %766 = vmatprep.mubr.f32.mxu0 0.0
        %767 = vmatmul.mubr.f32.gmra.mxu0 %v695
        %v768 = vpop.f32.mrf.mxu0
        %v769 = vadd.f32 0.0, %v768
        %v770 = vpop.f32.mrf.mxu0
        %771 = vdwg.mxu0
        %vm772 = vcmask 15360
        %v774 = vsel %vm772, %v764, 0
        %v777 = vsel %vm772, %v769, 0
        %vm779 = vcmask 1041408
        %v780 = vsel %vm779, %v527, 0
        %v782 = vsel %vm779, %v535, 0
        %v784 = vsel %vm779, %v534, 0
        %v786 = vsel %vm779, %v536, 0
        %788 = vmatprep.subr.mxu0 0.0
        %789 = vmatpush1.msra.mxu0 0.0
        %790 = vmatprep.subr.mxu0 0.0
        %791 = vmatpush1.msra.mxu0 0.0
        %792 = vmatprep.subr.mxu0 0.0
        %793 = vmatpush1.msra.mxu0 0.0
        %794 = vmatprep.subr.mxu0 0.0
        %795 = vmatpush1.msra.mxu0 0.0
        %796 = vmatprep.subr.mxu0 0.0
        %797 = vmatpush1.msra.mxu0 0.0
        %798 = vmatprep.subr.mxu0 0.0
        %799 = vmatpush1.msra.mxu0 0.0
        %800 = vmatprep.subr.mxu0 0.0
        %801 = vmatpush1.msra.mxu0 0.0
        %802 = vmatprep.subr.mxu0 0.0
        %803 = vmatpush1.msra.mxu0 0.0
        %804 = vmatprep.subr.mxu0 0.0
        %805 = vmatpush1.msra.mxu0 0.0
        %806 = vmatprep.subr.mxu0 0.0
        %807 = vmatpush1.msra.mxu0 0.0
        %808 = vmatprep.subr.mxu0 0.0
        %809 = vmatpush1.msra.mxu0 0.0
        %810 = vmatprep.subr.mxu0 0.0
        %811 = vmatpush1.msra.mxu0 0.0
        %812 = vmatprep.subr.mxu0 0.0
        %813 = vmatpush1.msra.mxu0 0.0
        %814 = vmatprep.subr.mxu0 0.0
        %815 = vmatpush1.msra.mxu0 0.0
        %816 = vmatprep.subr.mxu0 0.0
        %817 = vmatpush1.msra.mxu0 0.0
        %818 = vmatprep.subr.mxu0 %v782
        %819 = vmatpush1.msra.mxu0 %v780
        %820 = vmatprep.subr.mxu0 0.0
        %821 = vmatpush2.msra.mxu0 0.0
        %822 = vmatprep.subr.mxu0 0.0
        %823 = vmatpush2.msra.mxu0 0.0
        %824 = vmatprep.subr.mxu0 0.0
        %825 = vmatpush2.msra.mxu0 0.0
        %826 = vmatprep.subr.mxu0 0.0
        %827 = vmatpush2.msra.mxu0 0.0
        %828 = vmatprep.subr.mxu0 0.0
        %829 = vmatpush2.msra.mxu0 0.0
        %830 = vmatprep.subr.mxu0 0.0
        %831 = vmatpush2.msra.mxu0 0.0
        %832 = vmatprep.subr.mxu0 0.0
        %833 = vmatpush2.msra.mxu0 0.0
        %834 = vmatprep.subr.mxu0 0.0
        %835 = vmatpush2.msra.mxu0 0.0
        %836 = vmatprep.subr.mxu0 0.0
        %837 = vmatpush2.msra.mxu0 0.0
        %838 = vmatprep.subr.mxu0 0.0
        %839 = vmatpush2.msra.mxu0 0.0
        %840 = vmatprep.subr.mxu0 0.0
        %841 = vmatpush2.msra.mxu0 0.0
        %842 = vmatprep.subr.mxu0 0.0
        %843 = vmatpush2.msra.mxu0 0.0
        %844 = vmatprep.subr.mxu0 0.0
        %845 = vmatpush2.msra.mxu0 0.0
        %846 = vmatprep.subr.mxu0 0.0
        %847 = vmatpush2.msra.mxu0 0.0
        %848 = vmatprep.subr.mxu0 0.0
        %849 = vmatpush2.msra.mxu0 0.0
        %850 = vmatprep.subr.mxu0 0.0
        %851 = vmatpush2.msra.mxu0 0.0
        %852 = vmatprep.mubr.f32.mxu0 0.0
        %853 = vmatmul.mubr.f32.gmra.mxu0 %v774
        %v854 = vpop.f32.mrf.mxu0
        %v855 = vadd.f32 0.0, %v854
        %v856 = vpop.f32.mrf.mxu0
        %v857 = vadd.f32 0.0, %v856
        %858 = vmatprep.mubr.f32.mxu0 0.0
        %859 = vmatmul.mubr.f32.gmra.mxu0 %v777
        %v860 = vpop.f32.mrf.mxu0
        %v861 = vadd.f32 0.0, %v860
        %v862 = vpop.f32.mrf.mxu0
        %v863 = vadd.f32 0.0, %v862
        %864 = vdwg.mxu0
        %865 = vmatprep.subr.mxu0 0.0
        %866 = vmatpush1.msra.mxu0 0.0
        %867 = vmatprep.subr.mxu0 0.0
        %868 = vmatpush1.msra.mxu0 0.0
        %869 = vmatprep.subr.mxu0 0.0
        %870 = vmatpush1.msra.mxu0 0.0
        %871 = vmatprep.subr.mxu0 0.0
        %872 = vmatpush1.msra.mxu0 0.0
        %873 = vmatprep.subr.mxu0 0.0
        %874 = vmatpush1.msra.mxu0 0.0
        %875 = vmatprep.subr.mxu0 0.0
        %876 = vmatpush1.msra.mxu0 0.0
        %877 = vmatprep.subr.mxu0 0.0
        %878 = vmatpush1.msra.mxu0 0.0
        %879 = vmatprep.subr.mxu0 0.0
        %880 = vmatpush1.msra.mxu0 0.0
        %881 = vmatprep.subr.mxu0 0.0
        %882 = vmatpush1.msra.mxu0 0.0
        %883 = vmatprep.subr.mxu0 0.0
        %884 = vmatpush1.msra.mxu0 0.0
        %885 = vmatprep.subr.mxu0 0.0
        %886 = vmatpush1.msra.mxu0 0.0
        %887 = vmatprep.subr.mxu0 0.0
        %888 = vmatpush1.msra.mxu0 0.0
        %889 = vmatprep.subr.mxu0 0.0
        %890 = vmatpush1.msra.mxu0 0.0
        %891 = vmatprep.subr.mxu0 0.0
        %892 = vmatpush1.msra.mxu0 0.0
        %893 = vmatprep.subr.mxu0 0.0
        %894 = vmatpush1.msra.mxu0 0.0
        %895 = vmatprep.subr.mxu0 %v786
        %896 = vmatpush1.msra.mxu0 %v784
        %897 = vmatprep.subr.mxu0 0.0
        %898 = vmatpush2.msra.mxu0 0.0
        %899 = vmatprep.subr.mxu0 0.0
        %900 = vmatpush2.msra.mxu0 0.0
        %901 = vmatprep.subr.mxu0 0.0
        %902 = vmatpush2.msra.mxu0 0.0
        %903 = vmatprep.subr.mxu0 0.0
        %904 = vmatpush2.msra.mxu0 0.0
        %905 = vmatprep.subr.mxu0 0.0
        %906 = vmatpush2.msra.mxu0 0.0
        %907 = vmatprep.subr.mxu0 0.0
        %908 = vmatpush2.msra.mxu0 0.0
        %909 = vmatprep.subr.mxu0 0.0
        %910 = vmatpush2.msra.mxu0 0.0
        %911 = vmatprep.subr.mxu0 0.0
        %912 = vmatpush2.msra.mxu0 0.0
        %913 = vmatprep.subr.mxu0 0.0
        %914 = vmatpush2.msra.mxu0 0.0
        %915 = vmatprep.subr.mxu0 0.0
        %916 = vmatpush2.msra.mxu0 0.0
        %917 = vmatprep.subr.mxu0 0.0
        %918 = vmatpush2.msra.mxu0 0.0
        %919 = vmatprep.subr.mxu0 0.0
        %920 = vmatpush2.msra.mxu0 0.0
        %921 = vmatprep.subr.mxu0 0.0
        %922 = vmatpush2.msra.mxu0 0.0
        %923 = vmatprep.subr.mxu0 0.0
        %924 = vmatpush2.msra.mxu0 0.0
        %925 = vmatprep.subr.mxu0 0.0
        %926 = vmatpush2.msra.mxu0 0.0
        %927 = vmatprep.subr.mxu0 0.0
        %928 = vmatpush2.msra.mxu0 0.0
        %929 = vmatprep.mubr.f32.mxu0 0.0
        %930 = vmatmul.mubr.f32.gmra.mxu0 %v774
        %v931 = vpop.f32.mrf.mxu0
        %v932 = vadd.f32 0.0, %v931
        %v933 = vpop.f32.mrf.mxu0
        %v934 = vadd.f32 0.0, %v933
        %935 = vmatprep.mubr.f32.mxu0 0.0
        %936 = vmatmul.mubr.f32.gmra.mxu0 %v777
        %v937 = vpop.f32.mrf.mxu0
        %v938 = vadd.f32 0.0, %v937
        %v939 = vpop.f32.mrf.mxu0
        %v940 = vadd.f32 0.0, %v939
        %941 = vdwg.mxu0
        %v942 = vsub.f32 %v468, %v855
        %v943 = vsub.f32 %v470, %v857
        %v944 = vsub.f32 %v511, %v932
        %v945 = vsub.f32 %v513, %v934
        %v946 = vsub.f32 %v472, %v861
        %v947 = vsub.f32 %v474, %v863
        %v948 = vsub.f32 %v515, %v938
        %v949 = vsub.f32 %v517, %v940
        %v950 = vmul.f32 %v942, %v942
        %v951 = vmul.f32 %v943, %v943
        %v952 = vmul.f32 %v944, %v944
        %v953 = vmul.f32 %v945, %v945
        %v954 = vmul.f32 %v946, %v946
        %v955 = vmul.f32 %v947, %v947
        %v956 = vmul.f32 %v948, %v948
        %v957 = vmul.f32 %v949, %v949
        %958 = vmatprep.subr.mxu0 0.0
        %959 = vmatpush1.xpose.msra.mxu0 0.0
        %960 = vmatprep.subr.mxu0 0.0
        %961 = vmatpush1.xpose.msra.mxu0 0.0
        %962 = vmatprep.subr.mxu0 0.0
        %963 = vmatpush1.xpose.msra.mxu0 0.0
        %964 = vmatprep.subr.mxu0 0.0
        %965 = vmatpush1.xpose.msra.mxu0 0.0
        %966 = vmatprep.subr.mxu0 0.0
        %967 = vmatpush1.xpose.msra.mxu0 0.0
        %968 = vmatprep.subr.mxu0 0.0
        %969 = vmatpush1.xpose.msra.mxu0 0.0
        %970 = vmatprep.subr.mxu0 0.0
        %971 = vmatpush1.xpose.msra.mxu0 0.0
        %972 = vmatprep.subr.mxu0 0.0
        %973 = vmatpush1.xpose.msra.mxu0 0.0
        %974 = vmatprep.subr.mxu0 0.0
        %975 = vmatpush1.xpose.msra.mxu0 0.0
        %976 = vmatprep.subr.mxu0 0.0
        %977 = vmatpush1.xpose.msra.mxu0 0.0
        %978 = vmatprep.subr.mxu0 0.0
        %979 = vmatpush1.xpose.msra.mxu0 0.0
        %980 = vmatprep.subr.mxu0 0.0
        %981 = vmatpush1.xpose.msra.mxu0 0.0
        %982 = vmatprep.subr.mxu0 0.0
        %983 = vmatpush1.xpose.msra.mxu0 0.0
        %984 = vmatprep.subr.mxu0 0.0
        %985 = vmatpush1.xpose.msra.mxu0 0.0
        %986 = vmatprep.subr.mxu0 0.0
        %987 = vmatpush1.xpose.msra.mxu0 0.0
        %988 = vmatprep.subr.mxu0 %v535
        %989 = vmatpush1.xpose.msra.mxu0 %v527
        %990 = vmatprep.subr.mxu0 0.0
        %991 = vmatpush2.xpose.msra.mxu0 0.0
        %992 = vmatprep.subr.mxu0 0.0
        %993 = vmatpush2.xpose.msra.mxu0 0.0
        %994 = vmatprep.subr.mxu0 0.0
        %995 = vmatpush2.xpose.msra.mxu0 0.0
        %996 = vmatprep.subr.mxu0 0.0
        %997 = vmatpush2.xpose.msra.mxu0 0.0
        %998 = vmatprep.subr.mxu0 0.0
        %999 = vmatpush2.xpose.msra.mxu0 0.0
        %1000 = vmatprep.subr.mxu0 0.0
        %1001 = vmatpush2.xpose.msra.mxu0 0.0
        %1002 = vmatprep.subr.mxu0 0.0
        %1003 = vmatpush2.xpose.msra.mxu0 0.0
        %1004 = vmatprep.subr.mxu0 0.0
        %1005 = vmatpush2.xpose.msra.mxu0 0.0
        %1006 = vmatprep.subr.mxu0 0.0
        %1007 = vmatpush2.xpose.msra.mxu0 0.0
        %1008 = vmatprep.subr.mxu0 0.0
        %1009 = vmatpush2.xpose.msra.mxu0 0.0
        %1010 = vmatprep.subr.mxu0 0.0
        %1011 = vmatpush2.xpose.msra.mxu0 0.0
        %1012 = vmatprep.subr.mxu0 0.0
        %1013 = vmatpush2.xpose.msra.mxu0 0.0
        %1014 = vmatprep.subr.mxu0 0.0
        %1015 = vmatpush2.xpose.msra.mxu0 0.0
        %1016 = vmatprep.subr.mxu0 0.0
        %1017 = vmatpush2.xpose.msra.mxu0 0.0
        %1018 = vmatprep.subr.mxu0 0.0
        %1019 = vmatpush2.xpose.msra.mxu0 0.0
        %1020 = vmatprep.subr.mxu0 0.0
        %1021 = vmatpush2.xpose.msra.mxu0 0.0
        %1022 = vmatprep.mubr.f32.mxu0 %v951
        %1023 = vmatmul.mubr.f32.gmra.mxu0 %v950
        %v1024 = vpop.f32.mrf.mxu0
        %v1025 = vadd.f32 0.0, %v1024
        %v1026 = vpop.f32.mrf.mxu0
        %1027 = vmatprep.mubr.f32.mxu0 %v955
        %1028 = vmatmul.mubr.f32.gmra.mxu0 %v954
        %v1029 = vpop.f32.mrf.mxu0
        %v1030 = vadd.f32 0.0, %v1029
        %v1031 = vpop.f32.mrf.mxu0
        %1032 = vdwg.mxu0
        %1033 = vmatprep.subr.mxu0 0.0
        %1034 = vmatpush1.xpose.msra.mxu0 0.0
        %1035 = vmatprep.subr.mxu0 0.0
        %1036 = vmatpush1.xpose.msra.mxu0 0.0
        %1037 = vmatprep.subr.mxu0 0.0
        %1038 = vmatpush1.xpose.msra.mxu0 0.0
        %1039 = vmatprep.subr.mxu0 0.0
        %1040 = vmatpush1.xpose.msra.mxu0 0.0
        %1041 = vmatprep.subr.mxu0 0.0
        %1042 = vmatpush1.xpose.msra.mxu0 0.0
        %1043 = vmatprep.subr.mxu0 0.0
        %1044 = vmatpush1.xpose.msra.mxu0 0.0
        %1045 = vmatprep.subr.mxu0 0.0
        %1046 = vmatpush1.xpose.msra.mxu0 0.0
        %1047 = vmatprep.subr.mxu0 0.0
        %1048 = vmatpush1.xpose.msra.mxu0 0.0
        %1049 = vmatprep.subr.mxu0 0.0
        %1050 = vmatpush1.xpose.msra.mxu0 0.0
        %1051 = vmatprep.subr.mxu0 0.0
        %1052 = vmatpush1.xpose.msra.mxu0 0.0
        %1053 = vmatprep.subr.mxu0 0.0
        %1054 = vmatpush1.xpose.msra.mxu0 0.0
        %1055 = vmatprep.subr.mxu0 0.0
        %1056 = vmatpush1.xpose.msra.mxu0 0.0
        %1057 = vmatprep.subr.mxu0 0.0
        %1058 = vmatpush1.xpose.msra.mxu0 0.0
        %1059 = vmatprep.subr.mxu0 0.0
        %1060 = vmatpush1.xpose.msra.mxu0 0.0
        %1061 = vmatprep.subr.mxu0 0.0
        %1062 = vmatpush1.xpose.msra.mxu0 0.0
        %1063 = vmatprep.subr.mxu0 %v536
        %1064 = vmatpush1.xpose.msra.mxu0 %v534
        %1065 = vmatprep.subr.mxu0 0.0
        %1066 = vmatpush2.xpose.msra.mxu0 0.0
        %1067 = vmatprep.subr.mxu0 0.0
        %1068 = vmatpush2.xpose.msra.mxu0 0.0
        %1069 = vmatprep.subr.mxu0 0.0
        %1070 = vmatpush2.xpose.msra.mxu0 0.0
        %1071 = vmatprep.subr.mxu0 0.0
        %1072 = vmatpush2.xpose.msra.mxu0 0.0
        %1073 = vmatprep.subr.mxu0 0.0
        %1074 = vmatpush2.xpose.msra.mxu0 0.0
        %1075 = vmatprep.subr.mxu0 0.0
        %1076 = vmatpush2.xpose.msra.mxu0 0.0
        %1077 = vmatprep.subr.mxu0 0.0
        %1078 = vmatpush2.xpose.msra.mxu0 0.0
        %1079 = vmatprep.subr.mxu0 0.0
        %1080 = vmatpush2.xpose.msra.mxu0 0.0
        %1081 = vmatprep.subr.mxu0 0.0
        %1082 = vmatpush2.xpose.msra.mxu0 0.0
        %1083 = vmatprep.subr.mxu0 0.0
        %1084 = vmatpush2.xpose.msra.mxu0 0.0
        %1085 = vmatprep.subr.mxu0 0.0
        %1086 = vmatpush2.xpose.msra.mxu0 0.0
        %1087 = vmatprep.subr.mxu0 0.0
        %1088 = vmatpush2.xpose.msra.mxu0 0.0
        %1089 = vmatprep.subr.mxu0 0.0
        %1090 = vmatpush2.xpose.msra.mxu0 0.0
        %1091 = vmatprep.subr.mxu0 0.0
        %1092 = vmatpush2.xpose.msra.mxu0 0.0
        %1093 = vmatprep.subr.mxu0 0.0
        %1094 = vmatpush2.xpose.msra.mxu0 0.0
        %1095 = vmatprep.subr.mxu0 0.0
        %1096 = vmatpush2.xpose.msra.mxu0 0.0
        %1097 = vmatprep.mubr.f32.mxu0 %v953
        %1098 = vmatmul.mubr.f32.gmra.mxu0 %v952
        %v1099 = vpop.f32.mrf.mxu0
        %v1100 = vadd.f32 %v1025, %v1099
        %v1101 = vpop.f32.mrf.mxu0
        %1102 = vmatprep.mubr.f32.mxu0 %v957
        %1103 = vmatmul.mubr.f32.gmra.mxu0 %v956
        %v1104 = vpop.f32.mrf.mxu0
        %v1105 = vadd.f32 %v1030, %v1104
        %v1106 = vpop.f32.mrf.mxu0
        %1107 = vdwg.mxu0
        %1108 = vmatprep.subr.mxu0 0.0
        %1109 = vmatpush1.msra.mxu0 0.0
        %1110 = vmatprep.subr.mxu0 0.0
        %1111 = vmatpush1.msra.mxu0 0.0
        %1112 = vmatprep.subr.mxu0 0.0
        %1113 = vmatpush1.msra.mxu0 0.0
        %1114 = vmatprep.subr.mxu0 0.0
        %1115 = vmatpush1.msra.mxu0 0.0
        %1116 = vmatprep.subr.mxu0 0.0
        %1117 = vmatpush1.msra.mxu0 0.0
        %1118 = vmatprep.subr.mxu0 0.0
        %1119 = vmatpush1.msra.mxu0 0.0
        %1120 = vmatprep.subr.mxu0 0.0
        %1121 = vmatpush1.msra.mxu0 0.0
        %1122 = vmatprep.subr.mxu0 0.0
        %1123 = vmatpush1.msra.mxu0 0.0
        %1124 = vmatprep.subr.mxu0 0.0
        %1125 = vmatpush1.msra.mxu0 0.0
        %1126 = vmatprep.subr.mxu0 0.0
        %1127 = vmatpush1.msra.mxu0 0.0
        %1128 = vmatprep.subr.mxu0 0.0
        %1129 = vmatpush1.msra.mxu0 0.0
        %1130 = vmatprep.subr.mxu0 0.0
        %1131 = vmatpush1.msra.mxu0 0.0
        %1132 = vmatprep.subr.mxu0 0.0
        %1133 = vmatpush1.msra.mxu0 0.0
        %1134 = vmatprep.subr.mxu0 0.0
        %1135 = vmatpush1.msra.mxu0 0.0
        %1136 = vmatprep.subr.mxu0 0.0
        %1137 = vmatpush1.msra.mxu0 %v1105
        %1138 = vmatprep.subr.mxu0 0.0
        %1139 = vmatpush1.msra.mxu0 %v1100
        %1140 = vmatprep.subr.mxu0 0.0
        %1141 = vmatpush2.msra.mxu0 0.0
        %1142 = vmatprep.subr.mxu0 0.0
        %1143 = vmatpush2.msra.mxu0 0.0
        %1144 = vmatprep.subr.mxu0 0.0
        %1145 = vmatpush2.msra.mxu0 0.0
        %1146 = vmatprep.subr.mxu0 0.0
        %1147 = vmatpush2.msra.mxu0 0.0
        %1148 = vmatprep.subr.mxu0 0.0
        %1149 = vmatpush2.msra.mxu0 0.0
        %1150 = vmatprep.subr.mxu0 0.0
        %1151 = vmatpush2.msra.mxu0 0.0
        %1152 = vmatprep.subr.mxu0 0.0
        %1153 = vmatpush2.msra.mxu0 0.0
        %1154 = vmatprep.subr.mxu0 0.0
        %1155 = vmatpush2.msra.mxu0 0.0
        %1156 = vmatprep.subr.mxu0 0.0
        %1157 = vmatpush2.msra.mxu0 0.0
        %1158 = vmatprep.subr.mxu0 0.0
        %1159 = vmatpush2.msra.mxu0 0.0
        %1160 = vmatprep.subr.mxu0 0.0
        %1161 = vmatpush2.msra.mxu0 0.0
        %1162 = vmatprep.subr.mxu0 0.0
        %1163 = vmatpush2.msra.mxu0 0.0
        %1164 = vmatprep.subr.mxu0 0.0
        %1165 = vmatpush2.msra.mxu0 0.0
        %1166 = vmatprep.subr.mxu0 0.0
        %1167 = vmatpush2.msra.mxu0 0.0
        %1168 = vmatprep.subr.mxu0 0.0
        %1169 = vmatpush2.msra.mxu0 0.0
        %1170 = vmatprep.subr.mxu0 0.0
        %1171 = vmatpush2.msra.mxu0 0.0
        %1172 = vmatprep.mubr.f32.mxu0 0.0
        %1173 = vmatmul.mubr.f32.gmra.mxu0 %v692
        %v1174 = vpop.f32.mrf.mxu0
        %v1175 = vadd.f32 0.0, %v1174
        %v1176 = vpop.f32.mrf.mxu0
        %1177 = vmatprep.mubr.f32.mxu0 0.0
        %1178 = vmatmul.mubr.f32.gmra.mxu0 %v695
        %v1179 = vpop.f32.mrf.mxu0
        %v1180 = vadd.f32 0.0, %v1179
        %v1181 = vpop.f32.mrf.mxu0
        %1182 = vdwg.mxu0
        %v1184 = vsel %vm772, %v1175, 0
        %v1187 = vsel %vm772, %v1180, 0
        %1189 = vmatprep.subr.mxu0 0.0
        %1190 = vmatpush1.msra.mxu0 0.0
        %1191 = vmatprep.subr.mxu0 0.0
        %1192 = vmatpush1.msra.mxu0 0.0
        %1193 = vmatprep.subr.mxu0 0.0
        %1194 = vmatpush1.msra.mxu0 0.0
        %1195 = vmatprep.subr.mxu0 0.0
        %1196 = vmatpush1.msra.mxu0 0.0
        %1197 = vmatprep.subr.mxu0 0.0
        %1198 = vmatpush1.msra.mxu0 0.0
        %1199 = vmatprep.subr.mxu0 0.0
        %1200 = vmatpush1.msra.mxu0 0.0
        %1201 = vmatprep.subr.mxu0 0.0
        %1202 = vmatpush1.msra.mxu0 0.0
        %1203 = vmatprep.subr.mxu0 0.0
        %1204 = vmatpush1.msra.mxu0 0.0
        %1205 = vmatprep.subr.mxu0 0.0
        %1206 = vmatpush1.msra.mxu0 0.0
        %1207 = vmatprep.subr.mxu0 0.0
        %1208 = vmatpush1.msra.mxu0 0.0
        %1209 = vmatprep.subr.mxu0 0.0
        %1210 = vmatpush1.msra.mxu0 0.0
        %1211 = vmatprep.subr.mxu0 0.0
        %1212 = vmatpush1.msra.mxu0 0.0
        %1213 = vmatprep.subr.mxu0 0.0
        %1214 = vmatpush1.msra.mxu0 0.0
        %1215 = vmatprep.subr.mxu0 0.0
        %1216 = vmatpush1.msra.mxu0 0.0
        %1217 = vmatprep.subr.mxu0 0.0
        %1218 = vmatpush1.msra.mxu0 0.0
        %1219 = vmatprep.subr.mxu0 %v782
        %1220 = vmatpush1.msra.mxu0 %v780
        %1221 = vmatprep.subr.mxu0 0.0
        %1222 = vmatpush2.msra.mxu0 0.0
        %1223 = vmatprep.subr.mxu0 0.0
        %1224 = vmatpush2.msra.mxu0 0.0
        %1225 = vmatprep.subr.mxu0 0.0
        %1226 = vmatpush2.msra.mxu0 0.0
        %1227 = vmatprep.subr.mxu0 0.0
        %1228 = vmatpush2.msra.mxu0 0.0
        %1229 = vmatprep.subr.mxu0 0.0
        %1230 = vmatpush2.msra.mxu0 0.0
        %1231 = vmatprep.subr.mxu0 0.0
        %1232 = vmatpush2.msra.mxu0 0.0
        %1233 = vmatprep.subr.mxu0 0.0
        %1234 = vmatpush2.msra.mxu0 0.0
        %1235 = vmatprep.subr.mxu0 0.0
        %1236 = vmatpush2.msra.mxu0 0.0
        %1237 = vmatprep.subr.mxu0 0.0
        %1238 = vmatpush2.msra.mxu0 0.0
        %1239 = vmatprep.subr.mxu0 0.0
        %1240 = vmatpush2.msra.mxu0 0.0
        %1241 = vmatprep.subr.mxu0 0.0
        %1242 = vmatpush2.msra.mxu0 0.0
        %1243 = vmatprep.subr.mxu0 0.0
        %1244 = vmatpush2.msra.mxu0 0.0
        %1245 = vmatprep.subr.mxu0 0.0
        %1246 = vmatpush2.msra.mxu0 0.0
        %1247 = vmatprep.subr.mxu0 0.0
        %1248 = vmatpush2.msra.mxu0 0.0
        %1249 = vmatprep.subr.mxu0 0.0
        %1250 = vmatpush2.msra.mxu0 0.0
        %1251 = vmatprep.subr.mxu0 0.0
        %1252 = vmatpush2.msra.mxu0 0.0
        %1253 = vmatprep.mubr.f32.mxu0 0.0
        %1254 = vmatmul.mubr.f32.gmra.mxu0 %v1184
        %v1255 = vpop.f32.mrf.mxu0
        %v1256 = vadd.f32 1e-05, %v1255
        %v1257 = vpop.f32.mrf.mxu0
        %v1258 = vadd.f32 1e-05, %v1257
        %1259 = vmatprep.mubr.f32.mxu0 0.0
        %1260 = vmatmul.mubr.f32.gmra.mxu0 %v1187
        %v1261 = vpop.f32.mrf.mxu0
        %v1262 = vadd.f32 1e-05, %v1261
        %v1263 = vpop.f32.mrf.mxu0
        %v1264 = vadd.f32 1e-05, %v1263
        %1265 = vdwg.mxu0
        %1266 = vmatprep.subr.mxu0 0.0
        %1267 = vmatpush1.msra.mxu0 0.0
        %1268 = vmatprep.subr.mxu0 0.0
        %1269 = vmatpush1.msra.mxu0 0.0
        %1270 = vmatprep.subr.mxu0 0.0
        %1271 = vmatpush1.msra.mxu0 0.0
        %1272 = vmatprep.subr.mxu0 0.0
        %1273 = vmatpush1.msra.mxu0 0.0
        %1274 = vmatprep.subr.mxu0 0.0
        %1275 = vmatpush1.msra.mxu0 0.0
        %1276 = vmatprep.subr.mxu0 0.0
        %1277 = vmatpush1.msra.mxu0 0.0
        %1278 = vmatprep.subr.mxu0 0.0
        %1279 = vmatpush1.msra.mxu0 0.0
        %1280 = vmatprep.subr.mxu0 0.0
        %1281 = vmatpush1.msra.mxu0 0.0
        %1282 = vmatprep.subr.mxu0 0.0
        %1283 = vmatpush1.msra.mxu0 0.0
        %1284 = vmatprep.subr.mxu0 0.0
        %1285 = vmatpush1.msra.mxu0 0.0
        %1286 = vmatprep.subr.mxu0 0.0
        %1287 = vmatpush1.msra.mxu0 0.0
        %1288 = vmatprep.subr.mxu0 0.0
        %1289 = vmatpush1.msra.mxu0 0.0
        %1290 = vmatprep.subr.mxu0 0.0
        %1291 = vmatpush1.msra.mxu0 0.0
        %1292 = vmatprep.subr.mxu0 0.0
        %1293 = vmatpush1.msra.mxu0 0.0
        %1294 = vmatprep.subr.mxu0 0.0
        %1295 = vmatpush1.msra.mxu0 0.0
        %1296 = vmatprep.subr.mxu0 %v786
        %1297 = vmatpush1.msra.mxu0 %v784
        %1298 = vmatprep.subr.mxu0 0.0
        %1299 = vmatpush2.msra.mxu0 0.0
        %1300 = vmatprep.subr.mxu0 0.0
        %1301 = vmatpush2.msra.mxu0 0.0
        %1302 = vmatprep.subr.mxu0 0.0
        %1303 = vmatpush2.msra.mxu0 0.0
        %1304 = vmatprep.subr.mxu0 0.0
        %1305 = vmatpush2.msra.mxu0 0.0
        %1306 = vmatprep.subr.mxu0 0.0
        %1307 = vmatpush2.msra.mxu0 0.0
        %1308 = vmatprep.subr.mxu0 0.0
        %1309 = vmatpush2.msra.mxu0 0.0
        %1310 = vmatprep.subr.mxu0 0.0
        %1311 = vmatpush2.msra.mxu0 0.0
        %1312 = vmatprep.subr.mxu0 0.0
        %1313 = vmatpush2.msra.mxu0 0.0
        %1314 = vmatprep.subr.mxu0 0.0
        %1315 = vmatpush2.msra.mxu0 0.0
        %1316 = vmatprep.subr.mxu0 0.0
        %1317 = vmatpush2.msra.mxu0 0.0
        %1318 = vmatprep.subr.mxu0 0.0
        %1319 = vmatpush2.msra.mxu0 0.0
        %1320 = vmatprep.subr.mxu0 0.0
        %1321 = vmatpush2.msra.mxu0 0.0
        %1322 = vmatprep.subr.mxu0 0.0
        %1323 = vmatpush2.msra.mxu0 0.0
        %1324 = vmatprep.subr.mxu0 0.0
        %1325 = vmatpush2.msra.mxu0 0.0
        %1326 = vmatprep.subr.mxu0 0.0
        %1327 = vmatpush2.msra.mxu0 0.0
        %1328 = vmatprep.subr.mxu0 0.0
        %1329 = vmatpush2.msra.mxu0 0.0
        %1330 = vmatprep.mubr.f32.mxu0 0.0
        %1331 = vmatmul.mubr.f32.gmra.mxu0 %v1184
        %v1332 = vpop.f32.mrf.mxu0
        %v1333 = vadd.f32 1e-05, %v1332
        %v1334 = vpop.f32.mrf.mxu0
        %v1335 = vadd.f32 1e-05, %v1334
        %1336 = vmatprep.mubr.f32.mxu0 0.0
        %1337 = vmatmul.mubr.f32.gmra.mxu0 %v1187
        %v1338 = vpop.f32.mrf.mxu0
        %v1339 = vadd.f32 1e-05, %v1338
        %v1340 = vpop.f32.mrf.mxu0
        %v1341 = vadd.f32 1e-05, %v1340
        %1342 = vdwg.mxu0
        %v1343 = vrsqrt.pop %v1256
        %v1344 = vrsqrt.pop %v1258
        %v1345 = vrsqrt.pop %v1333
        %v1346 = vrsqrt.pop %v1335
        %v1347 = vrsqrt.pop %v1262
        %v1348 = vrsqrt.pop %v1264
        %v1349 = vrsqrt.pop %v1339
        %v1350 = vrsqrt.pop %v1341
        %v1351 = vmul.f32 %v942, %v1343
        %v1352 = vmul.f32 %v943, %v1344
        %v1353 = vmul.f32 %v944, %v1345
        %v1354 = vmul.f32 %v945, %v1346
        %v1355 = vmul.f32 %v946, %v1347
        %v1356 = vmul.f32 %v947, %v1348
        %v1357 = vmul.f32 %v948, %v1349
        %v1358 = vmul.f32 %v949, %v1350
        %1359 = vset.pattern.permute.xlu0 1
        %1360 = vperm.xlu0 %1359, %v387
        %v1361 = vpop.permute.xlu0 %1360
        %1363 = vset.pattern.permute.xlu0 1
        %1364 = vperm.xlu0 %1363, %v388
        %v1365 = vpop.permute.xlu0 %1364
        %v1367 = vmul.f32 %v1351, %v1361
        %v1368 = vmul.f32 %v1352, %v1361
        %v1369 = vmul.f32 %v1353, %v1361
        %v1370 = vmul.f32 %v1354, %v1361
        %v1371 = vmul.f32 %v1355, %v1365
        %v1372 = vmul.f32 %v1356, %v1365
        %v1373 = vmul.f32 %v1357, %v1365
        %v1374 = vmul.f32 %v1358, %v1365
        %1375 = vset.pattern.permute.xlu0 2
        %1376 = vperm.xlu0 %1375, %v387
        %v1377 = vpop.permute.xlu0 %1376
        %1379 = vset.pattern.permute.xlu0 2
        %1380 = vperm.xlu0 %1379, %v388
        %v1381 = vpop.permute.xlu0 %1380
        %v1383 = vadd.f32 %v1367, %v1377
        %v1384 = vadd.f32 %v1368, %v1377
        %v1385 = vadd.f32 %v1369, %v1377
        %v1386 = vadd.f32 %v1370, %v1377
        %v1387 = vadd.f32 %v1371, %v1381
        %v1388 = vadd.f32 %v1372, %v1381
        %v1389 = vadd.f32 %v1373, %v1381
        %v1390 = vadd.f32 %v1374, %v1381
        %vm1391 = vcmp.gt.f32.partialorder %v1383, 0.0
        %vm1392 = vcmp.gt.f32.partialorder %v1384, 0.0
        %vm1393 = vcmp.gt.f32.partialorder %v1385, 0.0
        %vm1394 = vcmp.gt.f32.partialorder %v1386, 0.0
        %vm1395 = vcmp.gt.f32.partialorder %v1387, 0.0
        %vm1396 = vcmp.gt.f32.partialorder %v1388, 0.0
        %vm1397 = vcmp.gt.f32.partialorder %v1389, 0.0
        %vm1398 = vcmp.gt.f32.partialorder %v1390, 0.0
        %v1399 = vmul.f32 %v1383, 0.05
        %v1400 = vmul.f32 %v1384, 0.05
        %v1401 = vmul.f32 %v1385, 0.05
        %v1402 = vmul.f32 %v1386, 0.05
        %v1403 = vmul.f32 %v1387, 0.05
        %v1404 = vmul.f32 %v1388, 0.05
        %v1405 = vmul.f32 %v1389, 0.05
        %v1406 = vmul.f32 %v1390, 0.05
        %v1407 = vsel %vm1391, %v1383, %v1399
        %v1408 = vsel %vm1392, %v1384, %v1400
        %v1409 = vsel %vm1393, %v1385, %v1401
        %v1410 = vsel %vm1394, %v1386, %v1402
        %v1411 = vsel %vm1395, %v1387, %v1403
        %v1412 = vsel %vm1396, %v1388, %v1404
        %v1413 = vsel %vm1397, %v1389, %v1405
        %v1414 = vsel %vm1398, %v1390, %v1406
        %1415 = vrot.lane.b32.xlu0 %v1407, 34
        %v1416 = vpop.permute.xlu0 %1415
        %1417 = vrot.lane.b32.xlu0 %v1411, 34
        %v1418 = vpop.permute.xlu0 %1417
        %1419 = vrot.lane.b32.xlu0 %v1408, 34
        %v1420 = vpop.permute.xlu0 %1419
        %1421 = vrot.lane.b32.xlu0 %v1412, 34
        %v1422 = vpop.permute.xlu0 %1421
        %1423 = vrot.lane.b32.xlu0 %v1409, 34
        %v1424 = vpop.permute.xlu0 %1423
        %1425 = vrot.lane.b32.xlu0 %v1413, 34
        %v1426 = vpop.permute.xlu0 %1425
        %1427 = vrot.lane.b32.xlu0 %v1410, 34
        %v1428 = vpop.permute.xlu0 %1427
        %1429 = vrot.lane.b32.xlu0 %v1414, 34
        %v1430 = vpop.permute.xlu0 %1429
        %v1431 = vlaneseq
        %v1432 = vand.u32 %v1431, 127
        %vm1433 = vcmp.lt.s32.totalorder %v1432, 34
        %v1434 = vsel %vm1433, %v1424, %v1428
        %v1435 = vsel %vm1433, %v1426, %v1430
        %v1436 = vsel %vm1433, %v1420, %v1424
        %v1437 = vsel %vm1433, %v1422, %v1426
        %v1438 = vsel %vm1433, %v1416, %v1420
        %v1439 = vsel %vm1433, %v1418, %v1422
        %v1440 = vsel %vm1433, %v1428, %v1416
        %v1441 = vsel %vm1433, %v1430, %v1418
        %v1442 = vld [vmem:[#allocation10] ss:$8 sm:$0xf]
        %v1444 = vlaneseq
        %v1445 = vshrl.u32 %v1444, 7
        %v1446 = vsub.s32 0, %v1445
        %v1447 = vrot.slane %v1442, %v1446
        %v1448 = vlaneseq
        %v1449 = vshrl.u32 %v1448, 7
        %v1450 = vsub.s32 1, %v1449
        %v1451 = vrot.slane %v1442, %v1450
        %v1452 = vlaneseq
        %v1453 = vshrl.u32 %v1452, 7
        %v1454 = vsub.s32 2, %v1453
        %v1455 = vrot.slane %v1442, %v1454
        %v1456 = vlaneseq
        %v1457 = vshrl.u32 %v1456, 7
        %v1458 = vsub.s32 3, %v1457
        %v1459 = vrot.slane %v1442, %v1458
        %v1464 = vmul.f32 %v1440, %v1447
        %v1465 = vmul.f32 %v1438, %v1451
        %v1466 = vmul.f32 %v1436, %v1455
        %v1467 = vmul.f32 %v1434, %v1459
        %v1468 = vmul.f32 %v1441, %v1447
        %v1469 = vmul.f32 %v1439, %v1451
        %v1470 = vmul.f32 %v1437, %v1455
        %v1471 = vmul.f32 %v1435, %v1459
        %1472 = vst [vmem:[#allocation2] sm:$0xff] %v1464
        %1473 = vst [vmem:[#allocation2 + $0x8] sm:$0xff] %v1465
        %1474 = vst [vmem:[#allocation2 + $0x10] sm:$0xff] %v1466
        %1475 = vst [vmem:[#allocation2 + $0x18] sm:$0xff] %v1467
        %1476 = vst [vmem:[#allocation2 + $0x120] sm:$0xff] %v1468
        %1477 = vst [vmem:[#allocation2 + $0x128] sm:$0xff] %v1469
        %1478 = vst [vmem:[#allocation2 + $0x130] sm:$0xff] %v1470
        %1479 = vst [vmem:[#allocation2 + $0x138] sm:$0xff] %v1471
        %1480 = vrot.lane.b32.xlu0 %v1407, 32
        %v1481 = vpop.permute.xlu0 %1480
        %1482 = vrot.lane.b32.xlu0 %v1411, 32
        %v1483 = vpop.permute.xlu0 %1482
        %1484 = vrot.lane.b32.xlu0 %v1408, 32
        %v1485 = vpop.permute.xlu0 %1484
        %1486 = vrot.lane.b32.xlu0 %v1412, 32
        %v1487 = vpop.permute.xlu0 %1486
        %1488 = vrot.lane.b32.xlu0 %v1409, 32
        %v1489 = vpop.permute.xlu0 %1488
        %1490 = vrot.lane.b32.xlu0 %v1413, 32
        %v1491 = vpop.permute.xlu0 %1490
        %1492 = vrot.lane.b32.xlu0 %v1410, 32
        %v1493 = vpop.permute.xlu0 %1492
        %1494 = vrot.lane.b32.xlu0 %v1414, 32
        %v1495 = vpop.permute.xlu0 %1494
        %vm1496 = vcmp.lt.s32.totalorder %v1432, 32
        %v1497 = vsel %vm1496, %v1489, %v1493
        %v1498 = vsel %vm1496, %v1491, %v1495
        %v1499 = vsel %vm1496, %v1485, %v1489
        %v1500 = vsel %vm1496, %v1487, %v1491
        %v1501 = vsel %vm1496, %v1481, %v1485
        %v1502 = vsel %vm1496, %v1483, %v1487
        %v1503 = vsel %vm1496, %v1493, %v1481
        %v1504 = vsel %vm1496, %v1495, %v1483
        %s1505 = scalar_lea.vmem [#allocation10], 1
        %v1506 = vld [vmem:[%s1505] ss:$8 sm:$0xf]
        %v1508 = vlaneseq
        %v1509 = vshrl.u32 %v1508, 7
        %v1510 = vsub.s32 0, %v1509
        %v1511 = vrot.slane %v1506, %v1510
        %v1512 = vlaneseq
        %v1513 = vshrl.u32 %v1512, 7
        %v1514 = vsub.s32 1, %v1513
        %v1515 = vrot.slane %v1506, %v1514
        %v1516 = vlaneseq
        %v1517 = vshrl.u32 %v1516, 7
        %v1518 = vsub.s32 2, %v1517
        %v1519 = vrot.slane %v1506, %v1518
        %v1520 = vlaneseq
        %v1521 = vshrl.u32 %v1520, 7
        %v1522 = vsub.s32 3, %v1521
        %v1523 = vrot.slane %v1506, %v1522
        %v1528 = vmul.f32 %v1503, %v1511
        %v1529 = vmul.f32 %v1501, %v1515
        %v1530 = vmul.f32 %v1499, %v1519
        %v1531 = vmul.f32 %v1497, %v1523
        %v1532 = vmul.f32 %v1504, %v1511
        %v1533 = vmul.f32 %v1502, %v1515
        %v1534 = vmul.f32 %v1500, %v1519
        %v1535 = vmul.f32 %v1498, %v1523
        %1536 = vst [vmem:[#allocation2 + $0x20] sm:$0xff] %v1528
        %1537 = vst [vmem:[#allocation2 + $0x28] sm:$0xff] %v1529
        %1538 = vst [vmem:[#allocation2 + $0x30] sm:$0xff] %v1530
        %1539 = vst [vmem:[#allocation2 + $0x38] sm:$0xff] %v1531
        %1540 = vst [vmem:[#allocation2 + $0x140] sm:$0xff] %v1532
        %1541 = vst [vmem:[#allocation2 + $0x148] sm:$0xff] %v1533
        %1542 = vst [vmem:[#allocation2 + $0x150] sm:$0xff] %v1534
        %1543 = vst [vmem:[#allocation2 + $0x158] sm:$0xff] %v1535
        %1544 = vrot.lane.b32.xlu0 %v1407, 30
        %v1545 = vpop.permute.xlu0 %1544
        %1546 = vrot.lane.b32.xlu0 %v1411, 30
        %v1547 = vpop.permute.xlu0 %1546
        %1548 = vrot.lane.b32.xlu0 %v1408, 30
        %v1549 = vpop.permute.xlu0 %1548
        %1550 = vrot.lane.b32.xlu0 %v1412, 30
        %v1551 = vpop.permute.xlu0 %1550
        %1552 = vrot.lane.b32.xlu0 %v1409, 30
        %v1553 = vpop.permute.xlu0 %1552
        %1554 = vrot.lane.b32.xlu0 %v1413, 30
        %v1555 = vpop.permute.xlu0 %1554
        %1556 = vrot.lane.b32.xlu0 %v1410, 30
        %v1557 = vpop.permute.xlu0 %1556
        %1558 = vrot.lane.b32.xlu0 %v1414, 30
        %v1559 = vpop.permute.xlu0 %1558
        %vm1560 = vcmp.lt.s32.totalorder %v1432, 30
        %v1561 = vsel %vm1560, %v1553, %v1557
        %v1562 = vsel %vm1560, %v1555, %v1559
        %v1563 = vsel %vm1560, %v1549, %v1553
        %v1564 = vsel %vm1560, %v1551, %v1555
        %v1565 = vsel %vm1560, %v1545, %v1549
        %v1566 = vsel %vm1560, %v1547, %v1551
        %v1567 = vsel %vm1560, %v1557, %v1545
        %v1568 = vsel %vm1560, %v1559, %v1547
        %s1569 = scalar_lea.vmem [#allocation10], 2
        %v1570 = vld [vmem:[%s1569] ss:$8 sm:$0xf]
        %v1572 = vlaneseq
        %v1573 = vshrl.u32 %v1572, 7
        %v1574 = vsub.s32 0, %v1573
        %v1575 = vrot.slane %v1570, %v1574
        %v1576 = vlaneseq
        %v1577 = vshrl.u32 %v1576, 7
        %v1578 = vsub.s32 1, %v1577
        %v1579 = vrot.slane %v1570, %v1578
        %v1580 = vlaneseq
        %v1581 = vshrl.u32 %v1580, 7
        %v1582 = vsub.s32 2, %v1581
        %v1583 = vrot.slane %v1570, %v1582
        %v1584 = vlaneseq
        %v1585 = vshrl.u32 %v1584, 7
        %v1586 = vsub.s32 3, %v1585
        %v1587 = vrot.slane %v1570, %v1586
        %v1592 = vmul.f32 %v1567, %v1575
        %v1593 = vmul.f32 %v1565, %v1579
        %v1594 = vmul.f32 %v1563, %v1583
        %v1595 = vmul.f32 %v1561, %v1587
        %v1596 = vmul.f32 %v1568, %v1575
        %v1597 = vmul.f32 %v1566, %v1579
        %v1598 = vmul.f32 %v1564, %v1583
        %v1599 = vmul.f32 %v1562, %v1587
        %1600 = vst [vmem:[#allocation2 + $0x40] sm:$0xff] %v1592
        %1601 = vst [vmem:[#allocation2 + $0x48] sm:$0xff] %v1593
        %1602 = vst [vmem:[#allocation2 + $0x50] sm:$0xff] %v1594
        %1603 = vst [vmem:[#allocation2 + $0x58] sm:$0xff] %v1595
        %1604 = vst [vmem:[#allocation2 + $0x160] sm:$0xff] %v1596
        %1605 = vst [vmem:[#allocation2 + $0x168] sm:$0xff] %v1597
        %1606 = vst [vmem:[#allocation2 + $0x170] sm:$0xff] %v1598
        %1607 = vst [vmem:[#allocation2 + $0x178] sm:$0xff] %v1599
        %1608 = vrot.lane.b32.xlu0 %v1407, 2
        %v1609 = vpop.permute.xlu0 %1608
        %1610 = vrot.lane.b32.xlu0 %v1411, 2
        %v1611 = vpop.permute.xlu0 %1610
        %1612 = vrot.lane.b32.xlu0 %v1408, 2
        %v1613 = vpop.permute.xlu0 %1612
        %1614 = vrot.lane.b32.xlu0 %v1412, 2
        %v1615 = vpop.permute.xlu0 %1614
        %1616 = vrot.lane.b32.xlu0 %v1409, 2
        %v1617 = vpop.permute.xlu0 %1616
        %1618 = vrot.lane.b32.xlu0 %v1413, 2
        %v1619 = vpop.permute.xlu0 %1618
        %1620 = vrot.lane.b32.xlu0 %v1410, 2
        %v1621 = vpop.permute.xlu0 %1620
        %1622 = vrot.lane.b32.xlu0 %v1414, 2
        %v1623 = vpop.permute.xlu0 %1622
        %vm1624 = vcmp.lt.s32.totalorder %v1432, 2
        %v1625 = vsel %vm1624, %v1617, %v1621
        %v1626 = vsel %vm1624, %v1619, %v1623
        %v1627 = vsel %vm1624, %v1613, %v1617
        %v1628 = vsel %vm1624, %v1615, %v1619
        %v1629 = vsel %vm1624, %v1609, %v1613
        %v1630 = vsel %vm1624, %v1611, %v1615
        %v1631 = vsel %vm1624, %v1621, %v1609
        %v1632 = vsel %vm1624, %v1623, %v1611
        %s1633 = scalar_lea.vmem [#allocation10], 3
        %v1634 = vld [vmem:[%s1633] ss:$8 sm:$0xf]
        %v1636 = vlaneseq
        %v1637 = vshrl.u32 %v1636, 7
        %v1638 = vsub.s32 0, %v1637
        %v1639 = vrot.slane %v1634, %v1638
        %v1640 = vlaneseq
        %v1641 = vshrl.u32 %v1640, 7
        %v1642 = vsub.s32 1, %v1641
        %v1643 = vrot.slane %v1634, %v1642
        %v1644 = vlaneseq
        %v1645 = vshrl.u32 %v1644, 7
        %v1646 = vsub.s32 2, %v1645
        %v1647 = vrot.slane %v1634, %v1646
        %v1648 = vlaneseq
        %v1649 = vshrl.u32 %v1648, 7
        %v1650 = vsub.s32 3, %v1649
        %v1651 = vrot.slane %v1634, %v1650
        %v1656 = vmul.f32 %v1631, %v1639
        %v1657 = vmul.f32 %v1629, %v1643
        %v1658 = vmul.f32 %v1627, %v1647
        %v1659 = vmul.f32 %v1625, %v1651
        %v1660 = vmul.f32 %v1632, %v1639
        %v1661 = vmul.f32 %v1630, %v1643
        %v1662 = vmul.f32 %v1628, %v1647
        %v1663 = vmul.f32 %v1626, %v1651
        %1664 = vst [vmem:[#allocation2 + $0x60] sm:$0xff] %v1656
        %1665 = vst [vmem:[#allocation2 + $0x68] sm:$0xff] %v1657
        %1666 = vst [vmem:[#allocation2 + $0x70] sm:$0xff] %v1658
        %1667 = vst [vmem:[#allocation2 + $0x78] sm:$0xff] %v1659
        %1668 = vst [vmem:[#allocation2 + $0x180] sm:$0xff] %v1660
        %1669 = vst [vmem:[#allocation2 + $0x188] sm:$0xff] %v1661
        %1670 = vst [vmem:[#allocation2 + $0x190] sm:$0xff] %v1662
        %1671 = vst [vmem:[#allocation2 + $0x198] sm:$0xff] %v1663
        %1672 = vst [vmem:[#allocation2 + $0x80] sm:$0xff] %v1407
        %1673 = vst [vmem:[#allocation2 + $0x88] sm:$0xff] %v1408
        %1674 = vst [vmem:[#allocation2 + $0x90] sm:$0xff] %v1409
        %1675 = vst [vmem:[#allocation2 + $0x98] sm:$0xff] %v1410
        %1676 = vst [vmem:[#allocation2 + $0x1a0] sm:$0xff] %v1411
        %1677 = vst [vmem:[#allocation2 + $0x1a8] sm:$0xff] %v1412
        %1678 = vst [vmem:[#allocation2 + $0x1b0] sm:$0xff] %v1413
        %1679 = vst [vmem:[#allocation2 + $0x1b8] sm:$0xff] %v1414
        %1680 = vrot.lane.b32.xlu0 %v1407, 126
        %v1681 = vpop.permute.xlu0 %1680
        %1682 = vrot.lane.b32.xlu0 %v1411, 126
        %v1683 = vpop.permute.xlu0 %1682
        %1684 = vrot.lane.b32.xlu0 %v1408, 126
        %v1685 = vpop.permute.xlu0 %1684
        %1686 = vrot.lane.b32.xlu0 %v1412, 126
        %v1687 = vpop.permute.xlu0 %1686
        %1688 = vrot.lane.b32.xlu0 %v1409, 126
        %v1689 = vpop.permute.xlu0 %1688
        %1690 = vrot.lane.b32.xlu0 %v1413, 126
        %v1691 = vpop.permute.xlu0 %1690
        %1692 = vrot.lane.b32.xlu0 %v1410, 126
        %v1693 = vpop.permute.xlu0 %1692
        %1694 = vrot.lane.b32.xlu0 %v1414, 126
        %v1695 = vpop.permute.xlu0 %1694
        %vm1696 = vcmp.lt.s32.totalorder %v1432, 126
        %v1697 = vsel %vm1696, %v1689, %v1693
        %v1698 = vsel %vm1696, %v1691, %v1695
        %v1699 = vsel %vm1696, %v1685, %v1689
        %v1700 = vsel %vm1696, %v1687, %v1691
        %v1701 = vsel %vm1696, %v1681, %v1685
        %v1702 = vsel %vm1696, %v1683, %v1687
        %v1703 = vsel %vm1696, %v1693, %v1681
        %v1704 = vsel %vm1696, %v1695, %v1683
        %s1705 = scalar_lea.vmem [#allocation10], 5
        %v1706 = vld [vmem:[%s1705] ss:$8 sm:$0xf]
        %v1708 = vlaneseq
        %v1709 = vshrl.u32 %v1708, 7
        %v1710 = vsub.s32 0, %v1709
        %v1711 = vrot.slane %v1706, %v1710
        %v1712 = vlaneseq
        %v1713 = vshrl.u32 %v1712, 7
        %v1714 = vsub.s32 1, %v1713
        %v1715 = vrot.slane %v1706, %v1714
        %v1716 = vlaneseq
        %v1717 = vshrl.u32 %v1716, 7
        %v1718 = vsub.s32 2, %v1717
        %v1719 = vrot.slane %v1706, %v1718
        %v1720 = vlaneseq
        %v1721 = vshrl.u32 %v1720, 7
        %v1722 = vsub.s32 3, %v1721
        %v1723 = vrot.slane %v1706, %v1722
        %v1728 = vmul.f32 %v1701, %v1711
        %v1729 = vmul.f32 %v1699, %v1715
        %v1730 = vmul.f32 %v1697, %v1719
        %v1731 = vmul.f32 %v1703, %v1723
        %v1732 = vmul.f32 %v1702, %v1711
        %v1733 = vmul.f32 %v1700, %v1715
        %v1734 = vmul.f32 %v1698, %v1719
        %v1735 = vmul.f32 %v1704, %v1723
        %1736 = vst [vmem:[#allocation2 + $0xa0] sm:$0xff] %v1728
        %1737 = vst [vmem:[#allocation2 + $0xa8] sm:$0xff] %v1729
        %1738 = vst [vmem:[#allocation2 + $0xb0] sm:$0xff] %v1730
        %1739 = vst [vmem:[#allocation2 + $0xb8] sm:$0xff] %v1731
        %1740 = vst [vmem:[#allocation2 + $0x1c0] sm:$0xff] %v1732
        %1741 = vst [vmem:[#allocation2 + $0x1c8] sm:$0xff] %v1733
        %1742 = vst [vmem:[#allocation2 + $0x1d0] sm:$0xff] %v1734
        %1743 = vst [vmem:[#allocation2 + $0x1d8] sm:$0xff] %v1735
        %1744 = vrot.lane.b32.xlu0 %v1407, 98
        %v1745 = vpop.permute.xlu0 %1744
        %1746 = vrot.lane.b32.xlu0 %v1411, 98
        %v1747 = vpop.permute.xlu0 %1746
        %1748 = vrot.lane.b32.xlu0 %v1408, 98
        %v1749 = vpop.permute.xlu0 %1748
        %1750 = vrot.lane.b32.xlu0 %v1412, 98
        %v1751 = vpop.permute.xlu0 %1750
        %1752 = vrot.lane.b32.xlu0 %v1409, 98
        %v1753 = vpop.permute.xlu0 %1752
        %1754 = vrot.lane.b32.xlu0 %v1413, 98
        %v1755 = vpop.permute.xlu0 %1754
        %1756 = vrot.lane.b32.xlu0 %v1410, 98
        %v1757 = vpop.permute.xlu0 %1756
        %1758 = vrot.lane.b32.xlu0 %v1414, 98
        %v1759 = vpop.permute.xlu0 %1758
        %vm1760 = vcmp.lt.s32.totalorder %v1432, 98
        %v1761 = vsel %vm1760, %v1753, %v1757
        %v1762 = vsel %vm1760, %v1755, %v1759
        %v1763 = vsel %vm1760, %v1749, %v1753
        %v1764 = vsel %vm1760, %v1751, %v1755
        %v1765 = vsel %vm1760, %v1745, %v1749
        %v1766 = vsel %vm1760, %v1747, %v1751
        %v1767 = vsel %vm1760, %v1757, %v1745
        %v1768 = vsel %vm1760, %v1759, %v1747
        %s1769 = scalar_lea.vmem [#allocation10], 6
        %v1770 = vld [vmem:[%s1769] ss:$8 sm:$0xf]
        %v1772 = vlaneseq
        %v1773 = vshrl.u32 %v1772, 7
        %v1774 = vsub.s32 0, %v1773
        %v1775 = vrot.slane %v1770, %v1774
        %v1776 = vlaneseq
        %v1777 = vshrl.u32 %v1776, 7
        %v1778 = vsub.s32 1, %v1777
        %v1779 = vrot.slane %v1770, %v1778
        %v1780 = vlaneseq
        %v1781 = vshrl.u32 %v1780, 7
        %v1782 = vsub.s32 2, %v1781
        %v1783 = vrot.slane %v1770, %v1782
        %v1784 = vlaneseq
        %v1785 = vshrl.u32 %v1784, 7
        %v1786 = vsub.s32 3, %v1785
        %v1787 = vrot.slane %v1770, %v1786
        %v1792 = vmul.f32 %v1765, %v1775
        %v1793 = vmul.f32 %v1763, %v1779
        %v1794 = vmul.f32 %v1761, %v1783
        %v1795 = vmul.f32 %v1767, %v1787
        %v1796 = vmul.f32 %v1766, %v1775
        %v1797 = vmul.f32 %v1764, %v1779
        %v1798 = vmul.f32 %v1762, %v1783
        %v1799 = vmul.f32 %v1768, %v1787
        %1800 = vst [vmem:[#allocation2 + $0xc0] sm:$0xff] %v1792
        %1801 = vst [vmem:[#allocation2 + $0xc8] sm:$0xff] %v1793
        %1802 = vst [vmem:[#allocation2 + $0xd0] sm:$0xff] %v1794
        %1803 = vst [vmem:[#allocation2 + $0xd8] sm:$0xff] %v1795
        %1804 = vst [vmem:[#allocation2 + $0x1e0] sm:$0xff] %v1796
        %1805 = vst [vmem:[#allocation2 + $0x1e8] sm:$0xff] %v1797
        %1806 = vst [vmem:[#allocation2 + $0x1f0] sm:$0xff] %v1798
        %1807 = vst [vmem:[#allocation2 + $0x1f8] sm:$0xff] %v1799
        %1808 = vrot.lane.b32.xlu0 %v1407, 96
        %v1809 = vpop.permute.xlu0 %1808
        %1810 = vrot.lane.b32.xlu0 %v1411, 96
        %v1811 = vpop.permute.xlu0 %1810
        %1812 = vrot.lane.b32.xlu0 %v1408, 96
        %v1813 = vpop.permute.xlu0 %1812
        %1814 = vrot.lane.b32.xlu0 %v1412, 96
        %v1815 = vpop.permute.xlu0 %1814
        %1816 = vrot.lane.b32.xlu0 %v1409, 96
        %v1817 = vpop.permute.xlu0 %1816
        %1818 = vrot.lane.b32.xlu0 %v1413, 96
        %v1819 = vpop.permute.xlu0 %1818
        %1820 = vrot.lane.b32.xlu0 %v1410, 96
        %v1821 = vpop.permute.xlu0 %1820
        %1822 = vrot.lane.b32.xlu0 %v1414, 96
        %v1823 = vpop.permute.xlu0 %1822
        %vm1824 = vcmp.lt.s32.totalorder %v1432, 96
        %v1825 = vsel %vm1824, %v1817, %v1821
        %v1826 = vsel %vm1824, %v1819, %v1823
        %v1827 = vsel %vm1824, %v1813, %v1817
        %v1828 = vsel %vm1824, %v1815, %v1819
        %v1829 = vsel %vm1824, %v1809, %v1813
        %v1830 = vsel %vm1824, %v1811, %v1815
        %v1831 = vsel %vm1824, %v1821, %v1809
        %v1832 = vsel %vm1824, %v1823, %v1811
        %s1833 = scalar_lea.vmem [#allocation10], 7
        %v1834 = vld [vmem:[%s1833] ss:$8 sm:$0xf]
        %v1836 = vlaneseq
        %v1837 = vshrl.u32 %v1836, 7
        %v1838 = vsub.s32 0, %v1837
        %v1839 = vrot.slane %v1834, %v1838
        %v1840 = vlaneseq
        %v1841 = vshrl.u32 %v1840, 7
        %v1842 = vsub.s32 1, %v1841
        %v1843 = vrot.slane %v1834, %v1842
        %v1844 = vlaneseq
        %v1845 = vshrl.u32 %v1844, 7
        %v1846 = vsub.s32 2, %v1845
        %v1847 = vrot.slane %v1834, %v1846
        %v1848 = vlaneseq
        %v1849 = vshrl.u32 %v1848, 7
        %v1850 = vsub.s32 3, %v1849
        %v1851 = vrot.slane %v1834, %v1850
        %v1856 = vmul.f32 %v1829, %v1839
        %v1857 = vmul.f32 %v1827, %v1843
        %v1858 = vmul.f32 %v1825, %v1847
        %v1859 = vmul.f32 %v1831, %v1851
        %v1860 = vmul.f32 %v1830, %v1839
        %v1861 = vmul.f32 %v1828, %v1843
        %v1862 = vmul.f32 %v1826, %v1847
        %v1863 = vmul.f32 %v1832, %v1851
        %1864 = vst [vmem:[#allocation2 + $0xe0] sm:$0xff] %v1856
        %1865 = vst [vmem:[#allocation2 + $0xe8] sm:$0xff] %v1857
        %1866 = vst [vmem:[#allocation2 + $0xf0] sm:$0xff] %v1858
        %1867 = vst [vmem:[#allocation2 + $0xf8] sm:$0xff] %v1859
        %1868 = vst [vmem:[#allocation2 + $0x200] sm:$0xff] %v1860
        %1869 = vst [vmem:[#allocation2 + $0x208] sm:$0xff] %v1861
        %1870 = vst [vmem:[#allocation2 + $0x210] sm:$0xff] %v1862
        %1871 = vst [vmem:[#allocation2 + $0x218] sm:$0xff] %v1863
        %1872 = vrot.lane.b32.xlu0 %v1407, 94
        %v1873 = vpop.permute.xlu0 %1872
        %1874 = vrot.lane.b32.xlu0 %v1411, 94
        %v1875 = vpop.permute.xlu0 %1874
        %1876 = vrot.lane.b32.xlu0 %v1408, 94
        %v1877 = vpop.permute.xlu0 %1876
        %1878 = vrot.lane.b32.xlu0 %v1412, 94
        %v1879 = vpop.permute.xlu0 %1878
        %1880 = vrot.lane.b32.xlu0 %v1409, 94
        %v1881 = vpop.permute.xlu0 %1880
        %1882 = vrot.lane.b32.xlu0 %v1413, 94
        %v1883 = vpop.permute.xlu0 %1882
        %1884 = vrot.lane.b32.xlu0 %v1410, 94
        %v1885 = vpop.permute.xlu0 %1884
        %1886 = vrot.lane.b32.xlu0 %v1414, 94
        %v1887 = vpop.permute.xlu0 %1886
        %vm1888 = vcmp.lt.s32.totalorder %v1432, 94
        %v1889 = vsel %vm1888, %v1881, %v1885
        %v1890 = vsel %vm1888, %v1883, %v1887
        %v1891 = vsel %vm1888, %v1877, %v1881
        %v1892 = vsel %vm1888, %v1879, %v1883
        %v1893 = vsel %vm1888, %v1873, %v1877
        %v1894 = vsel %vm1888, %v1875, %v1879
        %v1895 = vsel %vm1888, %v1885, %v1873
        %v1896 = vsel %vm1888, %v1887, %v1875
        %s1897 = scalar_lea.vmem [#allocation10], 32
        %v1898 = vld [vmem:[%s1897] ss:$8 sm:$0xf]
        %v1900 = vlaneseq
        %v1901 = vshrl.u32 %v1900, 7
        %v1902 = vsub.s32 0, %v1901
        %v1903 = vrot.slane %v1898, %v1902
        %v1904 = vlaneseq
        %v1905 = vshrl.u32 %v1904, 7
        %v1906 = vsub.s32 1, %v1905
        %v1907 = vrot.slane %v1898, %v1906
        %v1908 = vlaneseq
        %v1909 = vshrl.u32 %v1908, 7
        %v1910 = vsub.s32 2, %v1909
        %v1911 = vrot.slane %v1898, %v1910
        %v1912 = vlaneseq
        %v1913 = vshrl.u32 %v1912, 7
        %v1914 = vsub.s32 3, %v1913
        %v1915 = vrot.slane %v1898, %v1914
        %v1920 = vmul.f32 %v1893, %v1903
        %v1921 = vmul.f32 %v1891, %v1907
        %v1922 = vmul.f32 %v1889, %v1911
        %v1923 = vmul.f32 %v1895, %v1915
        %v1924 = vmul.f32 %v1894, %v1903
        %v1925 = vmul.f32 %v1892, %v1907
        %v1926 = vmul.f32 %v1890, %v1911
        %v1927 = vmul.f32 %v1896, %v1915
        %1928 = vst [vmem:[#allocation2 + $0x100] sm:$0xff] %v1920
        %1929 = vst [vmem:[#allocation2 + $0x108] sm:$0xff] %v1921
        %1930 = vst [vmem:[#allocation2 + $0x110] sm:$0xff] %v1922
        %1931 = vst [vmem:[#allocation2 + $0x118] sm:$0xff] %v1923
        %1932 = vst [vmem:[#allocation2 + $0x220] sm:$0xff] %v1924
        %1933 = vst [vmem:[#allocation2 + $0x228] sm:$0xff] %v1925
        %1934 = vst [vmem:[#allocation2 + $0x230] sm:$0xff] %v1926
        %1935 = vst [vmem:[#allocation2 + $0x238] sm:$0xff] %v1927
        %v1936 = vld [vmem:[%s2] sm:$0xff]
        %v1937 = vld [vmem:[#allocation2] sm:$0xff]
        %v1938 = vld [vmem:[#allocation2 + $0x8] sm:$0xff]
        %v1939 = vld [vmem:[#allocation2 + $0x10] sm:$0xff]
        %v1940 = vld [vmem:[#allocation2 + $0x18] sm:$0xff]
        %v1941 = vld [vmem:[#allocation2 + $0x20] sm:$0xff]
        %v1942 = vld [vmem:[#allocation2 + $0x28] sm:$0xff]
        %v1943 = vld [vmem:[#allocation2 + $0x30] sm:$0xff]
        %v1944 = vld [vmem:[#allocation2 + $0x38] sm:$0xff]
        %v1945 = vld [vmem:[#allocation2 + $0x40] sm:$0xff]
        %v1946 = vld [vmem:[#allocation2 + $0x48] sm:$0xff]
        %v1947 = vld [vmem:[#allocation2 + $0x50] sm:$0xff]
        %v1948 = vld [vmem:[#allocation2 + $0x58] sm:$0xff]
        %v1949 = vld [vmem:[#allocation2 + $0x60] sm:$0xff]
        %v1950 = vld [vmem:[#allocation2 + $0x68] sm:$0xff]
        %v1951 = vld [vmem:[#allocation2 + $0x70] sm:$0xff]
        %v1952 = vld [vmem:[#allocation2 + $0x78] sm:$0xff]
        %v1953 = vld [vmem:[#allocation2 + $0x80] sm:$0xff]
        %v1954 = vld [vmem:[#allocation2 + $0x88] sm:$0xff]
        %v1955 = vld [vmem:[#allocation2 + $0x90] sm:$0xff]
        %v1956 = vld [vmem:[#allocation2 + $0x98] sm:$0xff]
        %v1957 = vld [vmem:[#allocation2 + $0xa0] sm:$0xff]
        %v1958 = vld [vmem:[#allocation2 + $0xa8] sm:$0xff]
        %v1959 = vld [vmem:[#allocation2 + $0xb0] sm:$0xff]
        %v1960 = vld [vmem:[#allocation2 + $0xb8] sm:$0xff]
        %v1961 = vld [vmem:[#allocation2 + $0xc0] sm:$0xff]
        %v1962 = vld [vmem:[#allocation2 + $0xc8] sm:$0xff]
        %v1963 = vld [vmem:[#allocation2 + $0xd0] sm:$0xff]
        %v1964 = vld [vmem:[#allocation2 + $0xd8] sm:$0xff]
        %v1965 = vld [vmem:[#allocation2 + $0xe0] sm:$0xff]
        %v1966 = vld [vmem:[#allocation2 + $0xe8] sm:$0xff]
        %v1967 = vld [vmem:[#allocation2 + $0xf0] sm:$0xff]
        %v1968 = vld [vmem:[#allocation2 + $0xf8] sm:$0xff]
        %v1969 = vld [vmem:[#allocation2 + $0x100] sm:$0xff]
        %v1970 = vld [vmem:[#allocation2 + $0x108] sm:$0xff]
        %v1971 = vld [vmem:[#allocation2 + $0x110] sm:$0xff]
        %v1972 = vld [vmem:[#allocation2 + $0x118] sm:$0xff]
        %vm1973 = vcmask 588800
        %v1975 = vsel %vm1973, %v1936, 0
        %1977 = vmatprep.subr.mxu0 0.0
        %1978 = vmatpush1.msra.mxu0 0.0
        %1979 = vmatprep.subr.mxu0 0.0
        %1980 = vmatpush1.msra.mxu0 0.0
        %1981 = vmatprep.subr.mxu0 0.0
        %1982 = vmatpush1.msra.mxu0 0.0
        %1983 = vmatprep.subr.mxu0 0.0
        %1984 = vmatpush1.msra.mxu0 0.0
        %1985 = vmatprep.subr.mxu0 0.0
        %1986 = vmatpush1.msra.mxu0 0.0
        %1987 = vmatprep.subr.mxu0 0.0
        %1988 = vmatpush1.msra.mxu0 0.0
        %1989 = vmatprep.subr.mxu0 0.0
        %1990 = vmatpush1.msra.mxu0 0.0
        %1991 = vmatprep.subr.mxu0 %v1970
        %1992 = vmatpush1.msra.mxu0 %v1969
        %1993 = vmatprep.subr.mxu0 %v1966
        %1994 = vmatpush1.msra.mxu0 %v1965
        %1995 = vmatprep.subr.mxu0 %v1962
        %1996 = vmatpush1.msra.mxu0 %v1961
        %1997 = vmatprep.subr.mxu0 %v1958
        %1998 = vmatpush1.msra.mxu0 %v1957
        %1999 = vmatprep.subr.mxu0 %v1954
        %2000 = vmatpush1.msra.mxu0 %v1953
        %2001 = vmatprep.subr.mxu0 %v1950
        %2002 = vmatpush1.msra.mxu0 %v1949
        %2003 = vmatprep.subr.mxu0 %v1946
        %2004 = vmatpush1.msra.mxu0 %v1945
        %2005 = vmatprep.subr.mxu0 %v1942
        %2006 = vmatpush1.msra.mxu0 %v1941
        %2007 = vmatprep.subr.mxu0 %v1938
        %2008 = vmatpush1.msra.mxu0 %v1937
        %2009 = vmatprep.subr.mxu0 0.0
        %2010 = vmatpush2.msra.mxu0 0.0
        %2011 = vmatprep.subr.mxu0 0.0
        %2012 = vmatpush2.msra.mxu0 0.0
        %2013 = vmatprep.subr.mxu0 0.0
        %2014 = vmatpush2.msra.mxu0 0.0
        %2015 = vmatprep.subr.mxu0 0.0
        %2016 = vmatpush2.msra.mxu0 0.0
        %2017 = vmatprep.subr.mxu0 0.0
        %2018 = vmatpush2.msra.mxu0 0.0
        %2019 = vmatprep.subr.mxu0 0.0
        %2020 = vmatpush2.msra.mxu0 0.0
        %2021 = vmatprep.subr.mxu0 0.0
        %2022 = vmatpush2.msra.mxu0 0.0
        %2023 = vmatprep.subr.mxu0 0.0
        %2024 = vmatpush2.msra.mxu0 0.0
        %2025 = vmatprep.subr.mxu0 0.0
        %2026 = vmatpush2.msra.mxu0 0.0
        %2027 = vmatprep.subr.mxu0 0.0
        %2028 = vmatpush2.msra.mxu0 0.0
        %2029 = vmatprep.subr.mxu0 0.0
        %2030 = vmatpush2.msra.mxu0 0.0
        %2031 = vmatprep.subr.mxu0 0.0
        %2032 = vmatpush2.msra.mxu0 0.0
        %2033 = vmatprep.subr.mxu0 0.0
        %2034 = vmatpush2.msra.mxu0 0.0
        %2035 = vmatprep.subr.mxu0 0.0
        %2036 = vmatpush2.msra.mxu0 0.0
        %2037 = vmatprep.subr.mxu0 0.0
        %2038 = vmatpush2.msra.mxu0 0.0
        %2039 = vmatprep.subr.mxu0 0.0
        %2040 = vmatpush2.msra.mxu0 0.0
        %2041 = vmatprep.mubr.f32.mxu0 0.0
        %2042 = vmatmul.mubr.f32.gmra.mxu0 %v1975
        %v2043 = vpop.f32.mrf.mxu0
        %v2044 = vadd.f32 0.0, %v2043
        %v2045 = vpop.f32.mrf.mxu0
        %v2046 = vadd.f32 0.0, %v2045
        %2047 = vdwg.mxu0
        %2048 = vmatprep.subr.mxu0 0.0
        %2049 = vmatpush1.msra.mxu0 0.0
        %2050 = vmatprep.subr.mxu0 0.0
        %2051 = vmatpush1.msra.mxu0 0.0
        %2052 = vmatprep.subr.mxu0 0.0
        %2053 = vmatpush1.msra.mxu0 0.0
        %2054 = vmatprep.subr.mxu0 0.0
        %2055 = vmatpush1.msra.mxu0 0.0
        %2056 = vmatprep.subr.mxu0 0.0
        %2057 = vmatpush1.msra.mxu0 0.0
        %2058 = vmatprep.subr.mxu0 0.0
        %2059 = vmatpush1.msra.mxu0 0.0
        %2060 = vmatprep.subr.mxu0 0.0
        %2061 = vmatpush1.msra.mxu0 0.0
        %2062 = vmatprep.subr.mxu0 %v1972
        %2063 = vmatpush1.msra.mxu0 %v1971
        %2064 = vmatprep.subr.mxu0 %v1968
        %2065 = vmatpush1.msra.mxu0 %v1967
        %2066 = vmatprep.subr.mxu0 %v1964
        %2067 = vmatpush1.msra.mxu0 %v1963
        %2068 = vmatprep.subr.mxu0 %v1960
        %2069 = vmatpush1.msra.mxu0 %v1959
        %2070 = vmatprep.subr.mxu0 %v1956
        %2071 = vmatpush1.msra.mxu0 %v1955
        %2072 = vmatprep.subr.mxu0 %v1952
        %2073 = vmatpush1.msra.mxu0 %v1951
        %2074 = vmatprep.subr.mxu0 %v1948
        %2075 = vmatpush1.msra.mxu0 %v1947
        %2076 = vmatprep.subr.mxu0 %v1944
        %2077 = vmatpush1.msra.mxu0 %v1943
        %2078 = vmatprep.subr.mxu0 %v1940
        %2079 = vmatpush1.msra.mxu0 %v1939
        %2080 = vmatprep.subr.mxu0 0.0
        %2081 = vmatpush2.msra.mxu0 0.0
        %2082 = vmatprep.subr.mxu0 0.0
        %2083 = vmatpush2.msra.mxu0 0.0
        %2084 = vmatprep.subr.mxu0 0.0
        %2085 = vmatpush2.msra.mxu0 0.0
        %2086 = vmatprep.subr.mxu0 0.0
        %2087 = vmatpush2.msra.mxu0 0.0
        %2088 = vmatprep.subr.mxu0 0.0
        %2089 = vmatpush2.msra.mxu0 0.0
        %2090 = vmatprep.subr.mxu0 0.0
        %2091 = vmatpush2.msra.mxu0 0.0
        %2092 = vmatprep.subr.mxu0 0.0
        %2093 = vmatpush2.msra.mxu0 0.0
        %2094 = vmatprep.subr.mxu0 0.0
        %2095 = vmatpush2.msra.mxu0 0.0
        %2096 = vmatprep.subr.mxu0 0.0
        %2097 = vmatpush2.msra.mxu0 0.0
        %2098 = vmatprep.subr.mxu0 0.0
        %2099 = vmatpush2.msra.mxu0 0.0
        %2100 = vmatprep.subr.mxu0 0.0
        %2101 = vmatpush2.msra.mxu0 0.0
        %2102 = vmatprep.subr.mxu0 0.0
        %2103 = vmatpush2.msra.mxu0 0.0
        %2104 = vmatprep.subr.mxu0 0.0
        %2105 = vmatpush2.msra.mxu0 0.0
        %2106 = vmatprep.subr.mxu0 0.0
        %2107 = vmatpush2.msra.mxu0 0.0
        %2108 = vmatprep.subr.mxu0 0.0
        %2109 = vmatpush2.msra.mxu0 0.0
        %2110 = vmatprep.subr.mxu0 0.0
        %2111 = vmatpush2.msra.mxu0 0.0
        %2112 = vmatprep.mubr.f32.mxu0 0.0
        %2113 = vmatmul.mubr.f32.gmra.mxu0 %v1975
        %v2114 = vpop.f32.mrf.mxu0
        %v2115 = vadd.f32 0.0, %v2114
        %v2116 = vpop.f32.mrf.mxu0
        %v2117 = vadd.f32 0.0, %v2116
        %2118 = vdwg.mxu0
        %2119 = vst [vmem:[#allocation3] sm:$0xff] %v2044
        %2120 = vst [vmem:[#allocation3 + $0x8] sm:$0xff] %v2046
        %2121 = vst [vmem:[#allocation3 + $0x10] sm:$0xff] %v2115
        %2122 = vst [vmem:[#allocation3 + $0x18] sm:$0xff] %v2117
        %s2123 = scalar_lea.vmem %s2, 8
        %v2124 = vld [vmem:[%s2123] sm:$0xff]
        %v2125 = vld [vmem:[#allocation2 + $0x120] sm:$0xff]
        %v2126 = vld [vmem:[#allocation2 + $0x128] sm:$0xff]
        %v2127 = vld [vmem:[#allocation2 + $0x130] sm:$0xff]
        %v2128 = vld [vmem:[#allocation2 + $0x138] sm:$0xff]
        %v2129 = vld [vmem:[#allocation2 + $0x140] sm:$0xff]
        %v2130 = vld [vmem:[#allocation2 + $0x148] sm:$0xff]
        %v2131 = vld [vmem:[#allocation2 + $0x150] sm:$0xff]
        %v2132 = vld [vmem:[#allocation2 + $0x158] sm:$0xff]
        %v2133 = vld [vmem:[#allocation2 + $0x160] sm:$0xff]
        %v2134 = vld [vmem:[#allocation2 + $0x168] sm:$0xff]
        %v2135 = vld [vmem:[#allocation2 + $0x170] sm:$0xff]
        %v2136 = vld [vmem:[#allocation2 + $0x178] sm:$0xff]
        %v2137 = vld [vmem:[#allocation2 + $0x180] sm:$0xff]
        %v2138 = vld [vmem:[#allocation2 + $0x188] sm:$0xff]
        %v2139 = vld [vmem:[#allocation2 + $0x190] sm:$0xff]
        %v2140 = vld [vmem:[#allocation2 + $0x198] sm:$0xff]
        %v2141 = vld [vmem:[#allocation2 + $0x1a0] sm:$0xff]
        %v2142 = vld [vmem:[#allocation2 + $0x1a8] sm:$0xff]
        %v2143 = vld [vmem:[#allocation2 + $0x1b0] sm:$0xff]
        %v2144 = vld [vmem:[#allocation2 + $0x1b8] sm:$0xff]
        %v2145 = vld [vmem:[#allocation2 + $0x1c0] sm:$0xff]
        %v2146 = vld [vmem:[#allocation2 + $0x1c8] sm:$0xff]
        %v2147 = vld [vmem:[#allocation2 + $0x1d0] sm:$0xff]
        %v2148 = vld [vmem:[#allocation2 + $0x1d8] sm:$0xff]
        %v2149 = vld [vmem:[#allocation2 + $0x1e0] sm:$0xff]
        %v2150 = vld [vmem:[#allocation2 + $0x1e8] sm:$0xff]
        %v2151 = vld [vmem:[#allocation2 + $0x1f0] sm:$0xff]
        %v2152 = vld [vmem:[#allocation2 + $0x1f8] sm:$0xff]
        %v2153 = vld [vmem:[#allocation2 + $0x200] sm:$0xff]
        %v2154 = vld [vmem:[#allocation2 + $0x208] sm:$0xff]
        %v2155 = vld [vmem:[#allocation2 + $0x210] sm:$0xff]
        %v2156 = vld [vmem:[#allocation2 + $0x218] sm:$0xff]
        %v2157 = vld [vmem:[#allocation2 + $0x220] sm:$0xff]
        %v2158 = vld [vmem:[#allocation2 + $0x228] sm:$0xff]
        %v2159 = vld [vmem:[#allocation2 + $0x230] sm:$0xff]
        %v2160 = vld [vmem:[#allocation2 + $0x238] sm:$0xff]
        %v2162 = vsel %vm1973, %v2124, 0
        %2164 = vmatprep.subr.mxu0 0.0
        %2165 = vmatpush1.msra.mxu0 0.0
        %2166 = vmatprep.subr.mxu0 0.0
        %2167 = vmatpush1.msra.mxu0 0.0
        %2168 = vmatprep.subr.mxu0 0.0
        %2169 = vmatpush1.msra.mxu0 0.0
        %2170 = vmatprep.subr.mxu0 0.0
        %2171 = vmatpush1.msra.mxu0 0.0
        %2172 = vmatprep.subr.mxu0 0.0
        %2173 = vmatpush1.msra.mxu0 0.0
        %2174 = vmatprep.subr.mxu0 0.0
        %2175 = vmatpush1.msra.mxu0 0.0
        %2176 = vmatprep.subr.mxu0 0.0
        %2177 = vmatpush1.msra.mxu0 0.0
        %2178 = vmatprep.subr.mxu0 %v2158
        %2179 = vmatpush1.msra.mxu0 %v2157
        %2180 = vmatprep.subr.mxu0 %v2154
        %2181 = vmatpush1.msra.mxu0 %v2153
        %2182 = vmatprep.subr.mxu0 %v2150
        %2183 = vmatpush1.msra.mxu0 %v2149
        %2184 = vmatprep.subr.mxu0 %v2146
        %2185 = vmatpush1.msra.mxu0 %v2145
        %2186 = vmatprep.subr.mxu0 %v2142
        %2187 = vmatpush1.msra.mxu0 %v2141
        %2188 = vmatprep.subr.mxu0 %v2138
        %2189 = vmatpush1.msra.mxu0 %v2137
        %2190 = vmatprep.subr.mxu0 %v2134
        %2191 = vmatpush1.msra.mxu0 %v2133
        %2192 = vmatprep.subr.mxu0 %v2130
        %2193 = vmatpush1.msra.mxu0 %v2129
        %2194 = vmatprep.subr.mxu0 %v2126
        %2195 = vmatpush1.msra.mxu0 %v2125
        %2196 = vmatprep.subr.mxu0 0.0
        %2197 = vmatpush2.msra.mxu0 0.0
        %2198 = vmatprep.subr.mxu0 0.0
        %2199 = vmatpush2.msra.mxu0 0.0
        %2200 = vmatprep.subr.mxu0 0.0
        %2201 = vmatpush2.msra.mxu0 0.0
        %2202 = vmatprep.subr.mxu0 0.0
        %2203 = vmatpush2.msra.mxu0 0.0
        %2204 = vmatprep.subr.mxu0 0.0
        %2205 = vmatpush2.msra.mxu0 0.0
        %2206 = vmatprep.subr.mxu0 0.0
        %2207 = vmatpush2.msra.mxu0 0.0
        %2208 = vmatprep.subr.mxu0 0.0
        %2209 = vmatpush2.msra.mxu0 0.0
        %2210 = vmatprep.subr.mxu0 0.0
        %2211 = vmatpush2.msra.mxu0 0.0
        %2212 = vmatprep.subr.mxu0 0.0
        %2213 = vmatpush2.msra.mxu0 0.0
        %2214 = vmatprep.subr.mxu0 0.0
        %2215 = vmatpush2.msra.mxu0 0.0
        %2216 = vmatprep.subr.mxu0 0.0
        %2217 = vmatpush2.msra.mxu0 0.0
        %2218 = vmatprep.subr.mxu0 0.0
        %2219 = vmatpush2.msra.mxu0 0.0
        %2220 = vmatprep.subr.mxu0 0.0
        %2221 = vmatpush2.msra.mxu0 0.0
        %2222 = vmatprep.subr.mxu0 0.0
        %2223 = vmatpush2.msra.mxu0 0.0
        %2224 = vmatprep.subr.mxu0 0.0
        %2225 = vmatpush2.msra.mxu0 0.0
        %2226 = vmatprep.subr.mxu0 0.0
        %2227 = vmatpush2.msra.mxu0 0.0
        %2228 = vmatprep.mubr.f32.mxu0 0.0
        %2229 = vmatmul.mubr.f32.gmra.mxu0 %v2162
        %v2230 = vpop.f32.mrf.mxu0
        %v2231 = vadd.f32 0.0, %v2230
        %v2232 = vpop.f32.mrf.mxu0
        %v2233 = vadd.f32 0.0, %v2232
        %2234 = vdwg.mxu0
        %2235 = vmatprep.subr.mxu0 0.0
        %2236 = vmatpush1.msra.mxu0 0.0
        %2237 = vmatprep.subr.mxu0 0.0
        %2238 = vmatpush1.msra.mxu0 0.0
        %2239 = vmatprep.subr.mxu0 0.0
        %2240 = vmatpush1.msra.mxu0 0.0
        %2241 = vmatprep.subr.mxu0 0.0
        %2242 = vmatpush1.msra.mxu0 0.0
        %2243 = vmatprep.subr.mxu0 0.0
        %2244 = vmatpush1.msra.mxu0 0.0
        %2245 = vmatprep.subr.mxu0 0.0
        %2246 = vmatpush1.msra.mxu0 0.0
        %2247 = vmatprep.subr.mxu0 0.0
        %2248 = vmatpush1.msra.mxu0 0.0
        %2249 = vmatprep.subr.mxu0 %v2160
        %2250 = vmatpush1.msra.mxu0 %v2159
        %2251 = vmatprep.subr.mxu0 %v2156
        %2252 = vmatpush1.msra.mxu0 %v2155
        %2253 = vmatprep.subr.mxu0 %v2152
        %2254 = vmatpush1.msra.mxu0 %v2151
        %2255 = vmatprep.subr.mxu0 %v2148
        %2256 = vmatpush1.msra.mxu0 %v2147
        %2257 = vmatprep.subr.mxu0 %v2144
        %2258 = vmatpush1.msra.mxu0 %v2143
        %2259 = vmatprep.subr.mxu0 %v2140
        %2260 = vmatpush1.msra.mxu0 %v2139
        %2261 = vmatprep.subr.mxu0 %v2136
        %2262 = vmatpush1.msra.mxu0 %v2135
        %2263 = vmatprep.subr.mxu0 %v2132
        %2264 = vmatpush1.msra.mxu0 %v2131
        %2265 = vmatprep.subr.mxu0 %v2128
        %2266 = vmatpush1.msra.mxu0 %v2127
        %2267 = vmatprep.subr.mxu0 0.0
        %2268 = vmatpush2.msra.mxu0 0.0
        %2269 = vmatprep.subr.mxu0 0.0
        %2270 = vmatpush2.msra.mxu0 0.0
        %2271 = vmatprep.subr.mxu0 0.0
        %2272 = vmatpush2.msra.mxu0 0.0
        %2273 = vmatprep.subr.mxu0 0.0
        %2274 = vmatpush2.msra.mxu0 0.0
        %2275 = vmatprep.subr.mxu0 0.0
        %2276 = vmatpush2.msra.mxu0 0.0
        %2277 = vmatprep.subr.mxu0 0.0
        %2278 = vmatpush2.msra.mxu0 0.0
        %2279 = vmatprep.subr.mxu0 0.0
        %2280 = vmatpush2.msra.mxu0 0.0
        %2281 = vmatprep.subr.mxu0 0.0
        %2282 = vmatpush2.msra.mxu0 0.0
        %2283 = vmatprep.subr.mxu0 0.0
        %2284 = vmatpush2.msra.mxu0 0.0
        %2285 = vmatprep.subr.mxu0 0.0
        %2286 = vmatpush2.msra.mxu0 0.0
        %2287 = vmatprep.subr.mxu0 0.0
        %2288 = vmatpush2.msra.mxu0 0.0
        %2289 = vmatprep.subr.mxu0 0.0
        %2290 = vmatpush2.msra.mxu0 0.0
        %2291 = vmatprep.subr.mxu0 0.0
        %2292 = vmatpush2.msra.mxu0 0.0
        %2293 = vmatprep.subr.mxu0 0.0
        %2294 = vmatpush2.msra.mxu0 0.0
        %2295 = vmatprep.subr.mxu0 0.0
        %2296 = vmatpush2.msra.mxu0 0.0
        %2297 = vmatprep.subr.mxu0 0.0
        %2298 = vmatpush2.msra.mxu0 0.0
        %2299 = vmatprep.mubr.f32.mxu0 0.0
        %2300 = vmatmul.mubr.f32.gmra.mxu0 %v2162
        %v2301 = vpop.f32.mrf.mxu0
        %v2302 = vadd.f32 0.0, %v2301
        %v2303 = vpop.f32.mrf.mxu0
        %v2304 = vadd.f32 0.0, %v2303
        %2305 = vdwg.mxu0
        %2306 = vst [vmem:[#allocation3 + $0x20] sm:$0xff] %v2231
        %2307 = vst [vmem:[#allocation3 + $0x28] sm:$0xff] %v2233
        %2308 = vst [vmem:[#allocation3 + $0x30] sm:$0xff] %v2302
        %2309 = vst [vmem:[#allocation3 + $0x38] sm:$0xff] %v2304
        %v2310 = vld [vmem:[#allocation3] sm:$0xff]
        %v2311 = vld [vmem:[#allocation3 + $0x8] sm:$0xff]
        %v2312 = vld [vmem:[#allocation3 + $0x10] sm:$0xff]
        %v2313 = vld [vmem:[#allocation3 + $0x18] sm:$0xff]
        %v2314 = vld [vmem:[#allocation3 + $0x20] sm:$0xff]
        %v2315 = vld [vmem:[#allocation3 + $0x28] sm:$0xff]
        %v2316 = vld [vmem:[#allocation3 + $0x30] sm:$0xff]
        %v2317 = vld [vmem:[#allocation3 + $0x38] sm:$0xff]
        %2318 = vset.pattern.permute.xlu0 3
        %2319 = vperm.xlu0 %2318, %v387
        %v2320 = vpop.permute.xlu0 %2319
        %2322 = vset.pattern.permute.xlu0 3
        %2323 = vperm.xlu0 %2322, %v388
        %v2324 = vpop.permute.xlu0 %2323
        %v2326 = vadd.f32 %v2310, %v2320
        %v2327 = vadd.f32 %v2311, %v2320
        %v2328 = vadd.f32 %v2312, %v2320
        %v2329 = vadd.f32 %v2313, %v2320
        %v2330 = vadd.f32 %v2314, %v2324
        %v2331 = vadd.f32 %v2315, %v2324
        %v2332 = vadd.f32 %v2316, %v2324
        %v2333 = vadd.f32 %v2317, %v2324
        %2334 = vmatprep.subr.mxu0 0.0
        %2335 = vmatpush1.xpose.msra.mxu0 0.0
        %2336 = vmatprep.subr.mxu0 0.0
        %2337 = vmatpush1.xpose.msra.mxu0 0.0
        %2338 = vmatprep.subr.mxu0 0.0
        %2339 = vmatpush1.xpose.msra.mxu0 0.0
        %2340 = vmatprep.subr.mxu0 0.0
        %2341 = vmatpush1.xpose.msra.mxu0 0.0
        %2342 = vmatprep.subr.mxu0 0.0
        %2343 = vmatpush1.xpose.msra.mxu0 0.0
        %2344 = vmatprep.subr.mxu0 0.0
        %2345 = vmatpush1.xpose.msra.mxu0 0.0
        %2346 = vmatprep.subr.mxu0 0.0
        %2347 = vmatpush1.xpose.msra.mxu0 0.0
        %2348 = vmatprep.subr.mxu0 0.0
        %2349 = vmatpush1.xpose.msra.mxu0 0.0
        %2350 = vmatprep.subr.mxu0 0.0
        %2351 = vmatpush1.xpose.msra.mxu0 0.0
        %2352 = vmatprep.subr.mxu0 0.0
        %2353 = vmatpush1.xpose.msra.mxu0 0.0
        %2354 = vmatprep.subr.mxu0 0.0
        %2355 = vmatpush1.xpose.msra.mxu0 0.0
        %2356 = vmatprep.subr.mxu0 0.0
        %2357 = vmatpush1.xpose.msra.mxu0 0.0
        %2358 = vmatprep.subr.mxu0 0.0
        %2359 = vmatpush1.xpose.msra.mxu0 0.0
        %2360 = vmatprep.subr.mxu0 0.0
        %2361 = vmatpush1.xpose.msra.mxu0 0.0
        %2362 = vmatprep.subr.mxu0 0.0
        %2363 = vmatpush1.xpose.msra.mxu0 0.0
        %2364 = vmatprep.subr.mxu0 %v535
        %2365 = vmatpush1.xpose.msra.mxu0 %v527
        %2366 = vmatprep.subr.mxu0 0.0
        %2367 = vmatpush2.xpose.msra.mxu0 0.0
        %2368 = vmatprep.subr.mxu0 0.0
        %2369 = vmatpush2.xpose.msra.mxu0 0.0
        %2370 = vmatprep.subr.mxu0 0.0
        %2371 = vmatpush2.xpose.msra.mxu0 0.0
        %2372 = vmatprep.subr.mxu0 0.0
        %2373 = vmatpush2.xpose.msra.mxu0 0.0
        %2374 = vmatprep.subr.mxu0 0.0
        %2375 = vmatpush2.xpose.msra.mxu0 0.0
        %2376 = vmatprep.subr.mxu0 0.0
        %2377 = vmatpush2.xpose.msra.mxu0 0.0
        %2378 = vmatprep.subr.mxu0 0.0
        %2379 = vmatpush2.xpose.msra.mxu0 0.0
        %2380 = vmatprep.subr.mxu0 0.0
        %2381 = vmatpush2.xpose.msra.mxu0 0.0
        %2382 = vmatprep.subr.mxu0 0.0
        %2383 = vmatpush2.xpose.msra.mxu0 0.0
        %2384 = vmatprep.subr.mxu0 0.0
        %2385 = vmatpush2.xpose.msra.mxu0 0.0
        %2386 = vmatprep.subr.mxu0 0.0
        %2387 = vmatpush2.xpose.msra.mxu0 0.0
        %2388 = vmatprep.subr.mxu0 0.0
        %2389 = vmatpush2.xpose.msra.mxu0 0.0
        %2390 = vmatprep.subr.mxu0 0.0
        %2391 = vmatpush2.xpose.msra.mxu0 0.0
        %2392 = vmatprep.subr.mxu0 0.0
        %2393 = vmatpush2.xpose.msra.mxu0 0.0
        %2394 = vmatprep.subr.mxu0 0.0
        %2395 = vmatpush2.xpose.msra.mxu0 0.0
        %2396 = vmatprep.subr.mxu0 0.0
        %2397 = vmatpush2.xpose.msra.mxu0 0.0
        %2398 = vmatprep.mubr.f32.mxu0 %v2327
        %2399 = vmatmul.mubr.f32.gmra.mxu0 %v2326
        %v2400 = vpop.f32.mrf.mxu0
        %v2401 = vadd.f32 0.0, %v2400
        %v2402 = vpop.f32.mrf.mxu0
        %2403 = vmatprep.mubr.f32.mxu0 %v2331
        %2404 = vmatmul.mubr.f32.gmra.mxu0 %v2330
        %v2405 = vpop.f32.mrf.mxu0
        %v2406 = vadd.f32 0.0, %v2405
        %v2407 = vpop.f32.mrf.mxu0
        %2408 = vdwg.mxu0
        %2409 = vmatprep.subr.mxu0 0.0
        %2410 = vmatpush1.xpose.msra.mxu0 0.0
        %2411 = vmatprep.subr.mxu0 0.0
        %2412 = vmatpush1.xpose.msra.mxu0 0.0
        %2413 = vmatprep.subr.mxu0 0.0
        %2414 = vmatpush1.xpose.msra.mxu0 0.0
        %2415 = vmatprep.subr.mxu0 0.0
        %2416 = vmatpush1.xpose.msra.mxu0 0.0
        %2417 = vmatprep.subr.mxu0 0.0
        %2418 = vmatpush1.xpose.msra.mxu0 0.0
        %2419 = vmatprep.subr.mxu0 0.0
        %2420 = vmatpush1.xpose.msra.mxu0 0.0
        %2421 = vmatprep.subr.mxu0 0.0
        %2422 = vmatpush1.xpose.msra.mxu0 0.0
        %2423 = vmatprep.subr.mxu0 0.0
        %2424 = vmatpush1.xpose.msra.mxu0 0.0
        %2425 = vmatprep.subr.mxu0 0.0
        %2426 = vmatpush1.xpose.msra.mxu0 0.0
        %2427 = vmatprep.subr.mxu0 0.0
        %2428 = vmatpush1.xpose.msra.mxu0 0.0
        %2429 = vmatprep.subr.mxu0 0.0
        %2430 = vmatpush1.xpose.msra.mxu0 0.0
        %2431 = vmatprep.subr.mxu0 0.0
        %2432 = vmatpush1.xpose.msra.mxu0 0.0
        %2433 = vmatprep.subr.mxu0 0.0
        %2434 = vmatpush1.xpose.msra.mxu0 0.0
        %2435 = vmatprep.subr.mxu0 0.0
        %2436 = vmatpush1.xpose.msra.mxu0 0.0
        %2437 = vmatprep.subr.mxu0 0.0
        %2438 = vmatpush1.xpose.msra.mxu0 0.0
        %2439 = vmatprep.subr.mxu0 %v536
        %2440 = vmatpush1.xpose.msra.mxu0 %v534
        %2441 = vmatprep.subr.mxu0 0.0
        %2442 = vmatpush2.xpose.msra.mxu0 0.0
        %2443 = vmatprep.subr.mxu0 0.0
        %2444 = vmatpush2.xpose.msra.mxu0 0.0
        %2445 = vmatprep.subr.mxu0 0.0
        %2446 = vmatpush2.xpose.msra.mxu0 0.0
        %2447 = vmatprep.subr.mxu0 0.0
        %2448 = vmatpush2.xpose.msra.mxu0 0.0
        %2449 = vmatprep.subr.mxu0 0.0
        %2450 = vmatpush2.xpose.msra.mxu0 0.0
        %2451 = vmatprep.subr.mxu0 0.0
        %2452 = vmatpush2.xpose.msra.mxu0 0.0
        %2453 = vmatprep.subr.mxu0 0.0
        %2454 = vmatpush2.xpose.msra.mxu0 0.0
        %2455 = vmatprep.subr.mxu0 0.0
        %2456 = vmatpush2.xpose.msra.mxu0 0.0
        %2457 = vmatprep.subr.mxu0 0.0
        %2458 = vmatpush2.xpose.msra.mxu0 0.0
        %2459 = vmatprep.subr.mxu0 0.0
        %2460 = vmatpush2.xpose.msra.mxu0 0.0
        %2461 = vmatprep.subr.mxu0 0.0
        %2462 = vmatpush2.xpose.msra.mxu0 0.0
        %2463 = vmatprep.subr.mxu0 0.0
        %2464 = vmatpush2.xpose.msra.mxu0 0.0
        %2465 = vmatprep.subr.mxu0 0.0
        %2466 = vmatpush2.xpose.msra.mxu0 0.0
        %2467 = vmatprep.subr.mxu0 0.0
        %2468 = vmatpush2.xpose.msra.mxu0 0.0
        %2469 = vmatprep.subr.mxu0 0.0
        %2470 = vmatpush2.xpose.msra.mxu0 0.0
        %2471 = vmatprep.subr.mxu0 0.0
        %2472 = vmatpush2.xpose.msra.mxu0 0.0
        %2473 = vmatprep.mubr.f32.mxu0 %v2329
        %2474 = vmatmul.mubr.f32.gmra.mxu0 %v2328
        %v2475 = vpop.f32.mrf.mxu0
        %v2476 = vadd.f32 %v2401, %v2475
        %v2477 = vpop.f32.mrf.mxu0
        %2478 = vmatprep.mubr.f32.mxu0 %v2333
        %2479 = vmatmul.mubr.f32.gmra.mxu0 %v2332
        %v2480 = vpop.f32.mrf.mxu0
        %v2481 = vadd.f32 %v2406, %v2480
        %v2482 = vpop.f32.mrf.mxu0
        %2483 = vdwg.mxu0
        %2484 = vmatprep.subr.mxu0 0.0
        %2485 = vmatpush1.msra.mxu0 0.0
        %2486 = vmatprep.subr.mxu0 0.0
        %2487 = vmatpush1.msra.mxu0 0.0
        %2488 = vmatprep.subr.mxu0 0.0
        %2489 = vmatpush1.msra.mxu0 0.0
        %2490 = vmatprep.subr.mxu0 0.0
        %2491 = vmatpush1.msra.mxu0 0.0
        %2492 = vmatprep.subr.mxu0 0.0
        %2493 = vmatpush1.msra.mxu0 0.0
        %2494 = vmatprep.subr.mxu0 0.0
        %2495 = vmatpush1.msra.mxu0 0.0
        %2496 = vmatprep.subr.mxu0 0.0
        %2497 = vmatpush1.msra.mxu0 0.0
        %2498 = vmatprep.subr.mxu0 0.0
        %2499 = vmatpush1.msra.mxu0 0.0
        %2500 = vmatprep.subr.mxu0 0.0
        %2501 = vmatpush1.msra.mxu0 0.0
        %2502 = vmatprep.subr.mxu0 0.0
        %2503 = vmatpush1.msra.mxu0 0.0
        %2504 = vmatprep.subr.mxu0 0.0
        %2505 = vmatpush1.msra.mxu0 0.0
        %2506 = vmatprep.subr.mxu0 0.0
        %2507 = vmatpush1.msra.mxu0 0.0
        %2508 = vmatprep.subr.mxu0 0.0
        %2509 = vmatpush1.msra.mxu0 0.0
        %2510 = vmatprep.subr.mxu0 0.0
        %2511 = vmatpush1.msra.mxu0 0.0
        %2512 = vmatprep.subr.mxu0 0.0
        %2513 = vmatpush1.msra.mxu0 %v2481
        %2514 = vmatprep.subr.mxu0 0.0
        %2515 = vmatpush1.msra.mxu0 %v2476
        %2516 = vmatprep.subr.mxu0 0.0
        %2517 = vmatpush2.msra.mxu0 0.0
        %2518 = vmatprep.subr.mxu0 0.0
        %2519 = vmatpush2.msra.mxu0 0.0
        %2520 = vmatprep.subr.mxu0 0.0
        %2521 = vmatpush2.msra.mxu0 0.0
        %2522 = vmatprep.subr.mxu0 0.0
        %2523 = vmatpush2.msra.mxu0 0.0
        %2524 = vmatprep.subr.mxu0 0.0
        %2525 = vmatpush2.msra.mxu0 0.0
        %2526 = vmatprep.subr.mxu0 0.0
        %2527 = vmatpush2.msra.mxu0 0.0
        %2528 = vmatprep.subr.mxu0 0.0
        %2529 = vmatpush2.msra.mxu0 0.0
        %2530 = vmatprep.subr.mxu0 0.0
        %2531 = vmatpush2.msra.mxu0 0.0
        %2532 = vmatprep.subr.mxu0 0.0
        %2533 = vmatpush2.msra.mxu0 0.0
        %2534 = vmatprep.subr.mxu0 0.0
        %2535 = vmatpush2.msra.mxu0 0.0
        %2536 = vmatprep.subr.mxu0 0.0
        %2537 = vmatpush2.msra.mxu0 0.0
        %2538 = vmatprep.subr.mxu0 0.0
        %2539 = vmatpush2.msra.mxu0 0.0
        %2540 = vmatprep.subr.mxu0 0.0
        %2541 = vmatpush2.msra.mxu0 0.0
        %2542 = vmatprep.subr.mxu0 0.0
        %2543 = vmatpush2.msra.mxu0 0.0
        %2544 = vmatprep.subr.mxu0 0.0
        %2545 = vmatpush2.msra.mxu0 0.0
        %2546 = vmatprep.subr.mxu0 0.0
        %2547 = vmatpush2.msra.mxu0 0.0
        %2548 = vmatprep.mubr.f32.mxu0 0.0
        %2549 = vmatmul.mubr.f32.gmra.mxu0 %v692
        %v2550 = vpop.f32.mrf.mxu0
        %v2551 = vadd.f32 0.0, %v2550
        %v2552 = vpop.f32.mrf.mxu0
        %2553 = vmatprep.mubr.f32.mxu0 0.0
        %2554 = vmatmul.mubr.f32.gmra.mxu0 %v695
        %v2555 = vpop.f32.mrf.mxu0
        %v2556 = vadd.f32 0.0, %v2555
        %v2557 = vpop.f32.mrf.mxu0
        %2558 = vdwg.mxu0
        %v2560 = vsel %vm772, %v2551, 0
        %v2563 = vsel %vm772, %v2556, 0
        %2565 = vmatprep.subr.mxu0 0.0
        %2566 = vmatpush1.msra.mxu0 0.0
        %2567 = vmatprep.subr.mxu0 0.0
        %2568 = vmatpush1.msra.mxu0 0.0
        %2569 = vmatprep.subr.mxu0 0.0
        %2570 = vmatpush1.msra.mxu0 0.0
        %2571 = vmatprep.subr.mxu0 0.0
        %2572 = vmatpush1.msra.mxu0 0.0
        %2573 = vmatprep.subr.mxu0 0.0
        %2574 = vmatpush1.msra.mxu0 0.0
        %2575 = vmatprep.subr.mxu0 0.0
        %2576 = vmatpush1.msra.mxu0 0.0
        %2577 = vmatprep.subr.mxu0 0.0
        %2578 = vmatpush1.msra.mxu0 0.0
        %2579 = vmatprep.subr.mxu0 0.0
        %2580 = vmatpush1.msra.mxu0 0.0
        %2581 = vmatprep.subr.mxu0 0.0
        %2582 = vmatpush1.msra.mxu0 0.0
        %2583 = vmatprep.subr.mxu0 0.0
        %2584 = vmatpush1.msra.mxu0 0.0
        %2585 = vmatprep.subr.mxu0 0.0
        %2586 = vmatpush1.msra.mxu0 0.0
        %2587 = vmatprep.subr.mxu0 0.0
        %2588 = vmatpush1.msra.mxu0 0.0
        %2589 = vmatprep.subr.mxu0 0.0
        %2590 = vmatpush1.msra.mxu0 0.0
        %2591 = vmatprep.subr.mxu0 0.0
        %2592 = vmatpush1.msra.mxu0 0.0
        %2593 = vmatprep.subr.mxu0 0.0
        %2594 = vmatpush1.msra.mxu0 0.0
        %2595 = vmatprep.subr.mxu0 %v782
        %2596 = vmatpush1.msra.mxu0 %v780
        %2597 = vmatprep.subr.mxu0 0.0
        %2598 = vmatpush2.msra.mxu0 0.0
        %2599 = vmatprep.subr.mxu0 0.0
        %2600 = vmatpush2.msra.mxu0 0.0
        %2601 = vmatprep.subr.mxu0 0.0
        %2602 = vmatpush2.msra.mxu0 0.0
        %2603 = vmatprep.subr.mxu0 0.0
        %2604 = vmatpush2.msra.mxu0 0.0
        %2605 = vmatprep.subr.mxu0 0.0
        %2606 = vmatpush2.msra.mxu0 0.0
        %2607 = vmatprep.subr.mxu0 0.0
        %2608 = vmatpush2.msra.mxu0 0.0
        %2609 = vmatprep.subr.mxu0 0.0
        %2610 = vmatpush2.msra.mxu0 0.0
        %2611 = vmatprep.subr.mxu0 0.0
        %2612 = vmatpush2.msra.mxu0 0.0
        %2613 = vmatprep.subr.mxu0 0.0
        %2614 = vmatpush2.msra.mxu0 0.0
        %2615 = vmatprep.subr.mxu0 0.0
        %2616 = vmatpush2.msra.mxu0 0.0
        %2617 = vmatprep.subr.mxu0 0.0
        %2618 = vmatpush2.msra.mxu0 0.0
        %2619 = vmatprep.subr.mxu0 0.0
        %2620 = vmatpush2.msra.mxu0 0.0
        %2621 = vmatprep.subr.mxu0 0.0
        %2622 = vmatpush2.msra.mxu0 0.0
        %2623 = vmatprep.subr.mxu0 0.0
        %2624 = vmatpush2.msra.mxu0 0.0
        %2625 = vmatprep.subr.mxu0 0.0
        %2626 = vmatpush2.msra.mxu0 0.0
        %2627 = vmatprep.subr.mxu0 0.0
        %2628 = vmatpush2.msra.mxu0 0.0
        %2629 = vmatprep.mubr.f32.mxu0 0.0
        %2630 = vmatmul.mubr.f32.gmra.mxu0 %v2560
        %v2631 = vpop.f32.mrf.mxu0
        %v2632 = vadd.f32 0.0, %v2631
        %v2633 = vpop.f32.mrf.mxu0
        %v2634 = vadd.f32 0.0, %v2633
        %2635 = vmatprep.mubr.f32.mxu0 0.0
        %2636 = vmatmul.mubr.f32.gmra.mxu0 %v2563
        %v2637 = vpop.f32.mrf.mxu0
        %v2638 = vadd.f32 0.0, %v2637
        %v2639 = vpop.f32.mrf.mxu0
        %v2640 = vadd.f32 0.0, %v2639
        %2641 = vdwg.mxu0
        %2642 = vmatprep.subr.mxu0 0.0
        %2643 = vmatpush1.msra.mxu0 0.0
        %2644 = vmatprep.subr.mxu0 0.0
        %2645 = vmatpush1.msra.mxu0 0.0
        %2646 = vmatprep.subr.mxu0 0.0
        %2647 = vmatpush1.msra.mxu0 0.0
        %2648 = vmatprep.subr.mxu0 0.0
        %2649 = vmatpush1.msra.mxu0 0.0
        %2650 = vmatprep.subr.mxu0 0.0
        %2651 = vmatpush1.msra.mxu0 0.0
        %2652 = vmatprep.subr.mxu0 0.0
        %2653 = vmatpush1.msra.mxu0 0.0
        %2654 = vmatprep.subr.mxu0 0.0
        %2655 = vmatpush1.msra.mxu0 0.0
        %2656 = vmatprep.subr.mxu0 0.0
        %2657 = vmatpush1.msra.mxu0 0.0
        %2658 = vmatprep.subr.mxu0 0.0
        %2659 = vmatpush1.msra.mxu0 0.0
        %2660 = vmatprep.subr.mxu0 0.0
        %2661 = vmatpush1.msra.mxu0 0.0
        %2662 = vmatprep.subr.mxu0 0.0
        %2663 = vmatpush1.msra.mxu0 0.0
        %2664 = vmatprep.subr.mxu0 0.0
        %2665 = vmatpush1.msra.mxu0 0.0
        %2666 = vmatprep.subr.mxu0 0.0
        %2667 = vmatpush1.msra.mxu0 0.0
        %2668 = vmatprep.subr.mxu0 0.0
        %2669 = vmatpush1.msra.mxu0 0.0
        %2670 = vmatprep.subr.mxu0 0.0
        %2671 = vmatpush1.msra.mxu0 0.0
        %2672 = vmatprep.subr.mxu0 %v786
        %2673 = vmatpush1.msra.mxu0 %v784
        %2674 = vmatprep.subr.mxu0 0.0
        %2675 = vmatpush2.msra.mxu0 0.0
        %2676 = vmatprep.subr.mxu0 0.0
        %2677 = vmatpush2.msra.mxu0 0.0
        %2678 = vmatprep.subr.mxu0 0.0
        %2679 = vmatpush2.msra.mxu0 0.0
        %2680 = vmatprep.subr.mxu0 0.0
        %2681 = vmatpush2.msra.mxu0 0.0
        %2682 = vmatprep.subr.mxu0 0.0
        %2683 = vmatpush2.msra.mxu0 0.0
        %2684 = vmatprep.subr.mxu0 0.0
        %2685 = vmatpush2.msra.mxu0 0.0
        %2686 = vmatprep.subr.mxu0 0.0
        %2687 = vmatpush2.msra.mxu0 0.0
        %2688 = vmatprep.subr.mxu0 0.0
        %2689 = vmatpush2.msra.mxu0 0.0
        %2690 = vmatprep.subr.mxu0 0.0
        %2691 = vmatpush2.msra.mxu0 0.0
        %2692 = vmatprep.subr.mxu0 0.0
        %2693 = vmatpush2.msra.mxu0 0.0
        %2694 = vmatprep.subr.mxu0 0.0
        %2695 = vmatpush2.msra.mxu0 0.0
        %2696 = vmatprep.subr.mxu0 0.0
        %2697 = vmatpush2.msra.mxu0 0.0
        %2698 = vmatprep.subr.mxu0 0.0
        %2699 = vmatpush2.msra.mxu0 0.0
        %2700 = vmatprep.subr.mxu0 0.0
        %2701 = vmatpush2.msra.mxu0 0.0
        %2702 = vmatprep.subr.mxu0 0.0
        %2703 = vmatpush2.msra.mxu0 0.0
        %2704 = vmatprep.subr.mxu0 0.0
        %2705 = vmatpush2.msra.mxu0 0.0
        %2706 = vmatprep.mubr.f32.mxu0 0.0
        %2707 = vmatmul.mubr.f32.gmra.mxu0 %v2560
        %v2708 = vpop.f32.mrf.mxu0
        %v2709 = vadd.f32 0.0, %v2708
        %v2710 = vpop.f32.mrf.mxu0
        %v2711 = vadd.f32 0.0, %v2710
        %2712 = vmatprep.mubr.f32.mxu0 0.0
        %2713 = vmatmul.mubr.f32.gmra.mxu0 %v2563
        %v2714 = vpop.f32.mrf.mxu0
        %v2715 = vadd.f32 0.0, %v2714
        %v2716 = vpop.f32.mrf.mxu0
        %v2717 = vadd.f32 0.0, %v2716
        %2718 = vdwg.mxu0
        %v2719 = vsub.f32 %v2326, %v2632
        %v2720 = vsub.f32 %v2327, %v2634
        %v2721 = vsub.f32 %v2328, %v2709
        %v2722 = vsub.f32 %v2329, %v2711
        %v2723 = vsub.f32 %v2330, %v2638
        %v2724 = vsub.f32 %v2331, %v2640
        %v2725 = vsub.f32 %v2332, %v2715
        %v2726 = vsub.f32 %v2333, %v2717
        %v2727 = vmul.f32 %v2719, %v2719
        %v2728 = vmul.f32 %v2720, %v2720
        %v2729 = vmul.f32 %v2721, %v2721
        %v2730 = vmul.f32 %v2722, %v2722
        %v2731 = vmul.f32 %v2723, %v2723
        %v2732 = vmul.f32 %v2724, %v2724
        %v2733 = vmul.f32 %v2725, %v2725
        %v2734 = vmul.f32 %v2726, %v2726
        %2735 = vmatprep.subr.mxu0 0.0
        %2736 = vmatpush1.xpose.msra.mxu0 0.0
        %2737 = vmatprep.subr.mxu0 0.0
        %2738 = vmatpush1.xpose.msra.mxu0 0.0
        %2739 = vmatprep.subr.mxu0 0.0
        %2740 = vmatpush1.xpose.msra.mxu0 0.0
        %2741 = vmatprep.subr.mxu0 0.0
        %2742 = vmatpush1.xpose.msra.mxu0 0.0
        %2743 = vmatprep.subr.mxu0 0.0
        %2744 = vmatpush1.xpose.msra.mxu0 0.0
        %2745 = vmatprep.subr.mxu0 0.0
        %2746 = vmatpush1.xpose.msra.mxu0 0.0
        %2747 = vmatprep.subr.mxu0 0.0
        %2748 = vmatpush1.xpose.msra.mxu0 0.0
        %2749 = vmatprep.subr.mxu0 0.0
        %2750 = vmatpush1.xpose.msra.mxu0 0.0
        %2751 = vmatprep.subr.mxu0 0.0
        %2752 = vmatpush1.xpose.msra.mxu0 0.0
        %2753 = vmatprep.subr.mxu0 0.0
        %2754 = vmatpush1.xpose.msra.mxu0 0.0
        %2755 = vmatprep.subr.mxu0 0.0
        %2756 = vmatpush1.xpose.msra.mxu0 0.0
        %2757 = vmatprep.subr.mxu0 0.0
        %2758 = vmatpush1.xpose.msra.mxu0 0.0
        %2759 = vmatprep.subr.mxu0 0.0
        %2760 = vmatpush1.xpose.msra.mxu0 0.0
        %2761 = vmatprep.subr.mxu0 0.0
        %2762 = vmatpush1.xpose.msra.mxu0 0.0
        %2763 = vmatprep.subr.mxu0 0.0
        %2764 = vmatpush1.xpose.msra.mxu0 0.0
        %2765 = vmatprep.subr.mxu0 %v535
        %2766 = vmatpush1.xpose.msra.mxu0 %v527
        %2767 = vmatprep.subr.mxu0 0.0
        %2768 = vmatpush2.xpose.msra.mxu0 0.0
        %2769 = vmatprep.subr.mxu0 0.0
        %2770 = vmatpush2.xpose.msra.mxu0 0.0
        %2771 = vmatprep.subr.mxu0 0.0
        %2772 = vmatpush2.xpose.msra.mxu0 0.0
        %2773 = vmatprep.subr.mxu0 0.0
        %2774 = vmatpush2.xpose.msra.mxu0 0.0
        %2775 = vmatprep.subr.mxu0 0.0
        %2776 = vmatpush2.xpose.msra.mxu0 0.0
        %2777 = vmatprep.subr.mxu0 0.0
        %2778 = vmatpush2.xpose.msra.mxu0 0.0
        %2779 = vmatprep.subr.mxu0 0.0
        %2780 = vmatpush2.xpose.msra.mxu0 0.0
        %2781 = vmatprep.subr.mxu0 0.0
        %2782 = vmatpush2.xpose.msra.mxu0 0.0
        %2783 = vmatprep.subr.mxu0 0.0
        %2784 = vmatpush2.xpose.msra.mxu0 0.0
        %2785 = vmatprep.subr.mxu0 0.0
        %2786 = vmatpush2.xpose.msra.mxu0 0.0
        %2787 = vmatprep.subr.mxu0 0.0
        %2788 = vmatpush2.xpose.msra.mxu0 0.0
        %2789 = vmatprep.subr.mxu0 0.0
        %2790 = vmatpush2.xpose.msra.mxu0 0.0
        %2791 = vmatprep.subr.mxu0 0.0
        %2792 = vmatpush2.xpose.msra.mxu0 0.0
        %2793 = vmatprep.subr.mxu0 0.0
        %2794 = vmatpush2.xpose.msra.mxu0 0.0
        %2795 = vmatprep.subr.mxu0 0.0
        %2796 = vmatpush2.xpose.msra.mxu0 0.0
        %2797 = vmatprep.subr.mxu0 0.0
        %2798 = vmatpush2.xpose.msra.mxu0 0.0
        %2799 = vmatprep.mubr.f32.mxu0 %v2728
        %2800 = vmatmul.mubr.f32.gmra.mxu0 %v2727
        %v2801 = vpop.f32.mrf.mxu0
        %v2802 = vadd.f32 0.0, %v2801
        %v2803 = vpop.f32.mrf.mxu0
        %2804 = vmatprep.mubr.f32.mxu0 %v2732
        %2805 = vmatmul.mubr.f32.gmra.mxu0 %v2731
        %v2806 = vpop.f32.mrf.mxu0
        %v2807 = vadd.f32 0.0, %v2806
        %v2808 = vpop.f32.mrf.mxu0
        %2809 = vdwg.mxu0
        %2810 = vmatprep.subr.mxu0 0.0
        %2811 = vmatpush1.xpose.msra.mxu0 0.0
        %2812 = vmatprep.subr.mxu0 0.0
        %2813 = vmatpush1.xpose.msra.mxu0 0.0
        %2814 = vmatprep.subr.mxu0 0.0
        %2815 = vmatpush1.xpose.msra.mxu0 0.0
        %2816 = vmatprep.subr.mxu0 0.0
        %2817 = vmatpush1.xpose.msra.mxu0 0.0
        %2818 = vmatprep.subr.mxu0 0.0
        %2819 = vmatpush1.xpose.msra.mxu0 0.0
        %2820 = vmatprep.subr.mxu0 0.0
        %2821 = vmatpush1.xpose.msra.mxu0 0.0
        %2822 = vmatprep.subr.mxu0 0.0
        %2823 = vmatpush1.xpose.msra.mxu0 0.0
        %2824 = vmatprep.subr.mxu0 0.0
        %2825 = vmatpush1.xpose.msra.mxu0 0.0
        %2826 = vmatprep.subr.mxu0 0.0
        %2827 = vmatpush1.xpose.msra.mxu0 0.0
        %2828 = vmatprep.subr.mxu0 0.0
        %2829 = vmatpush1.xpose.msra.mxu0 0.0
        %2830 = vmatprep.subr.mxu0 0.0
        %2831 = vmatpush1.xpose.msra.mxu0 0.0
        %2832 = vmatprep.subr.mxu0 0.0
        %2833 = vmatpush1.xpose.msra.mxu0 0.0
        %2834 = vmatprep.subr.mxu0 0.0
        %2835 = vmatpush1.xpose.msra.mxu0 0.0
        %2836 = vmatprep.subr.mxu0 0.0
        %2837 = vmatpush1.xpose.msra.mxu0 0.0
        %2838 = vmatprep.subr.mxu0 0.0
        %2839 = vmatpush1.xpose.msra.mxu0 0.0
        %2840 = vmatprep.subr.mxu0 %v536
        %2841 = vmatpush1.xpose.msra.mxu0 %v534
        %2842 = vmatprep.subr.mxu0 0.0
        %2843 = vmatpush2.xpose.msra.mxu0 0.0
        %2844 = vmatprep.subr.mxu0 0.0
        %2845 = vmatpush2.xpose.msra.mxu0 0.0
        %2846 = vmatprep.subr.mxu0 0.0
        %2847 = vmatpush2.xpose.msra.mxu0 0.0
        %2848 = vmatprep.subr.mxu0 0.0
        %2849 = vmatpush2.xpose.msra.mxu0 0.0
        %2850 = vmatprep.subr.mxu0 0.0
        %2851 = vmatpush2.xpose.msra.mxu0 0.0
        %2852 = vmatprep.subr.mxu0 0.0
        %2853 = vmatpush2.xpose.msra.mxu0 0.0
        %2854 = vmatprep.subr.mxu0 0.0
        %2855 = vmatpush2.xpose.msra.mxu0 0.0
        %2856 = vmatprep.subr.mxu0 0.0
        %2857 = vmatpush2.xpose.msra.mxu0 0.0
        %2858 = vmatprep.subr.mxu0 0.0
        %2859 = vmatpush2.xpose.msra.mxu0 0.0
        %2860 = vmatprep.subr.mxu0 0.0
        %2861 = vmatpush2.xpose.msra.mxu0 0.0
        %2862 = vmatprep.subr.mxu0 0.0
        %2863 = vmatpush2.xpose.msra.mxu0 0.0
        %2864 = vmatprep.subr.mxu0 0.0
        %2865 = vmatpush2.xpose.msra.mxu0 0.0
        %2866 = vmatprep.subr.mxu0 0.0
        %2867 = vmatpush2.xpose.msra.mxu0 0.0
        %2868 = vmatprep.subr.mxu0 0.0
        %2869 = vmatpush2.xpose.msra.mxu0 0.0
        %2870 = vmatprep.subr.mxu0 0.0
        %2871 = vmatpush2.xpose.msra.mxu0 0.0
        %2872 = vmatprep.subr.mxu0 0.0
        %2873 = vmatpush2.xpose.msra.mxu0 0.0
        %2874 = vmatprep.mubr.f32.mxu0 %v2730
        %2875 = vmatmul.mubr.f32.gmra.mxu0 %v2729
        %v2876 = vpop.f32.mrf.mxu0
        %v2877 = vadd.f32 %v2802, %v2876
        %v2878 = vpop.f32.mrf.mxu0
        %2879 = vmatprep.mubr.f32.mxu0 %v2734
        %2880 = vmatmul.mubr.f32.gmra.mxu0 %v2733
        %v2881 = vpop.f32.mrf.mxu0
        %v2882 = vadd.f32 %v2807, %v2881
        %v2883 = vpop.f32.mrf.mxu0
        %2884 = vdwg.mxu0
        %2885 = vmatprep.subr.mxu0 0.0
        %2886 = vmatpush1.msra.mxu0 0.0
        %2887 = vmatprep.subr.mxu0 0.0
        %2888 = vmatpush1.msra.mxu0 0.0
        %2889 = vmatprep.subr.mxu0 0.0
        %2890 = vmatpush1.msra.mxu0 0.0
        %2891 = vmatprep.subr.mxu0 0.0
        %2892 = vmatpush1.msra.mxu0 0.0
        %2893 = vmatprep.subr.mxu0 0.0
        %2894 = vmatpush1.msra.mxu0 0.0
        %2895 = vmatprep.subr.mxu0 0.0
        %2896 = vmatpush1.msra.mxu0 0.0
        %2897 = vmatprep.subr.mxu0 0.0
        %2898 = vmatpush1.msra.mxu0 0.0
        %2899 = vmatprep.subr.mxu0 0.0
        %2900 = vmatpush1.msra.mxu0 0.0
        %2901 = vmatprep.subr.mxu0 0.0
        %2902 = vmatpush1.msra.mxu0 0.0
        %2903 = vmatprep.subr.mxu0 0.0
        %2904 = vmatpush1.msra.mxu0 0.0
        %2905 = vmatprep.subr.mxu0 0.0
        %2906 = vmatpush1.msra.mxu0 0.0
        %2907 = vmatprep.subr.mxu0 0.0
        %2908 = vmatpush1.msra.mxu0 0.0
        %2909 = vmatprep.subr.mxu0 0.0
        %2910 = vmatpush1.msra.mxu0 0.0
        %2911 = vmatprep.subr.mxu0 0.0
        %2912 = vmatpush1.msra.mxu0 0.0
        %2913 = vmatprep.subr.mxu0 0.0
        %2914 = vmatpush1.msra.mxu0 %v2882
        %2915 = vmatprep.subr.mxu0 0.0
        %2916 = vmatpush1.msra.mxu0 %v2877
        %2917 = vmatprep.subr.mxu0 0.0
        %2918 = vmatpush2.msra.mxu0 0.0
        %2919 = vmatprep.subr.mxu0 0.0
        %2920 = vmatpush2.msra.mxu0 0.0
        %2921 = vmatprep.subr.mxu0 0.0
        %2922 = vmatpush2.msra.mxu0 0.0
        %2923 = vmatprep.subr.mxu0 0.0
        %2924 = vmatpush2.msra.mxu0 0.0
        %2925 = vmatprep.subr.mxu0 0.0
        %2926 = vmatpush2.msra.mxu0 0.0
        %2927 = vmatprep.subr.mxu0 0.0
        %2928 = vmatpush2.msra.mxu0 0.0
        %2929 = vmatprep.subr.mxu0 0.0
        %2930 = vmatpush2.msra.mxu0 0.0
        %2931 = vmatprep.subr.mxu0 0.0
        %2932 = vmatpush2.msra.mxu0 0.0
        %2933 = vmatprep.subr.mxu0 0.0
        %2934 = vmatpush2.msra.mxu0 0.0
        %2935 = vmatprep.subr.mxu0 0.0
        %2936 = vmatpush2.msra.mxu0 0.0
        %2937 = vmatprep.subr.mxu0 0.0
        %2938 = vmatpush2.msra.mxu0 0.0
        %2939 = vmatprep.subr.mxu0 0.0
        %2940 = vmatpush2.msra.mxu0 0.0
        %2941 = vmatprep.subr.mxu0 0.0
        %2942 = vmatpush2.msra.mxu0 0.0
        %2943 = vmatprep.subr.mxu0 0.0
        %2944 = vmatpush2.msra.mxu0 0.0
        %2945 = vmatprep.subr.mxu0 0.0
        %2946 = vmatpush2.msra.mxu0 0.0
        %2947 = vmatprep.subr.mxu0 0.0
        %2948 = vmatpush2.msra.mxu0 0.0
        %2949 = vmatprep.mubr.f32.mxu0 0.0
        %2950 = vmatmul.mubr.f32.gmra.mxu0 %v692
        %v2951 = vpop.f32.mrf.mxu0
        %v2952 = vadd.f32 0.0, %v2951
        %v2953 = vpop.f32.mrf.mxu0
        %2954 = vmatprep.mubr.f32.mxu0 0.0
        %2955 = vmatmul.mubr.f32.gmra.mxu0 %v695
        %v2956 = vpop.f32.mrf.mxu0
        %v2957 = vadd.f32 0.0, %v2956
        %v2958 = vpop.f32.mrf.mxu0
        %2959 = vdwg.mxu0
        %v2961 = vsel %vm772, %v2952, 0
        %v2964 = vsel %vm772, %v2957, 0
        %2966 = vmatprep.subr.mxu0 0.0
        %2967 = vmatpush1.msra.mxu0 0.0
        %2968 = vmatprep.subr.mxu0 0.0
        %2969 = vmatpush1.msra.mxu0 0.0
        %2970 = vmatprep.subr.mxu0 0.0
        %2971 = vmatpush1.msra.mxu0 0.0
        %2972 = vmatprep.subr.mxu0 0.0
        %2973 = vmatpush1.msra.mxu0 0.0
        %2974 = vmatprep.subr.mxu0 0.0
        %2975 = vmatpush1.msra.mxu0 0.0
        %2976 = vmatprep.subr.mxu0 0.0
        %2977 = vmatpush1.msra.mxu0 0.0
        %2978 = vmatprep.subr.mxu0 0.0
        %2979 = vmatpush1.msra.mxu0 0.0
        %2980 = vmatprep.subr.mxu0 0.0
        %2981 = vmatpush1.msra.mxu0 0.0
        %2982 = vmatprep.subr.mxu0 0.0
        %2983 = vmatpush1.msra.mxu0 0.0
        %2984 = vmatprep.subr.mxu0 0.0
        %2985 = vmatpush1.msra.mxu0 0.0
        %2986 = vmatprep.subr.mxu0 0.0
        %2987 = vmatpush1.msra.mxu0 0.0
        %2988 = vmatprep.subr.mxu0 0.0
        %2989 = vmatpush1.msra.mxu0 0.0
        %2990 = vmatprep.subr.mxu0 0.0
        %2991 = vmatpush1.msra.mxu0 0.0
        %2992 = vmatprep.subr.mxu0 0.0
        %2993 = vmatpush1.msra.mxu0 0.0
        %2994 = vmatprep.subr.mxu0 0.0
        %2995 = vmatpush1.msra.mxu0 0.0
        %2996 = vmatprep.subr.mxu0 %v782
        %2997 = vmatpush1.msra.mxu0 %v780
        %2998 = vmatprep.subr.mxu0 0.0
        %2999 = vmatpush2.msra.mxu0 0.0
        %3000 = vmatprep.subr.mxu0 0.0
        %3001 = vmatpush2.msra.mxu0 0.0
        %3002 = vmatprep.subr.mxu0 0.0
        %3003 = vmatpush2.msra.mxu0 0.0
        %3004 = vmatprep.subr.mxu0 0.0
        %3005 = vmatpush2.msra.mxu0 0.0
        %3006 = vmatprep.subr.mxu0 0.0
        %3007 = vmatpush2.msra.mxu0 0.0
        %3008 = vmatprep.subr.mxu0 0.0
        %3009 = vmatpush2.msra.mxu0 0.0
        %3010 = vmatprep.subr.mxu0 0.0
        %3011 = vmatpush2.msra.mxu0 0.0
        %3012 = vmatprep.subr.mxu0 0.0
        %3013 = vmatpush2.msra.mxu0 0.0
        %3014 = vmatprep.subr.mxu0 0.0
        %3015 = vmatpush2.msra.mxu0 0.0
        %3016 = vmatprep.subr.mxu0 0.0
        %3017 = vmatpush2.msra.mxu0 0.0
        %3018 = vmatprep.subr.mxu0 0.0
        %3019 = vmatpush2.msra.mxu0 0.0
        %3020 = vmatprep.subr.mxu0 0.0
        %3021 = vmatpush2.msra.mxu0 0.0
        %3022 = vmatprep.subr.mxu0 0.0
        %3023 = vmatpush2.msra.mxu0 0.0
        %3024 = vmatprep.subr.mxu0 0.0
        %3025 = vmatpush2.msra.mxu0 0.0
        %3026 = vmatprep.subr.mxu0 0.0
        %3027 = vmatpush2.msra.mxu0 0.0
        %3028 = vmatprep.subr.mxu0 0.0
        %3029 = vmatpush2.msra.mxu0 0.0
        %3030 = vmatprep.mubr.f32.mxu0 0.0
        %3031 = vmatmul.mubr.f32.gmra.mxu0 %v2961
        %v3032 = vpop.f32.mrf.mxu0
        %v3033 = vadd.f32 1e-05, %v3032
        %v3034 = vpop.f32.mrf.mxu0
        %v3035 = vadd.f32 1e-05, %v3034
        %3036 = vmatprep.mubr.f32.mxu0 0.0
        %3037 = vmatmul.mubr.f32.gmra.mxu0 %v2964
        %v3038 = vpop.f32.mrf.mxu0
        %v3039 = vadd.f32 1e-05, %v3038
        %v3040 = vpop.f32.mrf.mxu0
        %v3041 = vadd.f32 1e-05, %v3040
        %3042 = vdwg.mxu0
        %3043 = vmatprep.subr.mxu0 0.0
        %3044 = vmatpush1.msra.mxu0 0.0
        %3045 = vmatprep.subr.mxu0 0.0
        %3046 = vmatpush1.msra.mxu0 0.0
        %3047 = vmatprep.subr.mxu0 0.0
        %3048 = vmatpush1.msra.mxu0 0.0
        %3049 = vmatprep.subr.mxu0 0.0
        %3050 = vmatpush1.msra.mxu0 0.0
        %3051 = vmatprep.subr.mxu0 0.0
        %3052 = vmatpush1.msra.mxu0 0.0
        %3053 = vmatprep.subr.mxu0 0.0
        %3054 = vmatpush1.msra.mxu0 0.0
        %3055 = vmatprep.subr.mxu0 0.0
        %3056 = vmatpush1.msra.mxu0 0.0
        %3057 = vmatprep.subr.mxu0 0.0
        %3058 = vmatpush1.msra.mxu0 0.0
        %3059 = vmatprep.subr.mxu0 0.0
        %3060 = vmatpush1.msra.mxu0 0.0
        %3061 = vmatprep.subr.mxu0 0.0
        %3062 = vmatpush1.msra.mxu0 0.0
        %3063 = vmatprep.subr.mxu0 0.0
        %3064 = vmatpush1.msra.mxu0 0.0
        %3065 = vmatprep.subr.mxu0 0.0
        %3066 = vmatpush1.msra.mxu0 0.0
        %3067 = vmatprep.subr.mxu0 0.0
        %3068 = vmatpush1.msra.mxu0 0.0
        %3069 = vmatprep.subr.mxu0 0.0
        %3070 = vmatpush1.msra.mxu0 0.0
        %3071 = vmatprep.subr.mxu0 0.0
        %3072 = vmatpush1.msra.mxu0 0.0
        %3073 = vmatprep.subr.mxu0 %v786
        %3074 = vmatpush1.msra.mxu0 %v784
        %3075 = vmatprep.subr.mxu0 0.0
        %3076 = vmatpush2.msra.mxu0 0.0
        %3077 = vmatprep.subr.mxu0 0.0
        %3078 = vmatpush2.msra.mxu0 0.0
        %3079 = vmatprep.subr.mxu0 0.0
        %3080 = vmatpush2.msra.mxu0 0.0
        %3081 = vmatprep.subr.mxu0 0.0
        %3082 = vmatpush2.msra.mxu0 0.0
        %3083 = vmatprep.subr.mxu0 0.0
        %3084 = vmatpush2.msra.mxu0 0.0
        %3085 = vmatprep.subr.mxu0 0.0
        %3086 = vmatpush2.msra.mxu0 0.0
        %3087 = vmatprep.subr.mxu0 0.0
        %3088 = vmatpush2.msra.mxu0 0.0
        %3089 = vmatprep.subr.mxu0 0.0
        %3090 = vmatpush2.msra.mxu0 0.0
        %3091 = vmatprep.subr.mxu0 0.0
        %3092 = vmatpush2.msra.mxu0 0.0
        %3093 = vmatprep.subr.mxu0 0.0
        %3094 = vmatpush2.msra.mxu0 0.0
        %3095 = vmatprep.subr.mxu0 0.0
        %3096 = vmatpush2.msra.mxu0 0.0
        %3097 = vmatprep.subr.mxu0 0.0
        %3098 = vmatpush2.msra.mxu0 0.0
        %3099 = vmatprep.subr.mxu0 0.0
        %3100 = vmatpush2.msra.mxu0 0.0
        %3101 = vmatprep.subr.mxu0 0.0
        %3102 = vmatpush2.msra.mxu0 0.0
        %3103 = vmatprep.subr.mxu0 0.0
        %3104 = vmatpush2.msra.mxu0 0.0
        %3105 = vmatprep.subr.mxu0 0.0
        %3106 = vmatpush2.msra.mxu0 0.0
        %3107 = vmatprep.mubr.f32.mxu0 0.0
        %3108 = vmatmul.mubr.f32.gmra.mxu0 %v2961
        %v3109 = vpop.f32.mrf.mxu0
        %v3110 = vadd.f32 1e-05, %v3109
        %v3111 = vpop.f32.mrf.mxu0
        %v3112 = vadd.f32 1e-05, %v3111
        %3113 = vmatprep.mubr.f32.mxu0 0.0
        %3114 = vmatmul.mubr.f32.gmra.mxu0 %v2964
        %v3115 = vpop.f32.mrf.mxu0
        %v3116 = vadd.f32 1e-05, %v3115
        %v3117 = vpop.f32.mrf.mxu0
        %v3118 = vadd.f32 1e-05, %v3117
        %3119 = vdwg.mxu0
        %v3120 = vrsqrt.pop %v3033
        %v3121 = vrsqrt.pop %v3035
        %v3122 = vrsqrt.pop %v3110
        %v3123 = vrsqrt.pop %v3112
        %v3124 = vrsqrt.pop %v3039
        %v3125 = vrsqrt.pop %v3041
        %v3126 = vrsqrt.pop %v3116
        %v3127 = vrsqrt.pop %v3118
        %v3128 = vmul.f32 %v2719, %v3120
        %v3129 = vmul.f32 %v2720, %v3121
        %v3130 = vmul.f32 %v2721, %v3122
        %v3131 = vmul.f32 %v2722, %v3123
        %v3132 = vmul.f32 %v2723, %v3124
        %v3133 = vmul.f32 %v2724, %v3125
        %v3134 = vmul.f32 %v2725, %v3126
        %v3135 = vmul.f32 %v2726, %v3127
        %3136 = vset.pattern.permute.xlu0 4
        %3137 = vperm.xlu0 %3136, %v387
        %v3138 = vpop.permute.xlu0 %3137
        %3140 = vset.pattern.permute.xlu0 4
        %3141 = vperm.xlu0 %3140, %v388
        %v3142 = vpop.permute.xlu0 %3141
        %v3144 = vmul.f32 %v3128, %v3138
        %v3145 = vmul.f32 %v3129, %v3138
        %v3146 = vmul.f32 %v3130, %v3138
        %v3147 = vmul.f32 %v3131, %v3138
        %v3148 = vmul.f32 %v3132, %v3142
        %v3149 = vmul.f32 %v3133, %v3142
        %v3150 = vmul.f32 %v3134, %v3142
        %v3151 = vmul.f32 %v3135, %v3142
        %3152 = vset.pattern.permute.xlu0 5
        %3153 = vperm.xlu0 %3152, %v387
        %v3154 = vpop.permute.xlu0 %3153
        %3156 = vset.pattern.permute.xlu0 5
        %3157 = vperm.xlu0 %3156, %v388
        %v3158 = vpop.permute.xlu0 %3157
        %v3160 = vadd.f32 %v3144, %v3154
        %v3161 = vadd.f32 %v3145, %v3154
        %v3162 = vadd.f32 %v3146, %v3154
        %v3163 = vadd.f32 %v3147, %v3154
        %v3164 = vadd.f32 %v3148, %v3158
        %v3165 = vadd.f32 %v3149, %v3158
        %v3166 = vadd.f32 %v3150, %v3158
        %v3167 = vadd.f32 %v3151, %v3158
        %vm3168 = vcmp.gt.f32.partialorder %v3160, 0.0
        %vm3169 = vcmp.gt.f32.partialorder %v3161, 0.0
        %vm3170 = vcmp.gt.f32.partialorder %v3162, 0.0
        %vm3171 = vcmp.gt.f32.partialorder %v3163, 0.0
        %vm3172 = vcmp.gt.f32.partialorder %v3164, 0.0
        %vm3173 = vcmp.gt.f32.partialorder %v3165, 0.0
        %vm3174 = vcmp.gt.f32.partialorder %v3166, 0.0
        %vm3175 = vcmp.gt.f32.partialorder %v3167, 0.0
        %v3176 = vmul.f32 %v3160, 0.05
        %v3177 = vmul.f32 %v3161, 0.05
        %v3178 = vmul.f32 %v3162, 0.05
        %v3179 = vmul.f32 %v3163, 0.05
        %v3180 = vmul.f32 %v3164, 0.05
        %v3181 = vmul.f32 %v3165, 0.05
        %v3182 = vmul.f32 %v3166, 0.05
        %v3183 = vmul.f32 %v3167, 0.05
        %v3184 = vsel %vm3168, %v3160, %v3176
        %v3185 = vsel %vm3169, %v3161, %v3177
        %v3186 = vsel %vm3170, %v3162, %v3178
        %v3187 = vsel %vm3171, %v3163, %v3179
        %v3188 = vsel %vm3172, %v3164, %v3180
        %v3189 = vsel %vm3173, %v3165, %v3181
        %v3190 = vsel %vm3174, %v3166, %v3182
        %v3191 = vsel %vm3175, %v3167, %v3183
        %v3192 = vld [vmem:[#allocation9] sm:$0xf]
        %v3193 = vld [vmem:[#allocation9 + $0x4] sm:$0xf]
        %v3194 = vpack.c.bf16 %v3188, %v3184
        %v3195 = vpack.c.bf16 %v3189, %v3185
        %v3196 = vpack.c.bf16 %v3190, %v3186
        %v3197 = vpack.c.bf16 %v3191, %v3187
        %3198 = vset.pattern.permute.xlu0 6
        %3199 = vperm.xlu0 %3198, %v387
        %v3200 = vpop.permute.xlu0 %3199
        %3202 = vset.pattern.permute.xlu0 6
        %3203 = vperm.xlu0 %3202, %v388
        %v3204 = vpop.permute.xlu0 %3203
        %v3208 = vunpack.c.l.b16 %v3192
        %v3209 = vunpack.c.l.b16 %v3193
        %v3210 = vpack.c.b16 %v3209, %v3208
        %v3212 = vsel %vm429, %v3210, 0
        %3214 = vmatprep.subr.bf16.mxu0 0
        %3215 = vmatpush1.bf16.msra.mxu0 0
        %3216 = vmatprep.subr.bf16.mxu0 0
        %3217 = vmatpush1.bf16.msra.mxu0 0
        %3218 = vmatprep.subr.bf16.mxu0 0
        %3219 = vmatpush1.bf16.msra.mxu0 0
        %3220 = vmatprep.subr.bf16.mxu0 0
        %3221 = vmatpush1.bf16.msra.mxu0 0
        %3222 = vmatprep.subr.bf16.mxu0 0
        %3223 = vmatpush1.bf16.msra.mxu0 0
        %3224 = vmatprep.subr.bf16.mxu0 0
        %3225 = vmatpush1.bf16.msra.mxu0 0
        %3226 = vmatprep.subr.bf16.mxu0 0
        %3227 = vmatpush1.bf16.msra.mxu0 0
        %3228 = vmatprep.subr.bf16.mxu0 %v3195
        %3229 = vmatpush1.bf16.msra.mxu0 %v3194
        %3230 = vmatprep.subr.bf16.mxu0 0
        %3231 = vmatpush2.bf16.msra.mxu0 0
        %3232 = vmatprep.subr.bf16.mxu0 0
        %3233 = vmatpush2.bf16.msra.mxu0 0
        %3234 = vmatprep.subr.bf16.mxu0 0
        %3235 = vmatpush2.bf16.msra.mxu0 0
        %3236 = vmatprep.subr.bf16.mxu0 0
        %3237 = vmatpush2.bf16.msra.mxu0 0
        %3238 = vmatprep.subr.bf16.mxu0 0
        %3239 = vmatpush2.bf16.msra.mxu0 0
        %3240 = vmatprep.subr.bf16.mxu0 0
        %3241 = vmatpush2.bf16.msra.mxu0 0
        %3242 = vmatprep.subr.bf16.mxu0 0
        %3243 = vmatpush2.bf16.msra.mxu0 0
        %3244 = vmatprep.subr.bf16.mxu0 0
        %3245 = vmatpush2.bf16.msra.mxu0 0
        %3246 = vmatprep.mubr.bf16.mxu0 0
        %3247 = vmatmul.mubr.bf16.gmra.mxu0 %v3212
        %v3248 = vpop.f32.mrf.mxu0
        %v3249 = vadd.f32 %v3200, %v3248
        %v3250 = vpop.f32.mrf.mxu0
        %v3251 = vadd.f32 %v3200, %v3250
        %v3252 = vpop.f32.mrf.mxu0
        %v3253 = vadd.f32 %v3204, %v3252
        %v3254 = vpop.f32.mrf.mxu0
        %v3255 = vadd.f32 %v3204, %v3254
        %3256 = vdwg.mxu0
        %3257 = vmatprep.subr.bf16.mxu0 0
        %3258 = vmatpush1.bf16.msra.mxu0 0
        %3259 = vmatprep.subr.bf16.mxu0 0
        %3260 = vmatpush1.bf16.msra.mxu0 0
        %3261 = vmatprep.subr.bf16.mxu0 0
        %3262 = vmatpush1.bf16.msra.mxu0 0
        %3263 = vmatprep.subr.bf16.mxu0 0
        %3264 = vmatpush1.bf16.msra.mxu0 0
        %3265 = vmatprep.subr.bf16.mxu0 0
        %3266 = vmatpush1.bf16.msra.mxu0 0
        %3267 = vmatprep.subr.bf16.mxu0 0
        %3268 = vmatpush1.bf16.msra.mxu0 0
        %3269 = vmatprep.subr.bf16.mxu0 0
        %3270 = vmatpush1.bf16.msra.mxu0 0
        %3271 = vmatprep.subr.bf16.mxu0 %v3197
        %3272 = vmatpush1.bf16.msra.mxu0 %v3196
        %3273 = vmatprep.subr.bf16.mxu0 0
        %3274 = vmatpush2.bf16.msra.mxu0 0
        %3275 = vmatprep.subr.bf16.mxu0 0
        %3276 = vmatpush2.bf16.msra.mxu0 0
        %3277 = vmatprep.subr.bf16.mxu0 0
        %3278 = vmatpush2.bf16.msra.mxu0 0
        %3279 = vmatprep.subr.bf16.mxu0 0
        %3280 = vmatpush2.bf16.msra.mxu0 0
        %3281 = vmatprep.subr.bf16.mxu0 0
        %3282 = vmatpush2.bf16.msra.mxu0 0
        %3283 = vmatprep.subr.bf16.mxu0 0
        %3284 = vmatpush2.bf16.msra.mxu0 0
        %3285 = vmatprep.subr.bf16.mxu0 0
        %3286 = vmatpush2.bf16.msra.mxu0 0
        %3287 = vmatprep.subr.bf16.mxu0 0
        %3288 = vmatpush2.bf16.msra.mxu0 0
        %3289 = vmatprep.mubr.bf16.mxu0 0
        %3290 = vmatmul.mubr.bf16.gmra.mxu0 %v3212
        %v3291 = vpop.f32.mrf.mxu0
        %v3292 = vadd.f32 %v3200, %v3291
        %v3293 = vpop.f32.mrf.mxu0
        %v3294 = vadd.f32 %v3200, %v3293
        %v3295 = vpop.f32.mrf.mxu0
        %v3296 = vadd.f32 %v3204, %v3295
        %v3297 = vpop.f32.mrf.mxu0
        %v3298 = vadd.f32 %v3204, %v3297
        %3299 = vdwg.mxu0
        %3300 = vst [vmem:[%s379] sm:$0xff] %v3249
        %3301 = vst [vmem:[%s379 + $0x8] sm:$0xff] %v3251
        %3302 = vst [vmem:[%s379 + $0x10] sm:$0xff] %v3292
        %3303 = vst [vmem:[%s379 + $0x18] sm:$0xff] %v3294
        %3304 = vst [vmem:[%s379 + $0x20] sm:$0xff] %v3253
        %3305 = vst [vmem:[%s379 + $0x28] sm:$0xff] %v3255
        %3306 = vst [vmem:[%s379 + $0x30] sm:$0xff] %v3296
        %3307 = vst [vmem:[%s379 + $0x38] sm:$0xff] %v3298
        %s3308 = sand.u32 %s208, 1
        %s3309 = scalar_lea.sflag [#allocation6], %s3308
        %s3310 = sand.u32 %s208, 1
        %s3311 = smul.addr %s3310, 64
        %s3312 = scalar_lea.vmem [#allocation13], %s3311
        // Predicated region
        $region73: #{tpu_custom_call.1} parent=51 // pred_check
          %p3313 = pneg %p218
        $region74: #{tpu_custom_call.1} parent=51 // pred_check_branch
          %3315 = sbr.rel (%p3313) target = $region76
        $region75: #{tpu_custom_call.1} parent=51 // pred_region
          %s3316 = smul.u32 4, %s27
          %s3318 = ssub.s32 1024, 1024
          %3319 = vsyncadd %s3309, %s3318
          %s3320 = smul.addr %s3316, 128
          %s3321 = scalar_lea.hbm %s8, %s3320
          %s3322 = sshll.u32 %s3312, 4
          %s3323 = int_to_ptr.vmem [resolvable:$true] %s3322
          %3328 = dma.vmem_to_hbm [thread:$0]  %s3323, 1024, %s3321, %s3309, 512, 1024, 32
        $region76: #{tpu_custom_call.1} parent=51 // pred_fallthru
          _
      $region52: #{tpu_custom_call.1} parent=5 // pred_fallthru
        _
      %p3329 = scmp.le.s32.totalorder 2, %s22
      // Predicated region
      $region77: #{tpu_custom_call.1} parent=5 // pred_check
        %p3330 = pneg %p3329
      $region78: #{tpu_custom_call.1} parent=5 // pred_check_branch
        %3332 = sbr.rel (%p3330) target = $region80
      $region79: #{tpu_custom_call.1} parent=5 // pred_region
        %s3333 = ssub.s32 %s22, 2
        // Predicated region
        $region81: #{tpu_custom_call.1} parent=79 // pred_check
          %p3334 = pneg %p224
        $region82: #{tpu_custom_call.1} parent=79 // pred_check_branch
          %3336 = sbr.rel (%p3334) target = $region84
        $region83: #{tpu_custom_call.1} parent=79 // pred_region
          %s3337 = sand.u32 %s209, 1
          %s3338 = scalar_lea.sflag [#allocation6], %s3337
          %s3339 = sand.u32 %s209, 1
          %s3340 = smul.addr %s3339, 64
          %s3341 = scalar_lea.vmem [#allocation13], %s3340
          %3342 = dma.done %s3338, 1024
        $region84: #{tpu_custom_call.1} parent=79 // pred_fallthru
          _
      $region80: #{tpu_custom_call.1} parent=5 // pred_fallthru
        _
    $region6: #{tpu_custom_call.1} parent=1 // loop_footer
      %s26 = sadd.s32 1, %s22
    $region7: #{tpu_custom_call.1} parent=1 // loop_footer_branch
      %21 = sbr.rel target = $region3
    $region8: #{tpu_custom_call.1} parent=1 // loop_exit
      _
    %3343 = vsyncpa [#allocation5], 1
    %s3344 = scalar_lea.sflag [#allocation5], 1
    %3345 = vsyncpa %s3344, 1
    %3346 = vsyncpa [#allocation8], 1
    %3347 = vsyncpa [#allocation11], 1
    %3348 = vsyncpa [#allocation6], 1
    %s3349 = scalar_lea.sflag [#allocation6], 1
    %3350 = vsyncpa %s3349, 1

</llo_original>
